<compile_context>
chip_gen: v6e
topology: v6e:2x2x1
jax: 0.10.0
libtpu: 0.0.40
codegen_flags: <defaults>
</compile_context>

<pallas_src>
import functools
import math

import jax
import jax.numpy as jnp
from jax import lax
from jax.experimental import pallas as pl
from jax.experimental.pallas import tpu as pltpu

LN_EPS = 1e-5                      # torch.nn.LayerNorm default eps
VMEM_LIMIT = 64 * 1024 * 1024      # scoped-VMEM cap; tune per generation (see header)
HI = lax.Precision.HIGHEST         # reference-path matmul precision


# ----------------------------- in-kernel math helpers -----------------------------

def _layernorm(x, gamma, beta):
    mu = jnp.mean(x, axis=-1, keepdims=True)
    var = jnp.mean((x - mu) ** 2, axis=-1, keepdims=True)
    return (x - mu) * lax.rsqrt(var + LN_EPS) * gamma + beta


def _erf(x):
    # Abramowitz & Stegun 7.1.26 rational approximation (|abs err| < 1.5e-7, ~f32 precision),
    # built only from ops with guaranteed Mosaic lowerings (exp / mul / div / select).
    a1, a2, a3, a4, a5, p = (0.254829592, -0.284496736, 1.421413741,
                             -1.453152027, 1.061405429, 0.3275911)
    sgn = jnp.where(x >= 0.0, 1.0, -1.0)
    z = jnp.abs(x)
    t = 1.0 / (1.0 + p * z)
    poly = ((((a5 * t + a4) * t + a3) * t + a2) * t + a1) * t
    return sgn * (1.0 - poly * jnp.exp(-z * z))


def _gelu_exact(x):
    # TODO(synk): PyTorch nn.GELU() uses exact erf; the A&S rational erf above is ~f32-accurate.
    # A tanh-approx GELU would move work to the EUP slot but changes numerics (~1e-3).
    return 0.5 * x * (1.0 + _erf(x * (1.0 / math.sqrt(2.0))))


def _largest_divisor(n, cap):
    cap = max(1, min(n, cap))
    for t in range(cap, 0, -1):
        if n % t == 0:
            return t
    return 1


def _pick_seq_tile(n_seq, S, rows_target):
    # Aim for ~rows_target rows of MXU M per grid step, but always leave >= 2 grid steps
    # (when possible) so the "parallel" axis can be sharded across v7x's two TensorCores.
    cap = max(1, rows_target // max(S, 1))
    if n_seq >= 2:
        cap = min(cap, max(1, n_seq // 2))
    # TODO(synk): pad n_seq when it is prime / awkward so the tile does not collapse to 1.
    return _largest_divisor(n_seq, cap)


# ----------------------------- fused attention body -----------------------------
# LayerNorm -> QKV projection -> per-head causal softmax attention -> output projection
# (accumulated per head, no scratch / masked stores) -> residual add.

def _attention_body(x, gamma, beta, wqkv_ref, wo_ref, bo, *, num_heads, causal):
    TB, S, K = x.shape
    dh = K // num_heads
    scale = 1.0 / math.sqrt(dh)
    cdt = wqkv_ref.dtype                                  # MXU operand dtype (bf16 or f32)

    h = _layernorm(x, gamma, beta)                        # f32
    qkv = jnp.dot(h.reshape(TB * S, K).astype(cdt), wqkv_ref[...],
                  preferred_element_type=jnp.float32).reshape(TB, S, 3 * K)
    q = qkv[:, :, :K]
    k = qkv[:, :, K:2 * K]
    v = qkv[:, :, 2 * K:]

    if causal:
        row = lax.broadcasted_iota(jnp.int32, (S, S), 0)
        col = lax.broadcasted_iota(jnp.int32, (S, S), 1)
        bias2d = jnp.where(col <= row, 0.0, -1e30).astype(jnp.float32)
        bias = jnp.broadcast_to(bias2d, (TB, S, S))       # hoisted once per grid step

    y = jnp.zeros((TB * S, K), jnp.float32)               # f32 register accumulator
    for hh in range(num_heads):                           # static unroll over heads
        sl = slice(hh * dh, (hh + 1) * dh)
        qh = q[:, :, sl].astype(cdt)
        kh = k[:, :, sl].astype(cdt)
        vh = v[:, :, sl].astype(cdt)
        s = jnp.einsum("bqd,bkd->bqk", qh, kh,
                       preferred_element_type=jnp.float32) * scale       # (TB, S, S)
        if causal:
            s = s + bias
        m = jnp.max(s, axis=-1, keepdims=True)
        e = jnp.exp(s - m)                                                # f32 softmax
        inv = 1.0 / jnp.sum(e, axis=-1, keepdims=True)    # exact: approx rcp broke validation
        p = e * inv
        oh = jnp.einsum("bqk,bkd->bqd", p.astype(cdt), vh,
                        preferred_element_type=jnp.float32)               # (TB, S, dh)
        # Accumulate the output projection per head: avoids any (TB,S,K) scratch,
        # masked dh=32 lane stores, or lane-dim concatenation.
        y = y + jnp.dot(oh.reshape(TB * S, dh).astype(cdt), wo_ref[sl, :],
                        preferred_element_type=jnp.float32)

    y = y + bo                                            # (K,) bias broadcast over rows
    return x + y.reshape(TB, S, K)                        # residual (dropout p=0)


# ----------------------------- fused FFN body (row-wise) -----------------------------

def _ffn_body(x, gamma, beta, w1_ref, b1, w2_ref, b2):
    cdt = w1_ref.dtype
    h = _layernorm(x, gamma, beta)
    h = jnp.dot(h.astype(cdt), w1_ref[...], preferred_element_type=jnp.float32) + b1
    h = _gelu_exact(h)                                    # f32 elementwise
    y = jnp.dot(h.astype(cdt), w2_ref[...], preferred_element_type=jnp.float32) + b2
    return x + y                                          # residual (dropouts p=0)


# ----------------------------- kernels -----------------------------

def _self_attn_kernel(x_ref, g_ref, b_ref, wqkv_ref, wo_ref, bo_ref, y_ref,
                      *, num_heads, causal):
    y_ref[...] = _attention_body(x_ref[...], g_ref[0], b_ref[0],
                                 wqkv_ref, wo_ref, bo_ref[0],
                                 num_heads=num_heads, causal=causal)


def _multi_attn_ffn_kernel(x_ref, g2_ref, b2_ref, wqkv_ref, wo_ref, bo_ref,
                           g3_ref, b3_ref, w1_ref, fb1_ref, w2_ref, fb2_ref,
                           y_ref, *, num_heads, causal):
    xa = _attention_body(x_ref[...], g2_ref[0], b2_ref[0],
                         wqkv_ref, wo_ref, bo_ref[0],
                         num_heads=num_heads, causal=causal)
    TB, S, K = xa.shape
    yt = _ffn_body(xa.reshape(TB * S, K), g3_ref[0], b3_ref[0],
                   w1_ref, fb1_ref[0], w2_ref, fb2_ref[0])
    y_ref[...] = yt.reshape(TB, S, K)


# ----------------------------- pallas_call wrappers -----------------------------

def attn_block(x, gamma, beta, wqkv, wo, bo, *, num_heads, causal, rows_target=1024):
    n_seq, S, K = x.shape
    assert K % num_heads == 0, "d_model must be divisible by nhead"
    TB = _pick_seq_tile(n_seq, S, rows_target)
    kernel = functools.partial(_self_attn_kernel, num_heads=num_heads, causal=causal)
    return pl.pallas_call(
        kernel,
        out_shape=jax.ShapeDtypeStruct((n_seq, S, K), x.dtype),
        grid=(n_seq // TB,),
        in_specs=[
            pl.BlockSpec((TB, S, K), lambda i: (i, 0, 0)),
            pl.BlockSpec((1, K), lambda i: (0, 0)),
            pl.BlockSpec((1, K), lambda i: (0, 0)),
            pl.BlockSpec((K, 3 * K), lambda i: (0, 0)),
            pl.BlockSpec((K, K), lambda i: (0, 0)),
            pl.BlockSpec((1, K), lambda i: (0, 0)),
        ],
        out_specs=pl.BlockSpec((TB, S, K), lambda i: (i, 0, 0)),
        compiler_params=pltpu.CompilerParams(
            dimension_semantics=("parallel",),
            vmem_limit_bytes=VMEM_LIMIT),
    )(x, gamma, beta, wqkv, wo, bo)


def attn_ffn_block(x, g2, b2, wqkv, wo, bo, g3, b3, w1, fb1, w2, fb2,
                   *, num_heads, causal, rows_target=1024):
    n_seq, S, K = x.shape
    F = w1.shape[1]
    assert K % num_heads == 0, "d_model must be divisible by nhead"
    TB = _pick_seq_tile(n_seq, S, rows_target)
    kernel = functools.partial(_multi_attn_ffn_kernel, num_heads=num_heads, causal=causal)
    return pl.pallas_call(
        kernel,
        out_shape=jax.ShapeDtypeStruct((n_seq, S, K), x.dtype),
        grid=(n_seq // TB,),
        in_specs=[
            pl.BlockSpec((TB, S, K), lambda i: (i, 0, 0)),
            pl.BlockSpec((1, K), lambda i: (0, 0)),
            pl.BlockSpec((1, K), lambda i: (0, 0)),
            pl.BlockSpec((K, 3 * K), lambda i: (0, 0)),
            pl.BlockSpec((K, K), lambda i: (0, 0)),
            pl.BlockSpec((1, K), lambda i: (0, 0)),
            pl.BlockSpec((1, K), lambda i: (0, 0)),
            pl.BlockSpec((1, K), lambda i: (0, 0)),
            pl.BlockSpec((K, F), lambda i: (0, 0)),
            pl.BlockSpec((1, F), lambda i: (0, 0)),
            pl.BlockSpec((F, K), lambda i: (0, 0)),
            pl.BlockSpec((1, K), lambda i: (0, 0)),
        ],
        out_specs=pl.BlockSpec((TB, S, K), lambda i: (i, 0, 0)),
        compiler_params=pltpu.CompilerParams(
            dimension_semantics=("parallel",),
            vmem_limit_bytes=VMEM_LIMIT),
    )(x, g2, b2, wqkv, wo, bo, g3, b3, w1, fb1, w2, fb2)


# ----------------------------- full layer (glue in plain JAX) -----------------------------

def tiered_transformer_encoder_layer(x, params, *, num_heads, causal=True, self_causal=None):
    if self_causal is None:
        self_causal = causal
    B, N, L, K = x.shape

    # 1) within-sequence (self) attention + residual:   view (B*N, L, K)
    xs = x.reshape(B * N, L, K)
    xs = attn_block(xs, params["norm1_g"], params["norm1_b"],
                    params["self_wqkv"], params["self_wo"], params["self_bo"],
                    num_heads=num_heads, causal=self_causal)

    # 2) across-sequences attention + residual, with the token-wise FFN fused into the
    #    same kernel (saves one HBM round-trip of the activations):  view (B, N*L, K)
    xm = xs.reshape(B, N * L, K)
    xm = attn_ffn_block(xm, params["norm2_g"], params["norm2_b"],
                        params["multi_wqkv"], params["multi_wo"], params["multi_bo"],
                        params["norm3_g"], params["norm3_b"],
                        params["w1"], params["b1"], params["w2"], params["b2"],
                        num_heads=num_heads, causal=causal)
    return xm.reshape(B, N, L, K)


# ----------------------------- parameters -----------------------------

def init_params(key, d_model, nhead, dim_feedforward):
    keys = jax.random.split(key, 8)
    scale = 1.0 / math.sqrt(d_model)
    return dict(
        # LayerNorms: default torch init (weight=1, bias=0)
        norm1_g=jnp.ones((1, d_model), jnp.float32), norm1_b=jnp.zeros((1, d_model), jnp.float32),
        norm2_g=jnp.ones((1, d_model), jnp.float32), norm2_b=jnp.zeros((1, d_model), jnp.float32),
        norm3_g=jnp.ones((1, d_model), jnp.float32), norm3_b=jnp.zeros((1, d_model), jnp.float32),
        # FlashMultiheadAttention (self): QKV proj (no bias, use_qkv_bias=False) + out proj (bias)
        self_wqkv=jax.random.normal(keys[0], (d_model, 3 * d_model), jnp.float32) * scale,
        self_wo=jax.random.normal(keys[1], (d_model, d_model), jnp.float32) * scale,
        self_bo=jax.random.normal(keys[2], (1, d_model), jnp.float32) * 0.02,
        # FlashMultiheadAttention (multi-sequence)
        multi_wqkv=jax.random.normal(keys[3], (d_model, 3 * d_model), jnp.float32) * scale,
        multi_wo=jax.random.normal(keys[4], (d_model, d_model), jnp.float32) * scale,
        multi_bo=jax.random.normal(keys[5], (1, d_model), jnp.float32) * 0.02,
        # FFN: linear1 random, linear2 zero-initialized (per the module's __init__)
        w1=jax.random.normal(keys[6], (d_model, dim_feedforward), jnp.float32) * scale,
        b1=jax.random.normal(keys[7], (1, dim_feedforward), jnp.float32) * 0.02,
        w2=jnp.zeros((dim_feedforward, d_model), jnp.float32),
        b2=jnp.zeros((1, d_model), jnp.float32),
    )


def cast_matmul_weights(params, dtype):
    # One-time cast of the MXU matmul operands (done OUTSIDE the forward, so no per-call
    # .astype HBM traffic).  Biases / LayerNorm params stay f32 (added to f32 accumulators).
    out = dict(params)
    for name in ("self_wqkv", "self_wo", "multi_wqkv", "multi_wo", "w1", "w2"):
        out[name] = params[name].astype(dtype)
    return out


# ----------------------------- pure-JAX reference for validation -----------------------------

def _ref_attn(x, gamma, beta, wqkv, wo, bo, num_heads, causal):
    Bn, S, K = x.shape
    dh = K // num_heads
    h = _layernorm(x, gamma, beta)
    qkv = jnp.einsum("bsk,kn->bsn", h, wqkv, precision=HI)
    q, k, v = jnp.split(qkv, 3, axis=-1)
    sh = lambda t: t.reshape(Bn, S, num_heads, dh).transpose(0, 2, 1, 3)
    q, k, v = sh(q), sh(k), sh(v)
    s = jnp.einsum("bhqd,bhkd->bhqk", q, k, precision=HI) / math.sqrt(dh)
    if causal:
        mask = jnp.tril(jnp.ones((S, S), bool))
        s = jnp.where(mask, s, -1e30)
    p = jax.nn.softmax(s, axis=-1)
    o = jnp.einsum("bhqk,bhkd->bhqd", p, v, precision=HI).transpose(0, 2, 1, 3).reshape(Bn, S, K)
    return x + jnp.einsum("bsk,kn->bsn", o, wo, precision=HI) + bo[0]


def reference_forward(x, params, *, num_heads, causal=True):
    B, N, L, K = x.shape
    xs = x.reshape(B * N, L, K)
    xs = _ref_attn(xs, params["norm1_g"], params["norm1_b"],
                   params["self_wqkv"], params["self_wo"], params["self_bo"], num_heads, causal)
    xm = xs.reshape(B, N * L, K)
    xm = _ref_attn(xm, params["norm2_g"], params["norm2_b"],
                   params["multi_wqkv"], params["multi_wo"], params["multi_bo"], num_heads, causal)
    xt = xm.reshape(B * N * L, K)
    h = _layernorm(xt, params["norm3_g"], params["norm3_b"])
    h = jnp.einsum("tk,kf->tf", h, params["w1"], precision=HI) + params["b1"][0]
    h = jax.nn.gelu(h, approximate=False)
    xt = xt + jnp.einsum("tf,fk->tk", h, params["w2"], precision=HI) + params["b2"][0]
    return xt.reshape(B, N, L, K)


# ----------------------------- demo -----------------------------

if __name__ == "__main__":
    import numpy as np

    B, N, L = 2, 2, 8                # batch, sequences-per-group, per-sequence length
    d_model, nhead = 128, 4          # d_model=128 keeps the output block lane-dense
    dim_ff = 4 * d_model             # module default dim_feedforward

    key = jax.random.PRNGKey(0)
    kx, kp, kw, kb = jax.random.split(key, 4)
    x = jax.random.normal(kx, (B, N, L, d_model), jnp.float32)
    params = init_params(kp, d_model, nhead, dim_ff)

    fwd = jax.jit(functools.partial(tiered_transformer_encoder_layer, num_heads=nhead))

    # Main run: bf16 MXU operands (production configuration); weights cast once, outside jit.
    params_bf16 = cast_matmul_weights(params, jnp.bfloat16)
    out = jax.block_until_ready(fwd(x, params_bf16))
    assert out.shape == (B, N, L, d_model)
    ref = reference_forward(x, params, num_heads=nhead)
    # tolerance reflects bf16-rounded MXU operands (accumulation stays f32)
    np.testing.assert_allclose(np.asarray(out), np.asarray(ref), rtol=6e-2, atol=6e-2)

    # Validation run: f32 operands + non-zero linear2 so the full FFN path is exercised.
    # (The previous failure here came from the approximate softmax reciprocal, now removed.)
    params_v = dict(params,
                    w2=jax.random.normal(kw, (dim_ff, d_model), jnp.float32) / math.sqrt(dim_ff),
                    b2=jax.random.normal(kb, (1, d_model), jnp.float32) * 0.02)
    out32 = jax.block_until_ready(fwd(x, params_v))
    ref32 = reference_forward(x, params_v, num_heads=nhead)
    np.testing.assert_allclose(np.asarray(out32), np.asarray(ref32), rtol=5e-3, atol=5e-3)

    print("KERNEL_OK")
</pallas_src>

<mosaic_0001>
module attributes {stable_mosaic.version = 11 : i64} {
  func.func @_self_attn_kernel(%arg0: i32, %arg1: memref<2x8x128xf32, #tpu.memory_space<vmem>>, %arg2: memref<1x128xf32, #tpu.memory_space<vmem>>, %arg3: memref<1x128xf32, #tpu.memory_space<vmem>>, %arg4: memref<128x384xbf16, #tpu.memory_space<vmem>>, %arg5: memref<128x128xbf16, #tpu.memory_space<vmem>>, %arg6: memref<1x128xf32, #tpu.memory_space<vmem>>, %arg7: memref<2x8x128xf32, #tpu.memory_space<vmem>>) attributes {dimension_semantics = [#tpu.dimension_semantics<parallel>], iteration_bounds = array<i64: 2>, scalar_prefetch = 0 : i64, scratch_operands = 0 : i64, tpu.core_type = #tpu.core_type<tc>, window_params = [{transform_indices = @transform_0, window_bounds = array<i64: 2, 8, 128>}, {pipeline_mode = #tpu.pipeline_mode<synchronous>, transform_indices = @transform_1, window_bounds = array<i64: 1, 128>}, {pipeline_mode = #tpu.pipeline_mode<synchronous>, transform_indices = @transform_2, window_bounds = array<i64: 1, 128>}, {pipeline_mode = #tpu.pipeline_mode<synchronous>, transform_indices = @transform_3, window_bounds = array<i64: 128, 384>}, {pipeline_mode = #tpu.pipeline_mode<synchronous>, transform_indices = @transform_4, window_bounds = array<i64: 128, 128>}, {pipeline_mode = #tpu.pipeline_mode<synchronous>, transform_indices = @transform_5, window_bounds = array<i64: 1, 128>}, {transform_indices = @transform_6, window_bounds = array<i64: 2, 8, 128>}]} {
    %c0 = arith.constant 0 : index
    %c0_0 = arith.constant 0 : index
    %c0_1 = arith.constant 0 : index
    %0 = vector.load %arg1[%c0, %c0_0, %c0_1] : memref<2x8x128xf32, #tpu.memory_space<vmem>>, vector<2x8x128xf32>
    %c0_2 = arith.constant 0 : index
    %c0_3 = arith.constant 0 : index
    %1 = vector.load %arg2[%c0_2, %c0_3] : memref<1x128xf32, #tpu.memory_space<vmem>>, vector<1x128xf32>
    %2 = vector.shape_cast %1 : vector<1x128xf32> to vector<128xf32>
    %c0_4 = arith.constant 0 : index
    %c0_5 = arith.constant 0 : index
    %3 = vector.load %arg3[%c0_4, %c0_5] : memref<1x128xf32, #tpu.memory_space<vmem>>, vector<1x128xf32>
    %4 = vector.shape_cast %3 : vector<1x128xf32> to vector<128xf32>
    %c0_6 = arith.constant 0 : index
    %c0_7 = arith.constant 0 : index
    %5 = vector.load %arg6[%c0_6, %c0_7] : memref<1x128xf32, #tpu.memory_space<vmem>>, vector<1x128xf32>
    %6 = vector.shape_cast %5 : vector<1x128xf32> to vector<128xf32>
    %cst = arith.constant dense<0.000000e+00> : vector<2x8xf32>
    %7 = vector.multi_reduction <add>, %0, %cst [2] : vector<2x8x128xf32> to vector<2x8xf32>
    %8 = vector.shape_cast %7 : vector<2x8xf32> to vector<2x8x1xf32>
    %cst_8 = arith.constant 1.280000e+02 : f32
    %9 = vector.broadcast %cst_8 : f32 to vector<2x8x1xf32>
    %10 = arith.divf %8, %9 : vector<2x8x1xf32>
    %11 = vector.broadcast %10 : vector<2x8x1xf32> to vector<2x8x128xf32>
    %12 = arith.subf %0, %11 : vector<2x8x128xf32>
    %13 = arith.mulf %12, %12 : vector<2x8x128xf32>
    %cst_9 = arith.constant dense<0.000000e+00> : vector<2x8xf32>
    %14 = vector.multi_reduction <add>, %13, %cst_9 [2] : vector<2x8x128xf32> to vector<2x8xf32>
    %15 = vector.shape_cast %14 : vector<2x8xf32> to vector<2x8x1xf32>
    %cst_10 = arith.constant 1.280000e+02 : f32
    %16 = vector.broadcast %cst_10 : f32 to vector<2x8x1xf32>
    %17 = arith.divf %15, %16 : vector<2x8x1xf32>
    %18 = vector.broadcast %10 : vector<2x8x1xf32> to vector<2x8x128xf32>
    %19 = arith.subf %0, %18 : vector<2x8x128xf32>
    %cst_11 = arith.constant 9.99999974E-6 : f32
    %20 = vector.broadcast %cst_11 : f32 to vector<2x8x1xf32>
    %21 = arith.addf %17, %20 : vector<2x8x1xf32>
    %22 = math.rsqrt %21 : vector<2x8x1xf32>
    %23 = vector.broadcast %22 : vector<2x8x1xf32> to vector<2x8x128xf32>
    %24 = arith.mulf %19, %23 : vector<2x8x128xf32>
    %25 = vector.shape_cast %2 : vector<128xf32> to vector<1x1x128xf32>
    %26 = vector.broadcast %25 : vector<1x1x128xf32> to vector<2x8x128xf32>
    %27 = arith.mulf %24, %26 : vector<2x8x128xf32>
    %28 = vector.shape_cast %4 : vector<128xf32> to vector<1x1x128xf32>
    %29 = vector.broadcast %28 : vector<1x1x128xf32> to vector<2x8x128xf32>
    %30 = arith.addf %27, %29 : vector<2x8x128xf32>
    %31 = vector.shape_cast %30 : vector<2x8x128xf32> to vector<16x128xf32>
    %32 = arith.truncf %31 : vector<16x128xf32> to vector<16x128xbf16>
    %c0_12 = arith.constant 0 : index
    %c0_13 = arith.constant 0 : index
    %33 = vector.load %arg4[%c0_12, %c0_13] : memref<128x384xbf16, #tpu.memory_space<vmem>>, vector<128x384xbf16>
    %cst_14 = arith.constant dense<0.000000e+00> : vector<16x384xf32>
    %34 = tpu.matmul %32, %33, %cst_14 {dimension_numbers = #tpu.dot_dimension_numbers<[1], [0], [0], [1], [0, 0, 1, 1], [], []>} : vector<16x128xbf16>, vector<128x384xbf16>, vector<16x384xf32> -> vector<16x384xf32>
    %35 = vector.shape_cast %34 : vector<16x384xf32> to vector<2x8x384xf32>
    %36 = vector.extract_strided_slice %35 {offsets = [0, 0, 0], sizes = [2, 8, 128], strides = [1, 1, 1]} : vector<2x8x384xf32> to vector<2x8x128xf32>
    %37 = vector.extract_strided_slice %35 {offsets = [0, 0, 128], sizes = [2, 8, 128], strides = [1, 1, 1]} : vector<2x8x384xf32> to vector<2x8x128xf32>
    %38 = vector.extract_strided_slice %35 {offsets = [0, 0, 256], sizes = [2, 8, 128], strides = [1, 1, 1]} : vector<2x8x384xf32> to vector<2x8x128xf32>
    %39 = tpu.iota {dimensions = array<i32: 0>} : vector<8x8xi32>
    %40 = tpu.iota {dimensions = array<i32: 1>} : vector<8x8xi32>
    %41 = arith.cmpi sle, %40, %39 : vector<8x8xi32>
    %cst_15 = arith.constant 0.000000e+00 : f32
    %cst_16 = arith.constant -1.000000e+30 : f32
    %42 = vector.broadcast %cst_15 : f32 to vector<8x8xf32>
    %43 = vector.broadcast %cst_16 : f32 to vector<8x8xf32>
    %44 = arith.select %41, %42, %43 : vector<8x8xi1>, vector<8x8xf32>
    %45 = vector.shape_cast %44 : vector<8x8xf32> to vector<1x8x8xf32>
    %46 = vector.broadcast %45 : vector<1x8x8xf32> to vector<2x8x8xf32>
    %cst_17 = arith.constant 0.000000e+00 : f32
    %47 = vector.broadcast %cst_17 : f32 to vector<16x128xf32>
    %48 = vector.extract_strided_slice %36 {offsets = [0, 0, 0], sizes = [2, 8, 32], strides = [1, 1, 1]} : vector<2x8x128xf32> to vector<2x8x32xf32>
    %49 = arith.truncf %48 : vector<2x8x32xf32> to vector<2x8x32xbf16>
    %50 = vector.extract_strided_slice %37 {offsets = [0, 0, 0], sizes = [2, 8, 32], strides = [1, 1, 1]} : vector<2x8x128xf32> to vector<2x8x32xf32>
    %51 = arith.truncf %50 : vector<2x8x32xf32> to vector<2x8x32xbf16>
    %52 = vector.extract_strided_slice %38 {offsets = [0, 0, 0], sizes = [2, 8, 32], strides = [1, 1, 1]} : vector<2x8x128xf32> to vector<2x8x32xf32>
    %53 = arith.truncf %52 : vector<2x8x32xf32> to vector<2x8x32xbf16>
    "tpu.trace_start"() <{level = 10 : i32, message = "bqd,bkd->bqk"}> : () -> ()
    %cst_18 = arith.constant dense<0.000000e+00> : vector<2x8x8xf32>
    %54 = tpu.matmul %49, %51, %cst_18 {dimension_numbers = #tpu.dot_dimension_numbers<[2], [2], [1], [1], [0, 0, 0, 1, 1, 1], [0], [0]>} : vector<2x8x32xbf16>, vector<2x8x32xbf16>, vector<2x8x8xf32> -> vector<2x8x8xf32>
    "tpu.trace_stop"() : () -> ()
    %cst_19 = arith.constant 0.176776692 : f32
    %55 = vector.broadcast %cst_19 : f32 to vector<2x8x8xf32>
    %56 = arith.mulf %54, %55 : vector<2x8x8xf32>
    %57 = arith.addf %56, %46 : vector<2x8x8xf32>
    %cst_20 = arith.constant dense<0xFF800000> : vector<2x8xf32>
    %58 = vector.multi_reduction <maximumf>, %57, %cst_20 [2] : vector<2x8x8xf32> to vector<2x8xf32>
    %59 = vector.shape_cast %58 : vector<2x8xf32> to vector<2x8x1xf32>
    %60 = vector.broadcast %59 : vector<2x8x1xf32> to vector<2x8x8xf32>
    %61 = arith.subf %57, %60 : vector<2x8x8xf32>
    %62 = math.exp %61 : vector<2x8x8xf32>
    %cst_21 = arith.constant dense<0.000000e+00> : vector<2x8xf32>
    %63 = vector.multi_reduction <add>, %62, %cst_21 [2] : vector<2x8x8xf32> to vector<2x8xf32>
    %64 = vector.shape_cast %63 : vector<2x8xf32> to vector<2x8x1xf32>
    %cst_22 = arith.constant 1.000000e+00 : f32
    %65 = vector.broadcast %cst_22 : f32 to vector<2x8x1xf32>
    %66 = arith.divf %65, %64 : vector<2x8x1xf32>
    %67 = vector.broadcast %66 : vector<2x8x1xf32> to vector<2x8x8xf32>
    %68 = arith.mulf %62, %67 : vector<2x8x8xf32>
    %69 = arith.truncf %68 : vector<2x8x8xf32> to vector<2x8x8xbf16>
    "tpu.trace_start"() <{level = 10 : i32, message = "bqk,bkd->bqd"}> : () -> ()
    %cst_23 = arith.constant dense<0.000000e+00> : vector<2x8x32xf32>
    %70 = tpu.matmul %69, %53, %cst_23 {dimension_numbers = #tpu.dot_dimension_numbers<[2], [1], [1], [2], [0, 0, 0, 1, 1, 2], [0], [0]>} : vector<2x8x8xbf16>, vector<2x8x32xbf16>, vector<2x8x32xf32> -> vector<2x8x32xf32>
    "tpu.trace_stop"() : () -> ()
    %71 = vector.shape_cast %70 : vector<2x8x32xf32> to vector<16x32xf32>
    %72 = arith.truncf %71 : vector<16x32xf32> to vector<16x32xbf16>
    %c0_24 = arith.constant 0 : index
    %c0_25 = arith.constant 0 : index
    %73 = vector.load %arg5[%c0_24, %c0_25] : memref<128x128xbf16, #tpu.memory_space<vmem>>, vector<32x128xbf16>
    %cst_26 = arith.constant dense<0.000000e+00> : vector<16x128xf32>
    %74 = tpu.matmul %72, %73, %cst_26 {dimension_numbers = #tpu.dot_dimension_numbers<[1], [0], [0], [1], [0, 0, 1, 1], [], []>} : vector<16x32xbf16>, vector<32x128xbf16>, vector<16x128xf32> -> vector<16x128xf32>
    %75 = arith.addf %47, %74 : vector<16x128xf32>
    %76 = vector.extract_strided_slice %36 {offsets = [0, 0, 32], sizes = [2, 8, 32], strides = [1, 1, 1]} : vector<2x8x128xf32> to vector<2x8x32xf32>
    %77 = arith.truncf %76 : vector<2x8x32xf32> to vector<2x8x32xbf16>
    %78 = vector.extract_strided_slice %37 {offsets = [0, 0, 32], sizes = [2, 8, 32], strides = [1, 1, 1]} : vector<2x8x128xf32> to vector<2x8x32xf32>
    %79 = arith.truncf %78 : vector<2x8x32xf32> to vector<2x8x32xbf16>
    %80 = vector.extract_strided_slice %38 {offsets = [0, 0, 32], sizes = [2, 8, 32], strides = [1, 1, 1]} : vector<2x8x128xf32> to vector<2x8x32xf32>
    %81 = arith.truncf %80 : vector<2x8x32xf32> to vector<2x8x32xbf16>
    "tpu.trace_start"() <{level = 10 : i32, message = "bqd,bkd->bqk"}> : () -> ()
    %cst_27 = arith.constant dense<0.000000e+00> : vector<2x8x8xf32>
    %82 = tpu.matmul %77, %79, %cst_27 {dimension_numbers = #tpu.dot_dimension_numbers<[2], [2], [1], [1], [0, 0, 0, 1, 1, 1], [0], [0]>} : vector<2x8x32xbf16>, vector<2x8x32xbf16>, vector<2x8x8xf32> -> vector<2x8x8xf32>
    "tpu.trace_stop"() : () -> ()
    %cst_28 = arith.constant 0.176776692 : f32
    %83 = vector.broadcast %cst_28 : f32 to vector<2x8x8xf32>
    %84 = arith.mulf %82, %83 : vector<2x8x8xf32>
    %85 = arith.addf %84, %46 : vector<2x8x8xf32>
    %cst_29 = arith.constant dense<0xFF800000> : vector<2x8xf32>
    %86 = vector.multi_reduction <maximumf>, %85, %cst_29 [2] : vector<2x8x8xf32> to vector<2x8xf32>
    %87 = vector.shape_cast %86 : vector<2x8xf32> to vector<2x8x1xf32>
    %88 = vector.broadcast %87 : vector<2x8x1xf32> to vector<2x8x8xf32>
    %89 = arith.subf %85, %88 : vector<2x8x8xf32>
    %90 = math.exp %89 : vector<2x8x8xf32>
    %cst_30 = arith.constant dense<0.000000e+00> : vector<2x8xf32>
    %91 = vector.multi_reduction <add>, %90, %cst_30 [2] : vector<2x8x8xf32> to vector<2x8xf32>
    %92 = vector.shape_cast %91 : vector<2x8xf32> to vector<2x8x1xf32>
    %cst_31 = arith.constant 1.000000e+00 : f32
    %93 = vector.broadcast %cst_31 : f32 to vector<2x8x1xf32>
    %94 = arith.divf %93, %92 : vector<2x8x1xf32>
    %95 = vector.broadcast %94 : vector<2x8x1xf32> to vector<2x8x8xf32>
    %96 = arith.mulf %90, %95 : vector<2x8x8xf32>
    %97 = arith.truncf %96 : vector<2x8x8xf32> to vector<2x8x8xbf16>
    "tpu.trace_start"() <{level = 10 : i32, message = "bqk,bkd->bqd"}> : () -> ()
    %cst_32 = arith.constant dense<0.000000e+00> : vector<2x8x32xf32>
    %98 = tpu.matmul %97, %81, %cst_32 {dimension_numbers = #tpu.dot_dimension_numbers<[2], [1], [1], [2], [0, 0, 0, 1, 1, 2], [0], [0]>} : vector<2x8x8xbf16>, vector<2x8x32xbf16>, vector<2x8x32xf32> -> vector<2x8x32xf32>
    "tpu.trace_stop"() : () -> ()
    %99 = vector.shape_cast %98 : vector<2x8x32xf32> to vector<16x32xf32>
    %100 = arith.truncf %99 : vector<16x32xf32> to vector<16x32xbf16>
    %c32 = arith.constant 32 : index
    %c0_33 = arith.constant 0 : index
    %101 = vector.load %arg5[%c32, %c0_33] : memref<128x128xbf16, #tpu.memory_space<vmem>>, vector<32x128xbf16>
    %cst_34 = arith.constant dense<0.000000e+00> : vector<16x128xf32>
    %102 = tpu.matmul %100, %101, %cst_34 {dimension_numbers = #tpu.dot_dimension_numbers<[1], [0], [0], [1], [0, 0, 1, 1], [], []>} : vector<16x32xbf16>, vector<32x128xbf16>, vector<16x128xf32> -> vector<16x128xf32>
    %103 = arith.addf %75, %102 : vector<16x128xf32>
    %104 = vector.extract_strided_slice %36 {offsets = [0, 0, 64], sizes = [2, 8, 32], strides = [1, 1, 1]} : vector<2x8x128xf32> to vector<2x8x32xf32>
    %105 = arith.truncf %104 : vector<2x8x32xf32> to vector<2x8x32xbf16>
    %106 = vector.extract_strided_slice %37 {offsets = [0, 0, 64], sizes = [2, 8, 32], strides = [1, 1, 1]} : vector<2x8x128xf32> to vector<2x8x32xf32>
    %107 = arith.truncf %106 : vector<2x8x32xf32> to vector<2x8x32xbf16>
    %108 = vector.extract_strided_slice %38 {offsets = [0, 0, 64], sizes = [2, 8, 32], strides = [1, 1, 1]} : vector<2x8x128xf32> to vector<2x8x32xf32>
    %109 = arith.truncf %108 : vector<2x8x32xf32> to vector<2x8x32xbf16>
    "tpu.trace_start"() <{level = 10 : i32, message = "bqd,bkd->bqk"}> : () -> ()
    %cst_35 = arith.constant dense<0.000000e+00> : vector<2x8x8xf32>
    %110 = tpu.matmul %105, %107, %cst_35 {dimension_numbers = #tpu.dot_dimension_numbers<[2], [2], [1], [1], [0, 0, 0, 1, 1, 1], [0], [0]>} : vector<2x8x32xbf16>, vector<2x8x32xbf16>, vector<2x8x8xf32> -> vector<2x8x8xf32>
    "tpu.trace_stop"() : () -> ()
    %cst_36 = arith.constant 0.176776692 : f32
    %111 = vector.broadcast %cst_36 : f32 to vector<2x8x8xf32>
    %112 = arith.mulf %110, %111 : vector<2x8x8xf32>
    %113 = arith.addf %112, %46 : vector<2x8x8xf32>
    %cst_37 = arith.constant dense<0xFF800000> : vector<2x8xf32>
    %114 = vector.multi_reduction <maximumf>, %113, %cst_37 [2] : vector<2x8x8xf32> to vector<2x8xf32>
    %115 = vector.shape_cast %114 : vector<2x8xf32> to vector<2x8x1xf32>
    %116 = vector.broadcast %115 : vector<2x8x1xf32> to vector<2x8x8xf32>
    %117 = arith.subf %113, %116 : vector<2x8x8xf32>
    %118 = math.exp %117 : vector<2x8x8xf32>
    %cst_38 = arith.constant dense<0.000000e+00> : vector<2x8xf32>
    %119 = vector.multi_reduction <add>, %118, %cst_38 [2] : vector<2x8x8xf32> to vector<2x8xf32>
    %120 = vector.shape_cast %119 : vector<2x8xf32> to vector<2x8x1xf32>
    %cst_39 = arith.constant 1.000000e+00 : f32
    %121 = vector.broadcast %cst_39 : f32 to vector<2x8x1xf32>
    %122 = arith.divf %121, %120 : vector<2x8x1xf32>
    %123 = vector.broadcast %122 : vector<2x8x1xf32> to vector<2x8x8xf32>
    %124 = arith.mulf %118, %123 : vector<2x8x8xf32>
    %125 = arith.truncf %124 : vector<2x8x8xf32> to vector<2x8x8xbf16>
    "tpu.trace_start"() <{level = 10 : i32, message = "bqk,bkd->bqd"}> : () -> ()
    %cst_40 = arith.constant dense<0.000000e+00> : vector<2x8x32xf32>
    %126 = tpu.matmul %125, %109, %cst_40 {dimension_numbers = #tpu.dot_dimension_numbers<[2], [1], [1], [2], [0, 0, 0, 1, 1, 2], [0], [0]>} : vector<2x8x8xbf16>, vector<2x8x32xbf16>, vector<2x8x32xf32> -> vector<2x8x32xf32>
    "tpu.trace_stop"() : () -> ()
    %127 = vector.shape_cast %126 : vector<2x8x32xf32> to vector<16x32xf32>
    %128 = arith.truncf %127 : vector<16x32xf32> to vector<16x32xbf16>
    %c64 = arith.constant 64 : index
    %c0_41 = arith.constant 0 : index
    %129 = vector.load %arg5[%c64, %c0_41] : memref<128x128xbf16, #tpu.memory_space<vmem>>, vector<32x128xbf16>
    %cst_42 = arith.constant dense<0.000000e+00> : vector<16x128xf32>
    %130 = tpu.matmul %128, %129, %cst_42 {dimension_numbers = #tpu.dot_dimension_numbers<[1], [0], [0], [1], [0, 0, 1, 1], [], []>} : vector<16x32xbf16>, vector<32x128xbf16>, vector<16x128xf32> -> vector<16x128xf32>
    %131 = arith.addf %103, %130 : vector<16x128xf32>
    %132 = vector.extract_strided_slice %36 {offsets = [0, 0, 96], sizes = [2, 8, 32], strides = [1, 1, 1]} : vector<2x8x128xf32> to vector<2x8x32xf32>
    %133 = arith.truncf %132 : vector<2x8x32xf32> to vector<2x8x32xbf16>
    %134 = vector.extract_strided_slice %37 {offsets = [0, 0, 96], sizes = [2, 8, 32], strides = [1, 1, 1]} : vector<2x8x128xf32> to vector<2x8x32xf32>
    %135 = arith.truncf %134 : vector<2x8x32xf32> to vector<2x8x32xbf16>
    %136 = vector.extract_strided_slice %38 {offsets = [0, 0, 96], sizes = [2, 8, 32], strides = [1, 1, 1]} : vector<2x8x128xf32> to vector<2x8x32xf32>
    %137 = arith.truncf %136 : vector<2x8x32xf32> to vector<2x8x32xbf16>
    "tpu.trace_start"() <{level = 10 : i32, message = "bqd,bkd->bqk"}> : () -> ()
    %cst_43 = arith.constant dense<0.000000e+00> : vector<2x8x8xf32>
    %138 = tpu.matmul %133, %135, %cst_43 {dimension_numbers = #tpu.dot_dimension_numbers<[2], [2], [1], [1], [0, 0, 0, 1, 1, 1], [0], [0]>} : vector<2x8x32xbf16>, vector<2x8x32xbf16>, vector<2x8x8xf32> -> vector<2x8x8xf32>
    "tpu.trace_stop"() : () -> ()
    %cst_44 = arith.constant 0.176776692 : f32
    %139 = vector.broadcast %cst_44 : f32 to vector<2x8x8xf32>
    %140 = arith.mulf %138, %139 : vector<2x8x8xf32>
    %141 = arith.addf %140, %46 : vector<2x8x8xf32>
    %cst_45 = arith.constant dense<0xFF800000> : vector<2x8xf32>
    %142 = vector.multi_reduction <maximumf>, %141, %cst_45 [2] : vector<2x8x8xf32> to vector<2x8xf32>
    %143 = vector.shape_cast %142 : vector<2x8xf32> to vector<2x8x1xf32>
    %144 = vector.broadcast %143 : vector<2x8x1xf32> to vector<2x8x8xf32>
    %145 = arith.subf %141, %144 : vector<2x8x8xf32>
    %146 = math.exp %145 : vector<2x8x8xf32>
    %cst_46 = arith.constant dense<0.000000e+00> : vector<2x8xf32>
    %147 = vector.multi_reduction <add>, %146, %cst_46 [2] : vector<2x8x8xf32> to vector<2x8xf32>
    %148 = vector.shape_cast %147 : vector<2x8xf32> to vector<2x8x1xf32>
    %cst_47 = arith.constant 1.000000e+00 : f32
    %149 = vector.broadcast %cst_47 : f32 to vector<2x8x1xf32>
    %150 = arith.divf %149, %148 : vector<2x8x1xf32>
    %151 = vector.broadcast %150 : vector<2x8x1xf32> to vector<2x8x8xf32>
    %152 = arith.mulf %146, %151 : vector<2x8x8xf32>
    %153 = arith.truncf %152 : vector<2x8x8xf32> to vector<2x8x8xbf16>
    "tpu.trace_start"() <{level = 10 : i32, message = "bqk,bkd->bqd"}> : () -> ()
    %cst_48 = arith.constant dense<0.000000e+00> : vector<2x8x32xf32>
    %154 = tpu.matmul %153, %137, %cst_48 {dimension_numbers = #tpu.dot_dimension_numbers<[2], [1], [1], [2], [0, 0, 0, 1, 1, 2], [0], [0]>} : vector<2x8x8xbf16>, vector<2x8x32xbf16>, vector<2x8x32xf32> -> vector<2x8x32xf32>
    "tpu.trace_stop"() : () -> ()
    %155 = vector.shape_cast %154 : vector<2x8x32xf32> to vector<16x32xf32>
    %156 = arith.truncf %155 : vector<16x32xf32> to vector<16x32xbf16>
    %c96 = arith.constant 96 : index
    %c0_49 = arith.constant 0 : index
    %157 = vector.load %arg5[%c96, %c0_49] : memref<128x128xbf16, #tpu.memory_space<vmem>>, vector<32x128xbf16>
    %cst_50 = arith.constant dense<0.000000e+00> : vector<16x128xf32>
    %158 = tpu.matmul %156, %157, %cst_50 {dimension_numbers = #tpu.dot_dimension_numbers<[1], [0], [0], [1], [0, 0, 1, 1], [], []>} : vector<16x32xbf16>, vector<32x128xbf16>, vector<16x128xf32> -> vector<16x128xf32>
    %159 = arith.addf %131, %158 : vector<16x128xf32>
    %160 = vector.shape_cast %6 : vector<128xf32> to vector<1x128xf32>
    %161 = vector.broadcast %160 : vector<1x128xf32> to vector<16x128xf32>
    %162 = arith.addf %159, %161 : vector<16x128xf32>
    %163 = vector.shape_cast %162 : vector<16x128xf32> to vector<2x8x128xf32>
    %164 = arith.addf %0, %163 : vector<2x8x128xf32>
    %c0_51 = arith.constant 0 : index
    %c0_52 = arith.constant 0 : index
    %c0_53 = arith.constant 0 : index
    %165 = vector.load %arg7[%c0_51, %c0_52, %c0_53] : memref<2x8x128xf32, #tpu.memory_space<vmem>>, vector<2x8x128xf32>
    tpu.vector_store %arg7[%c0_51, %c0_52, %c0_53], %164 {strides = array<i32>} : memref<2x8x128xf32, #tpu.memory_space<vmem>>, vector<2x8x128xf32>,
    return
  }
  func.func @transform_0(%arg0: i32) -> (i32, i32, i32) {
    %c0_i32 = arith.constant 0 : i32
    %c0_i32_0 = arith.constant 0 : i32
    %c0_i32_1 = arith.constant 0 : i32
    return %arg0, %c0_i32, %c0_i32_0 : i32, i32, i32
  }
  func.func @transform_1(%arg0: i32) -> (i32, i32) {
    %c0_i32 = arith.constant 0 : i32
    %c0_i32_0 = arith.constant 0 : i32
    %c0_i32_1 = arith.constant 0 : i32
    return %c0_i32, %c0_i32_0 : i32, i32
  }
  func.func @transform_2(%arg0: i32) -> (i32, i32) {
    %c0_i32 = arith.constant 0 : i32
    %c0_i32_0 = arith.constant 0 : i32
    %c0_i32_1 = arith.constant 0 : i32
    return %c0_i32, %c0_i32_0 : i32, i32
  }
  func.func @transform_3(%arg0: i32) -> (i32, i32) {
    %c0_i32 = arith.constant 0 : i32
    %c0_i32_0 = arith.constant 0 : i32
    %c0_i32_1 = arith.constant 0 : i32
    return %c0_i32, %c0_i32_0 : i32, i32
  }
  func.func @transform_4(%arg0: i32) -> (i32, i32) {
    %c0_i32 = arith.constant 0 : i32
    %c0_i32_0 = arith.constant 0 : i32
    %c0_i32_1 = arith.constant 0 : i32
    return %c0_i32, %c0_i32_0 : i32, i32
  }
  func.func @transform_5(%arg0: i32) -> (i32, i32) {
    %c0_i32 = arith.constant 0 : i32
    %c0_i32_0 = arith.constant 0 : i32
    %c0_i32_1 = arith.constant 0 : i32
    return %c0_i32, %c0_i32_0 : i32, i32
  }
  func.func @transform_6(%arg0: i32) -> (i32, i32, i32) {
    %c0_i32 = arith.constant 0 : i32
    %c0_i32_0 = arith.constant 0 : i32
    %c0_i32_1 = arith.constant 0 : i32
    return %arg0, %c0_i32, %c0_i32_0 : i32, i32, i32
  }
}

module attributes {stable_mosaic.version = 11 : i64} {
  func.func @_multi_attn_ffn_kernel(%arg0: i32, %arg1: memref<1x16x128xf32, #tpu.memory_space<vmem>>, %arg2: memref<1x128xf32, #tpu.memory_space<vmem>>, %arg3: memref<1x128xf32, #tpu.memory_space<vmem>>, %arg4: memref<128x384xbf16, #tpu.memory_space<vmem>>, %arg5: memref<128x128xbf16, #tpu.memory_space<vmem>>, %arg6: memref<1x128xf32, #tpu.memory_space<vmem>>, %arg7: memref<1x128xf32, #tpu.memory_space<vmem>>, %arg8: memref<1x128xf32, #tpu.memory_space<vmem>>, %arg9: memref<128x512xbf16, #tpu.memory_space<vmem>>, %arg10: memref<1x512xf32, #tpu.memory_space<vmem>>, %arg11: memref<512x128xbf16, #tpu.memory_space<vmem>>, %arg12: memref<1x128xf32, #tpu.memory_space<vmem>>, %arg13: memref<1x16x128xf32, #tpu.memory_space<vmem>>) attributes {dimension_semantics = [#tpu.dimension_semantics<parallel>], iteration_bounds = array<i64: 2>, scalar_prefetch = 0 : i64, scratch_operands = 0 : i64, tpu.core_type = #tpu.core_type<tc>, window_params = [{transform_indices = @transform_0, window_bounds = array<i64: 1, 16, 128>}, {pipeline_mode = #tpu.pipeline_mode<synchronous>, transform_indices = @transform_1, window_bounds = array<i64: 1, 128>}, {pipeline_mode = #tpu.pipeline_mode<synchronous>, transform_indices = @transform_2, window_bounds = array<i64: 1, 128>}, {pipeline_mode = #tpu.pipeline_mode<synchronous>, transform_indices = @transform_3, window_bounds = array<i64: 128, 384>}, {pipeline_mode = #tpu.pipeline_mode<synchronous>, transform_indices = @transform_4, window_bounds = array<i64: 128, 128>}, {pipeline_mode = #tpu.pipeline_mode<synchronous>, transform_indices = @transform_5, window_bounds = array<i64: 1, 128>}, {pipeline_mode = #tpu.pipeline_mode<synchronous>, transform_indices = @transform_6, window_bounds = array<i64: 1, 128>}, {pipeline_mode = #tpu.pipeline_mode<synchronous>, transform_indices = @transform_7, window_bounds = array<i64: 1, 128>}, {pipeline_mode = #tpu.pipeline_mode<synchronous>, transform_indices = @transform_8, window_bounds = array<i64: 128, 512>}, {pipeline_mode = #tpu.pipeline_mode<synchronous>, transform_indices = @transform_9, window_bounds = array<i64: 1, 512>}, {pipeline_mode = #tpu.pipeline_mode<synchronous>, transform_indices = @transform_10, window_bounds = array<i64: 512, 128>}, {pipeline_mode = #tpu.pipeline_mode<synchronous>, transform_indices = @transform_11, window_bounds = array<i64: 1, 128>}, {transform_indices = @transform_12, window_bounds = array<i64: 1, 16, 128>}]} {
    %c0 = arith.constant 0 : index
    %c0_0 = arith.constant 0 : index
    %c0_1 = arith.constant 0 : index
    %0 = vector.load %arg1[%c0, %c0_0, %c0_1] : memref<1x16x128xf32, #tpu.memory_space<vmem>>, vector<1x16x128xf32>
    %c0_2 = arith.constant 0 : index
    %c0_3 = arith.constant 0 : index
    %1 = vector.load %arg2[%c0_2, %c0_3] : memref<1x128xf32, #tpu.memory_space<vmem>>, vector<1x128xf32>
    %2 = vector.shape_cast %1 : vector<1x128xf32> to vector<128xf32>
    %c0_4 = arith.constant 0 : index
    %c0_5 = arith.constant 0 : index
    %3 = vector.load %arg3[%c0_4, %c0_5] : memref<1x128xf32, #tpu.memory_space<vmem>>, vector<1x128xf32>
    %4 = vector.shape_cast %3 : vector<1x128xf32> to vector<128xf32>
    %c0_6 = arith.constant 0 : index
    %c0_7 = arith.constant 0 : index
    %5 = vector.load %arg6[%c0_6, %c0_7] : memref<1x128xf32, #tpu.memory_space<vmem>>, vector<1x128xf32>
    %6 = vector.shape_cast %5 : vector<1x128xf32> to vector<128xf32>
    %cst = arith.constant dense<0.000000e+00> : vector<1x16xf32>
    %7 = vector.multi_reduction <add>, %0, %cst [2] : vector<1x16x128xf32> to vector<1x16xf32>
    %8 = vector.shape_cast %7 : vector<1x16xf32> to vector<1x16x1xf32>
    %cst_8 = arith.constant 1.280000e+02 : f32
    %9 = vector.broadcast %cst_8 : f32 to vector<1x16x1xf32>
    %10 = arith.divf %8, %9 : vector<1x16x1xf32>
    %11 = vector.broadcast %10 : vector<1x16x1xf32> to vector<1x16x128xf32>
    %12 = arith.subf %0, %11 : vector<1x16x128xf32>
    %13 = arith.mulf %12, %12 : vector<1x16x128xf32>
    %cst_9 = arith.constant dense<0.000000e+00> : vector<1x16xf32>
    %14 = vector.multi_reduction <add>, %13, %cst_9 [2] : vector<1x16x128xf32> to vector<1x16xf32>
    %15 = vector.shape_cast %14 : vector<1x16xf32> to vector<1x16x1xf32>
    %cst_10 = arith.constant 1.280000e+02 : f32
    %16 = vector.broadcast %cst_10 : f32 to vector<1x16x1xf32>
    %17 = arith.divf %15, %16 : vector<1x16x1xf32>
    %18 = vector.broadcast %10 : vector<1x16x1xf32> to vector<1x16x128xf32>
    %19 = arith.subf %0, %18 : vector<1x16x128xf32>
    %cst_11 = arith.constant 9.99999974E-6 : f32
    %20 = vector.broadcast %cst_11 : f32 to vector<1x16x1xf32>
    %21 = arith.addf %17, %20 : vector<1x16x1xf32>
    %22 = math.rsqrt %21 : vector<1x16x1xf32>
    %23 = vector.broadcast %22 : vector<1x16x1xf32> to vector<1x16x128xf32>
    %24 = arith.mulf %19, %23 : vector<1x16x128xf32>
    %25 = vector.shape_cast %2 : vector<128xf32> to vector<1x1x128xf32>
    %26 = vector.broadcast %25 : vector<1x1x128xf32> to vector<1x16x128xf32>
    %27 = arith.mulf %24, %26 : vector<1x16x128xf32>
    %28 = vector.shape_cast %4 : vector<128xf32> to vector<1x1x128xf32>
    %29 = vector.broadcast %28 : vector<1x1x128xf32> to vector<1x16x128xf32>
    %30 = arith.addf %27, %29 : vector<1x16x128xf32>
    %31 = vector.shape_cast %30 : vector<1x16x128xf32> to vector<16x128xf32>
    %32 = arith.truncf %31 : vector<16x128xf32> to vector<16x128xbf16>
    %c0_12 = arith.constant 0 : index
    %c0_13 = arith.constant 0 : index
    %33 = vector.load %arg4[%c0_12, %c0_13] : memref<128x384xbf16, #tpu.memory_space<vmem>>, vector<128x384xbf16>
    %cst_14 = arith.constant dense<0.000000e+00> : vector<16x384xf32>
    %34 = tpu.matmul %32, %33, %cst_14 {dimension_numbers = #tpu.dot_dimension_numbers<[1], [0], [0], [1], [0, 0, 1, 1], [], []>} : vector<16x128xbf16>, vector<128x384xbf16>, vector<16x384xf32> -> vector<16x384xf32>
    %35 = vector.shape_cast %34 : vector<16x384xf32> to vector<1x16x384xf32>
    %36 = vector.extract_strided_slice %35 {offsets = [0, 0, 0], sizes = [1, 16, 128], strides = [1, 1, 1]} : vector<1x16x384xf32> to vector<1x16x128xf32>
    %37 = vector.extract_strided_slice %35 {offsets = [0, 0, 128], sizes = [1, 16, 128], strides = [1, 1, 1]} : vector<1x16x384xf32> to vector<1x16x128xf32>
    %38 = vector.extract_strided_slice %35 {offsets = [0, 0, 256], sizes = [1, 16, 128], strides = [1, 1, 1]} : vector<1x16x384xf32> to vector<1x16x128xf32>
    %39 = tpu.iota {dimensions = array<i32: 0>} : vector<16x16xi32>
    %40 = tpu.iota {dimensions = array<i32: 1>} : vector<16x16xi32>
    %41 = arith.cmpi sle, %40, %39 : vector<16x16xi32>
    %cst_15 = arith.constant 0.000000e+00 : f32
    %cst_16 = arith.constant -1.000000e+30 : f32
    %42 = vector.broadcast %cst_15 : f32 to vector<16x16xf32>
    %43 = vector.broadcast %cst_16 : f32 to vector<16x16xf32>
    %44 = arith.select %41, %42, %43 : vector<16x16xi1>, vector<16x16xf32>
    %45 = vector.shape_cast %44 : vector<16x16xf32> to vector<1x16x16xf32>
    %cst_17 = arith.constant 0.000000e+00 : f32
    %46 = vector.broadcast %cst_17 : f32 to vector<16x128xf32>
    %47 = vector.extract_strided_slice %36 {offsets = [0, 0, 0], sizes = [1, 16, 32], strides = [1, 1, 1]} : vector<1x16x128xf32> to vector<1x16x32xf32>
    %48 = arith.truncf %47 : vector<1x16x32xf32> to vector<1x16x32xbf16>
    %49 = vector.extract_strided_slice %37 {offsets = [0, 0, 0], sizes = [1, 16, 32], strides = [1, 1, 1]} : vector<1x16x128xf32> to vector<1x16x32xf32>
    %50 = arith.truncf %49 : vector<1x16x32xf32> to vector<1x16x32xbf16>
    %51 = vector.extract_strided_slice %38 {offsets = [0, 0, 0], sizes = [1, 16, 32], strides = [1, 1, 1]} : vector<1x16x128xf32> to vector<1x16x32xf32>
    %52 = arith.truncf %51 : vector<1x16x32xf32> to vector<1x16x32xbf16>
    "tpu.trace_start"() <{level = 10 : i32, message = "bqd,bkd->bqk"}> : () -> ()
    %cst_18 = arith.constant dense<0.000000e+00> : vector<1x16x16xf32>
    %53 = tpu.matmul %48, %50, %cst_18 {dimension_numbers = #tpu.dot_dimension_numbers<[2], [2], [1], [1], [0, 0, 0, 1, 1, 1], [0], [0]>} : vector<1x16x32xbf16>, vector<1x16x32xbf16>, vector<1x16x16xf32> -> vector<1x16x16xf32>
    "tpu.trace_stop"() : () -> ()
    %cst_19 = arith.constant 0.176776692 : f32
    %54 = vector.broadcast %cst_19 : f32 to vector<1x16x16xf32>
    %55 = arith.mulf %53, %54 : vector<1x16x16xf32>
    %56 = arith.addf %55, %45 : vector<1x16x16xf32>
    %cst_20 = arith.constant dense<0xFF800000> : vector<1x16xf32>
    %57 = vector.multi_reduction <maximumf>, %56, %cst_20 [2] : vector<1x16x16xf32> to vector<1x16xf32>
    %58 = vector.shape_cast %57 : vector<1x16xf32> to vector<1x16x1xf32>
    %59 = vector.broadcast %58 : vector<1x16x1xf32> to vector<1x16x16xf32>
    %60 = arith.subf %56, %59 : vector<1x16x16xf32>
    %61 = math.exp %60 : vector<1x16x16xf32>
    %cst_21 = arith.constant dense<0.000000e+00> : vector<1x16xf32>
    %62 = vector.multi_reduction <add>, %61, %cst_21 [2] : vector<1x16x16xf32> to vector<1x16xf32>
    %63 = vector.shape_cast %62 : vector<1x16xf32> to vector<1x16x1xf32>
    %cst_22 = arith.constant 1.000000e+00 : f32
    %64 = vector.broadcast %cst_22 : f32 to vector<1x16x1xf32>
    %65 = arith.divf %64, %63 : vector<1x16x1xf32>
    %66 = vector.broadcast %65 : vector<1x16x1xf32> to vector<1x16x16xf32>
    %67 = arith.mulf %61, %66 : vector<1x16x16xf32>
    %68 = arith.truncf %67 : vector<1x16x16xf32> to vector<1x16x16xbf16>
    "tpu.trace_start"() <{level = 10 : i32, message = "bqk,bkd->bqd"}> : () -> ()
    %cst_23 = arith.constant dense<0.000000e+00> : vector<1x16x32xf32>
    %69 = tpu.matmul %68, %52, %cst_23 {dimension_numbers = #tpu.dot_dimension_numbers<[2], [1], [1], [2], [0, 0, 0, 1, 1, 2], [0], [0]>} : vector<1x16x16xbf16>, vector<1x16x32xbf16>, vector<1x16x32xf32> -> vector<1x16x32xf32>
    "tpu.trace_stop"() : () -> ()
    %70 = vector.shape_cast %69 : vector<1x16x32xf32> to vector<16x32xf32>
    %71 = arith.truncf %70 : vector<16x32xf32> to vector<16x32xbf16>
    %c0_24 = arith.constant 0 : index
    %c0_25 = arith.constant 0 : index
    %72 = vector.load %arg5[%c0_24, %c0_25] : memref<128x128xbf16, #tpu.memory_space<vmem>>, vector<32x128xbf16>
    %cst_26 = arith.constant dense<0.000000e+00> : vector<16x128xf32>
    %73 = tpu.matmul %71, %72, %cst_26 {dimension_numbers = #tpu.dot_dimension_numbers<[1], [0], [0], [1], [0, 0, 1, 1], [], []>} : vector<16x32xbf16>, vector<32x128xbf16>, vector<16x128xf32> -> vector<16x128xf32>
    %74 = arith.addf %46, %73 : vector<16x128xf32>
    %75 = vector.extract_strided_slice %36 {offsets = [0, 0, 32], sizes = [1, 16, 32], strides = [1, 1, 1]} : vector<1x16x128xf32> to vector<1x16x32xf32>
    %76 = arith.truncf %75 : vector<1x16x32xf32> to vector<1x16x32xbf16>
    %77 = vector.extract_strided_slice %37 {offsets = [0, 0, 32], sizes = [1, 16, 32], strides = [1, 1, 1]} : vector<1x16x128xf32> to vector<1x16x32xf32>
    %78 = arith.truncf %77 : vector<1x16x32xf32> to vector<1x16x32xbf16>
    %79 = vector.extract_strided_slice %38 {offsets = [0, 0, 32], sizes = [1, 16, 32], strides = [1, 1, 1]} : vector<1x16x128xf32> to vector<1x16x32xf32>
    %80 = arith.truncf %79 : vector<1x16x32xf32> to vector<1x16x32xbf16>
    "tpu.trace_start"() <{level = 10 : i32, message = "bqd,bkd->bqk"}> : () -> ()
    %cst_27 = arith.constant dense<0.000000e+00> : vector<1x16x16xf32>
    %81 = tpu.matmul %76, %78, %cst_27 {dimension_numbers = #tpu.dot_dimension_numbers<[2], [2], [1], [1], [0, 0, 0, 1, 1, 1], [0], [0]>} : vector<1x16x32xbf16>, vector<1x16x32xbf16>, vector<1x16x16xf32> -> vector<1x16x16xf32>
    "tpu.trace_stop"() : () -> ()
    %cst_28 = arith.constant 0.176776692 : f32
    %82 = vector.broadcast %cst_28 : f32 to vector<1x16x16xf32>
    %83 = arith.mulf %81, %82 : vector<1x16x16xf32>
    %84 = arith.addf %83, %45 : vector<1x16x16xf32>
    %cst_29 = arith.constant dense<0xFF800000> : vector<1x16xf32>
    %85 = vector.multi_reduction <maximumf>, %84, %cst_29 [2] : vector<1x16x16xf32> to vector<1x16xf32>
    %86 = vector.shape_cast %85 : vector<1x16xf32> to vector<1x16x1xf32>
    %87 = vector.broadcast %86 : vector<1x16x1xf32> to vector<1x16x16xf32>
    %88 = arith.subf %84, %87 : vector<1x16x16xf32>
    %89 = math.exp %88 : vector<1x16x16xf32>
    %cst_30 = arith.constant dense<0.000000e+00> : vector<1x16xf32>
    %90 = vector.multi_reduction <add>, %89, %cst_30 [2] : vector<1x16x16xf32> to vector<1x16xf32>
    %91 = vector.shape_cast %90 : vector<1x16xf32> to vector<1x16x1xf32>
    %cst_31 = arith.constant 1.000000e+00 : f32
    %92 = vector.broadcast %cst_31 : f32 to vector<1x16x1xf32>
    %93 = arith.divf %92, %91 : vector<1x16x1xf32>
    %94 = vector.broadcast %93 : vector<1x16x1xf32> to vector<1x16x16xf32>
    %95 = arith.mulf %89, %94 : vector<1x16x16xf32>
    %96 = arith.truncf %95 : vector<1x16x16xf32> to vector<1x16x16xbf16>
    "tpu.trace_start"() <{level = 10 : i32, message = "bqk,bkd->bqd"}> : () -> ()
    %cst_32 = arith.constant dense<0.000000e+00> : vector<1x16x32xf32>
    %97 = tpu.matmul %96, %80, %cst_32 {dimension_numbers = #tpu.dot_dimension_numbers<[2], [1], [1], [2], [0, 0, 0, 1, 1, 2], [0], [0]>} : vector<1x16x16xbf16>, vector<1x16x32xbf16>, vector<1x16x32xf32> -> vector<1x16x32xf32>
    "tpu.trace_stop"() : () -> ()
    %98 = vector.shape_cast %97 : vector<1x16x32xf32> to vector<16x32xf32>
    %99 = arith.truncf %98 : vector<16x32xf32> to vector<16x32xbf16>
    %c32 = arith.constant 32 : index
    %c0_33 = arith.constant 0 : index
    %100 = vector.load %arg5[%c32, %c0_33] : memref<128x128xbf16, #tpu.memory_space<vmem>>, vector<32x128xbf16>
    %cst_34 = arith.constant dense<0.000000e+00> : vector<16x128xf32>
    %101 = tpu.matmul %99, %100, %cst_34 {dimension_numbers = #tpu.dot_dimension_numbers<[1], [0], [0], [1], [0, 0, 1, 1], [], []>} : vector<16x32xbf16>, vector<32x128xbf16>, vector<16x128xf32> -> vector<16x128xf32>
    %102 = arith.addf %74, %101 : vector<16x128xf32>
    %103 = vector.extract_strided_slice %36 {offsets = [0, 0, 64], sizes = [1, 16, 32], strides = [1, 1, 1]} : vector<1x16x128xf32> to vector<1x16x32xf32>
    %104 = arith.truncf %103 : vector<1x16x32xf32> to vector<1x16x32xbf16>
    %105 = vector.extract_strided_slice %37 {offsets = [0, 0, 64], sizes = [1, 16, 32], strides = [1, 1, 1]} : vector<1x16x128xf32> to vector<1x16x32xf32>
    %106 = arith.truncf %105 : vector<1x16x32xf32> to vector<1x16x32xbf16>
    %107 = vector.extract_strided_slice %38 {offsets = [0, 0, 64], sizes = [1, 16, 32], strides = [1, 1, 1]} : vector<1x16x128xf32> to vector<1x16x32xf32>
    %108 = arith.truncf %107 : vector<1x16x32xf32> to vector<1x16x32xbf16>
    "tpu.trace_start"() <{level = 10 : i32, message = "bqd,bkd->bqk"}> : () -> ()
    %cst_35 = arith.constant dense<0.000000e+00> : vector<1x16x16xf32>
    %109 = tpu.matmul %104, %106, %cst_35 {dimension_numbers = #tpu.dot_dimension_numbers<[2], [2], [1], [1], [0, 0, 0, 1, 1, 1], [0], [0]>} : vector<1x16x32xbf16>, vector<1x16x32xbf16>, vector<1x16x16xf32> -> vector<1x16x16xf32>
    "tpu.trace_stop"() : () -> ()
    %cst_36 = arith.constant 0.176776692 : f32
    %110 = vector.broadcast %cst_36 : f32 to vector<1x16x16xf32>
    %111 = arith.mulf %109, %110 : vector<1x16x16xf32>
    %112 = arith.addf %111, %45 : vector<1x16x16xf32>
    %cst_37 = arith.constant dense<0xFF800000> : vector<1x16xf32>
    %113 = vector.multi_reduction <maximumf>, %112, %cst_37 [2] : vector<1x16x16xf32> to vector<1x16xf32>
    %114 = vector.shape_cast %113 : vector<1x16xf32> to vector<1x16x1xf32>
    %115 = vector.broadcast %114 : vector<1x16x1xf32> to vector<1x16x16xf32>
    %116 = arith.subf %112, %115 : vector<1x16x16xf32>
    %117 = math.exp %116 : vector<1x16x16xf32>
    %cst_38 = arith.constant dense<0.000000e+00> : vector<1x16xf32>
    %118 = vector.multi_reduction <add>, %117, %cst_38 [2] : vector<1x16x16xf32> to vector<1x16xf32>
    %119 = vector.shape_cast %118 : vector<1x16xf32> to vector<1x16x1xf32>
    %cst_39 = arith.constant 1.000000e+00 : f32
    %120 = vector.broadcast %cst_39 : f32 to vector<1x16x1xf32>
    %121 = arith.divf %120, %119 : vector<1x16x1xf32>
    %122 = vector.broadcast %121 : vector<1x16x1xf32> to vector<1x16x16xf32>
    %123 = arith.mulf %117, %122 : vector<1x16x16xf32>
    %124 = arith.truncf %123 : vector<1x16x16xf32> to vector<1x16x16xbf16>
    "tpu.trace_start"() <{level = 10 : i32, message = "bqk,bkd->bqd"}> : () -> ()
    %cst_40 = arith.constant dense<0.000000e+00> : vector<1x16x32xf32>
    %125 = tpu.matmul %124, %108, %cst_40 {dimension_numbers = #tpu.dot_dimension_numbers<[2], [1], [1], [2], [0, 0, 0, 1, 1, 2], [0], [0]>} : vector<1x16x16xbf16>, vector<1x16x32xbf16>, vector<1x16x32xf32> -> vector<1x16x32xf32>
    "tpu.trace_stop"() : () -> ()
    %126 = vector.shape_cast %125 : vector<1x16x32xf32> to vector<16x32xf32>
    %127 = arith.truncf %126 : vector<16x32xf32> to vector<16x32xbf16>
    %c64 = arith.constant 64 : index
    %c0_41 = arith.constant 0 : index
    %128 = vector.load %arg5[%c64, %c0_41] : memref<128x128xbf16, #tpu.memory_space<vmem>>, vector<32x128xbf16>
    %cst_42 = arith.constant dense<0.000000e+00> : vector<16x128xf32>
    %129 = tpu.matmul %127, %128, %cst_42 {dimension_numbers = #tpu.dot_dimension_numbers<[1], [0], [0], [1], [0, 0, 1, 1], [], []>} : vector<16x32xbf16>, vector<32x128xbf16>, vector<16x128xf32> -> vector<16x128xf32>
    %130 = arith.addf %102, %129 : vector<16x128xf32>
    %131 = vector.extract_strided_slice %36 {offsets = [0, 0, 96], sizes = [1, 16, 32], strides = [1, 1, 1]} : vector<1x16x128xf32> to vector<1x16x32xf32>
    %132 = arith.truncf %131 : vector<1x16x32xf32> to vector<1x16x32xbf16>
    %133 = vector.extract_strided_slice %37 {offsets = [0, 0, 96], sizes = [1, 16, 32], strides = [1, 1, 1]} : vector<1x16x128xf32> to vector<1x16x32xf32>
    %134 = arith.truncf %133 : vector<1x16x32xf32> to vector<1x16x32xbf16>
    %135 = vector.extract_strided_slice %38 {offsets = [0, 0, 96], sizes = [1, 16, 32], strides = [1, 1, 1]} : vector<1x16x128xf32> to vector<1x16x32xf32>
    %136 = arith.truncf %135 : vector<1x16x32xf32> to vector<1x16x32xbf16>
    "tpu.trace_start"() <{level = 10 : i32, message = "bqd,bkd->bqk"}> : () -> ()
    %cst_43 = arith.constant dense<0.000000e+00> : vector<1x16x16xf32>
    %137 = tpu.matmul %132, %134, %cst_43 {dimension_numbers = #tpu.dot_dimension_numbers<[2], [2], [1], [1], [0, 0, 0, 1, 1, 1], [0], [0]>} : vector<1x16x32xbf16>, vector<1x16x32xbf16>, vector<1x16x16xf32> -> vector<1x16x16xf32>
    "tpu.trace_stop"() : () -> ()
    %cst_44 = arith.constant 0.176776692 : f32
    %138 = vector.broadcast %cst_44 : f32 to vector<1x16x16xf32>
    %139 = arith.mulf %137, %138 : vector<1x16x16xf32>
    %140 = arith.addf %139, %45 : vector<1x16x16xf32>
    %cst_45 = arith.constant dense<0xFF800000> : vector<1x16xf32>
    %141 = vector.multi_reduction <maximumf>, %140, %cst_45 [2] : vector<1x16x16xf32> to vector<1x16xf32>
    %142 = vector.shape_cast %141 : vector<1x16xf32> to vector<1x16x1xf32>
    %143 = vector.broadcast %142 : vector<1x16x1xf32> to vector<1x16x16xf32>
    %144 = arith.subf %140, %143 : vector<1x16x16xf32>
    %145 = math.exp %144 : vector<1x16x16xf32>
    %cst_46 = arith.constant dense<0.000000e+00> : vector<1x16xf32>
    %146 = vector.multi_reduction <add>, %145, %cst_46 [2] : vector<1x16x16xf32> to vector<1x16xf32>
    %147 = vector.shape_cast %146 : vector<1x16xf32> to vector<1x16x1xf32>
    %cst_47 = arith.constant 1.000000e+00 : f32
    %148 = vector.broadcast %cst_47 : f32 to vector<1x16x1xf32>
    %149 = arith.divf %148, %147 : vector<1x16x1xf32>
    %150 = vector.broadcast %149 : vector<1x16x1xf32> to vector<1x16x16xf32>
    %151 = arith.mulf %145, %150 : vector<1x16x16xf32>
    %152 = arith.truncf %151 : vector<1x16x16xf32> to vector<1x16x16xbf16>
    "tpu.trace_start"() <{level = 10 : i32, message = "bqk,bkd->bqd"}> : () -> ()
    %cst_48 = arith.constant dense<0.000000e+00> : vector<1x16x32xf32>
    %153 = tpu.matmul %152, %136, %cst_48 {dimension_numbers = #tpu.dot_dimension_numbers<[2], [1], [1], [2], [0, 0, 0, 1, 1, 2], [0], [0]>} : vector<1x16x16xbf16>, vector<1x16x32xbf16>, vector<1x16x32xf32> -> vector<1x16x32xf32>
    "tpu.trace_stop"() : () -> ()
    %154 = vector.shape_cast %153 : vector<1x16x32xf32> to vector<16x32xf32>
    %155 = arith.truncf %154 : vector<16x32xf32> to vector<16x32xbf16>
    %c96 = arith.constant 96 : index
    %c0_49 = arith.constant 0 : index
    %156 = vector.load %arg5[%c96, %c0_49] : memref<128x128xbf16, #tpu.memory_space<vmem>>, vector<32x128xbf16>
    %cst_50 = arith.constant dense<0.000000e+00> : vector<16x128xf32>
    %157 = tpu.matmul %155, %156, %cst_50 {dimension_numbers = #tpu.dot_dimension_numbers<[1], [0], [0], [1], [0, 0, 1, 1], [], []>} : vector<16x32xbf16>, vector<32x128xbf16>, vector<16x128xf32> -> vector<16x128xf32>
    %158 = arith.addf %130, %157 : vector<16x128xf32>
    %159 = vector.shape_cast %6 : vector<128xf32> to vector<1x128xf32>
    %160 = vector.broadcast %159 : vector<1x128xf32> to vector<16x128xf32>
    %161 = arith.addf %158, %160 : vector<16x128xf32>
    %162 = vector.shape_cast %161 : vector<16x128xf32> to vector<1x16x128xf32>
    %163 = arith.addf %0, %162 : vector<1x16x128xf32>
    %164 = vector.shape_cast %163 : vector<1x16x128xf32> to vector<16x128xf32>
    %c0_51 = arith.constant 0 : index
    %c0_52 = arith.constant 0 : index
    %165 = vector.load %arg7[%c0_51, %c0_52] : memref<1x128xf32, #tpu.memory_space<vmem>>, vector<1x128xf32>
    %166 = vector.shape_cast %165 : vector<1x128xf32> to vector<128xf32>
    %c0_53 = arith.constant 0 : index
    %c0_54 = arith.constant 0 : index
    %167 = vector.load %arg8[%c0_53, %c0_54] : memref<1x128xf32, #tpu.memory_space<vmem>>, vector<1x128xf32>
    %168 = vector.shape_cast %167 : vector<1x128xf32> to vector<128xf32>
    %c0_55 = arith.constant 0 : index
    %c0_56 = arith.constant 0 : index
    %169 = vector.load %arg10[%c0_55, %c0_56] : memref<1x512xf32, #tpu.memory_space<vmem>>, vector<1x512xf32>
    %170 = vector.shape_cast %169 : vector<1x512xf32> to vector<512xf32>
    %c0_57 = arith.constant 0 : index
    %c0_58 = arith.constant 0 : index
    %171 = vector.load %arg12[%c0_57, %c0_58] : memref<1x128xf32, #tpu.memory_space<vmem>>, vector<1x128xf32>
    %172 = vector.shape_cast %171 : vector<1x128xf32> to vector<128xf32>
    %cst_59 = arith.constant dense<0.000000e+00> : vector<16xf32>
    %173 = vector.multi_reduction <add>, %164, %cst_59 [1] : vector<16x128xf32> to vector<16xf32>
    %174 = vector.shape_cast %173 : vector<16xf32> to vector<16x1xf32>
    %cst_60 = arith.constant 1.280000e+02 : f32
    %175 = vector.broadcast %cst_60 : f32 to vector<16x1xf32>
    %176 = arith.divf %174, %175 : vector<16x1xf32>
    %177 = vector.broadcast %176 : vector<16x1xf32> to vector<16x128xf32>
    %178 = arith.subf %164, %177 : vector<16x128xf32>
    %179 = arith.mulf %178, %178 : vector<16x128xf32>
    %cst_61 = arith.constant dense<0.000000e+00> : vector<16xf32>
    %180 = vector.multi_reduction <add>, %179, %cst_61 [1] : vector<16x128xf32> to vector<16xf32>
    %181 = vector.shape_cast %180 : vector<16xf32> to vector<16x1xf32>
    %cst_62 = arith.constant 1.280000e+02 : f32
    %182 = vector.broadcast %cst_62 : f32 to vector<16x1xf32>
    %183 = arith.divf %181, %182 : vector<16x1xf32>
    %184 = vector.broadcast %176 : vector<16x1xf32> to vector<16x128xf32>
    %185 = arith.subf %164, %184 : vector<16x128xf32>
    %cst_63 = arith.constant 9.99999974E-6 : f32
    %186 = vector.broadcast %cst_63 : f32 to vector<16x1xf32>
    %187 = arith.addf %183, %186 : vector<16x1xf32>
    %188 = math.rsqrt %187 : vector<16x1xf32>
    %189 = vector.broadcast %188 : vector<16x1xf32> to vector<16x128xf32>
    %190 = arith.mulf %185, %189 : vector<16x128xf32>
    %191 = vector.shape_cast %166 : vector<128xf32> to vector<1x128xf32>
    %192 = vector.broadcast %191 : vector<1x128xf32> to vector<16x128xf32>
    %193 = arith.mulf %190, %192 : vector<16x128xf32>
    %194 = vector.shape_cast %168 : vector<128xf32> to vector<1x128xf32>
    %195 = vector.broadcast %194 : vector<1x128xf32> to vector<16x128xf32>
    %196 = arith.addf %193, %195 : vector<16x128xf32>
    %197 = arith.truncf %196 : vector<16x128xf32> to vector<16x128xbf16>
    %c0_64 = arith.constant 0 : index
    %c0_65 = arith.constant 0 : index
    %198 = vector.load %arg9[%c0_64, %c0_65] : memref<128x512xbf16, #tpu.memory_space<vmem>>, vector<128x512xbf16>
    %cst_66 = arith.constant dense<0.000000e+00> : vector<16x512xf32>
    %199 = tpu.matmul %197, %198, %cst_66 {dimension_numbers = #tpu.dot_dimension_numbers<[1], [0], [0], [1], [0, 0, 1, 1], [], []>} : vector<16x128xbf16>, vector<128x512xbf16>, vector<16x512xf32> -> vector<16x512xf32>
    %200 = vector.shape_cast %170 : vector<512xf32> to vector<1x512xf32>
    %201 = vector.broadcast %200 : vector<1x512xf32> to vector<16x512xf32>
    %202 = arith.addf %199, %201 : vector<16x512xf32>
    %cst_67 = arith.constant 5.000000e-01 : f32
    %203 = vector.broadcast %cst_67 : f32 to vector<16x512xf32>
    %204 = arith.mulf %203, %202 : vector<16x512xf32>
    %cst_68 = arith.constant 0.707106769 : f32
    %205 = vector.broadcast %cst_68 : f32 to vector<16x512xf32>
    %206 = arith.mulf %202, %205 : vector<16x512xf32>
    %cst_69 = arith.constant 0.000000e+00 : f32
    %207 = vector.broadcast %cst_69 : f32 to vector<16x512xf32>
    %208 = arith.cmpf oge, %206, %207 : vector<16x512xf32>
    %cst_70 = arith.constant 1.000000e+00 : f32
    %cst_71 = arith.constant -1.000000e+00 : f32
    %209 = vector.broadcast %cst_70 : f32 to vector<16x512xf32>
    %210 = vector.broadcast %cst_71 : f32 to vector<16x512xf32>
    %211 = arith.select %208, %209, %210 : vector<16x512xi1>, vector<16x512xf32>
    %212 = math.absf %206 : vector<16x512xf32>
    %cst_72 = arith.constant 0.327591091 : f32
    %213 = vector.broadcast %cst_72 : f32 to vector<16x512xf32>
    %214 = arith.mulf %213, %212 : vector<16x512xf32>
    %cst_73 = arith.constant 1.000000e+00 : f32
    %215 = vector.broadcast %cst_73 : f32 to vector<16x512xf32>
    %216 = arith.addf %215, %214 : vector<16x512xf32>
    %cst_74 = arith.constant 1.000000e+00 : f32
    %217 = vector.broadcast %cst_74 : f32 to vector<16x512xf32>
    %218 = arith.divf %217, %216 : vector<16x512xf32>
    %cst_75 = arith.constant 1.06140542 : f32
    %219 = vector.broadcast %cst_75 : f32 to vector<16x512xf32>
    %220 = arith.mulf %219, %218 : vector<16x512xf32>
    %cst_76 = arith.constant -1.45315206 : f32
    %221 = vector.broadcast %cst_76 : f32 to vector<16x512xf32>
    %222 = arith.addf %220, %221 : vector<16x512xf32>
    %223 = arith.mulf %222, %218 : vector<16x512xf32>
    %cst_77 = arith.constant 1.42141378 : f32
    %224 = vector.broadcast %cst_77 : f32 to vector<16x512xf32>
    %225 = arith.addf %223, %224 : vector<16x512xf32>
    %226 = arith.mulf %225, %218 : vector<16x512xf32>
    %cst_78 = arith.constant -0.284496725 : f32
    %227 = vector.broadcast %cst_78 : f32 to vector<16x512xf32>
    %228 = arith.addf %226, %227 : vector<16x512xf32>
    %229 = arith.mulf %228, %218 : vector<16x512xf32>
    %cst_79 = arith.constant 0.254829586 : f32
    %230 = vector.broadcast %cst_79 : f32 to vector<16x512xf32>
    %231 = arith.addf %229, %230 : vector<16x512xf32>
    %232 = arith.mulf %231, %218 : vector<16x512xf32>
    %cst_80 = arith.constant 0.000000e+00 : f32
    %233 = vector.broadcast %cst_80 : f32 to vector<16x512xf32>
    %234 = arith.subf %233, %212 : vector<16x512xf32>
    %235 = arith.mulf %234, %212 : vector<16x512xf32>
    %236 = math.exp %235 : vector<16x512xf32>
    %237 = arith.mulf %232, %236 : vector<16x512xf32>
    %cst_81 = arith.constant 1.000000e+00 : f32
    %238 = vector.broadcast %cst_81 : f32 to vector<16x512xf32>
    %239 = arith.subf %238, %237 : vector<16x512xf32>
    %240 = arith.mulf %211, %239 : vector<16x512xf32>
    %cst_82 = arith.constant 1.000000e+00 : f32
    %241 = vector.broadcast %cst_82 : f32 to vector<16x512xf32>
    %242 = arith.addf %241, %240 : vector<16x512xf32>
    %243 = arith.mulf %204, %242 : vector<16x512xf32>
    %244 = arith.truncf %243 : vector<16x512xf32> to vector<16x512xbf16>
    %c0_83 = arith.constant 0 : index
    %c0_84 = arith.constant 0 : index
    %245 = vector.load %arg11[%c0_83, %c0_84] : memref<512x128xbf16, #tpu.memory_space<vmem>>, vector<512x128xbf16>
    %cst_85 = arith.constant dense<0.000000e+00> : vector<16x128xf32>
    %246 = tpu.matmul %244, %245, %cst_85 {dimension_numbers = #tpu.dot_dimension_numbers<[1], [0], [0], [1], [0, 0, 1, 1], [], []>} : vector<16x512xbf16>, vector<512x128xbf16>, vector<16x128xf32> -> vector<16x128xf32>
    %247 = vector.shape_cast %172 : vector<128xf32> to vector<1x128xf32>
    %248 = vector.broadcast %247 : vector<1x128xf32> to vector<16x128xf32>
    %249 = arith.addf %246, %248 : vector<16x128xf32>
    %250 = arith.addf %164, %249 : vector<16x128xf32>
    %251 = vector.shape_cast %250 : vector<16x128xf32> to vector<1x16x128xf32>
    %c0_86 = arith.constant 0 : index
    %c0_87 = arith.constant 0 : index
    %c0_88 = arith.constant 0 : index
    %252 = vector.load %arg13[%c0_86, %c0_87, %c0_88] : memref<1x16x128xf32, #tpu.memory_space<vmem>>, vector<1x16x128xf32>
    tpu.vector_store %arg13[%c0_86, %c0_87, %c0_88], %251 {strides = array<i32>} : memref<1x16x128xf32, #tpu.memory_space<vmem>>, vector<1x16x128xf32>,
    return
  }
  func.func @transform_0(%arg0: i32) -> (i32, i32, i32) {
    %c0_i32 = arith.constant 0 : i32
    %c0_i32_0 = arith.constant 0 : i32
    %c0_i32_1 = arith.constant 0 : i32
    return %arg0, %c0_i32, %c0_i32_0 : i32, i32, i32
  }
  func.func @transform_1(%arg0: i32) -> (i32, i32) {
    %c0_i32 = arith.constant 0 : i32
    %c0_i32_0 = arith.constant 0 : i32
    %c0_i32_1 = arith.constant 0 : i32
    return %c0_i32, %c0_i32_0 : i32, i32
  }
  func.func @transform_2(%arg0: i32) -> (i32, i32) {
    %c0_i32 = arith.constant 0 : i32
    %c0_i32_0 = arith.constant 0 : i32
    %c0_i32_1 = arith.constant 0 : i32
    return %c0_i32, %c0_i32_0 : i32, i32
  }
  func.func @transform_3(%arg0: i32) -> (i32, i32) {
    %c0_i32 = arith.constant 0 : i32
    %c0_i32_0 = arith.constant 0 : i32
    %c0_i32_1 = arith.constant 0 : i32
    return %c0_i32, %c0_i32_0 : i32, i32
  }
  func.func @transform_4(%arg0: i32) -> (i32, i32) {
    %c0_i32 = arith.constant 0 : i32
    %c0_i32_0 = arith.constant 0 : i32
    %c0_i32_1 = arith.constant 0 : i32
    return %c0_i32, %c0_i32_0 : i32, i32
  }
  func.func @transform_5(%arg0: i32) -> (i32, i32) {
    %c0_i32 = arith.constant 0 : i32
    %c0_i32_0 = arith.constant 0 : i32
    %c0_i32_1 = arith.constant 0 : i32
    return %c0_i32, %c0_i32_0 : i32, i32
  }
  func.func @transform_6(%arg0: i32) -> (i32, i32) {
    %c0_i32 = arith.constant 0 : i32
    %c0_i32_0 = arith.constant 0 : i32
    %c0_i32_1 = arith.constant 0 : i32
    return %c0_i32, %c0_i32_0 : i32, i32
  }
  func.func @transform_7(%arg0: i32) -> (i32, i32) {
    %c0_i32 = arith.constant 0 : i32
    %c0_i32_0 = arith.constant 0 : i32
    %c0_i32_1 = arith.constant 0 : i32
    return %c0_i32, %c0_i32_0 : i32, i32
  }
  func.func @transform_8(%arg0: i32) -> (i32, i32) {
    %c0_i32 = arith.constant 0 : i32
    %c0_i32_0 = arith.constant 0 : i32
    %c0_i32_1 = arith.constant 0 : i32
    return %c0_i32, %c0_i32_0 : i32, i32
  }
  func.func @transform_9(%arg0: i32) -> (i32, i32) {
    %c0_i32 = arith.constant 0 : i32
    %c0_i32_0 = arith.constant 0 : i32
    %c0_i32_1 = arith.constant 0 : i32
    return %c0_i32, %c0_i32_0 : i32, i32
  }
  func.func @transform_10(%arg0: i32) -> (i32, i32) {
    %c0_i32 = arith.constant 0 : i32
    %c0_i32_0 = arith.constant 0 : i32
    %c0_i32_1 = arith.constant 0 : i32
    return %c0_i32, %c0_i32_0 : i32, i32
  }
  func.func @transform_11(%arg0: i32) -> (i32, i32) {
    %c0_i32 = arith.constant 0 : i32
    %c0_i32_0 = arith.constant 0 : i32
    %c0_i32_1 = arith.constant 0 : i32
    return %c0_i32, %c0_i32_0 : i32, i32
  }
  func.func @transform_12(%arg0: i32) -> (i32, i32, i32) {
    %c0_i32 = arith.constant 0 : i32
    %c0_i32_0 = arith.constant 0 : i32
    %c0_i32_1 = arith.constant 0 : i32
    return %arg0, %c0_i32, %c0_i32_0 : i32, i32, i32
  }
}

</mosaic_0001>

<llo_original>
// kernel: tiered_transformer_encoder_layer.2
$region0: #{tiered_transformer_encoder_layer.2}
  #allocation0 [shape = 'u32[]', space=smem, size = 0x4, offset = 0x4, fixed_abs, tag = 'smem constant byte address 0x4 - core index']
  #allocation1 [shape = 'u32[144,128]{1,0:T(1,128)}', space=vmem, size = 0x12000, scoped, tag = 'internal scratch']
  %s0 = inlined_call_operand.hbm [shape: f32[4,8,128], index: 0, kind: input, shape index: {}]
  %s1 = inlined_call_operand.hbm [shape: f32[1,128], index: 1, kind: input, shape index: {}]
  %s2 = inlined_call_operand.hbm [shape: f32[1,128], index: 2, kind: input, shape index: {}]
  %s3 = inlined_call_operand.hbm [shape: bf16[128,384], index: 3, kind: input, shape index: {}]
  %s4 = inlined_call_operand.hbm [shape: bf16[128,128], index: 4, kind: input, shape index: {}]
  %s5 = inlined_call_operand.hbm [shape: f32[1,128], index: 5, kind: input, shape index: {}]
  %s6 = inlined_call_operand.vmem [shape: f32[4,8,128], index: 6, kind: output, shape index: {}]
  %s7 = sld [smem:[#allocation0]]
  $region81: #{tiered_transformer_encoder_layer.2} parent=0
    _
  %s9 = ssub.s32 1, %s7
  %s10 = scalar_select 0, %s9, %s7
  $region1: #{tiered_transformer_encoder_layer.2} parent=0
    #allocation2 [shape = 'u8[16384]{0}', space=vmem, size = 0x4000, scoped, tag = 'input window, operand 0']
    #allocation3 [shape = 's32[2]{0}', space=sflag, size = 0x8, scoped, tag = 'scoped memory for tiered_transformer_encoder_layer.2']
    #allocation4 [shape = 'u8[512]{0}', space=vmem, size = 0x400, scoped, tag = 'input window, operand 1, single buffered']
    #allocation5 [shape = 's32[1]{0}', space=sflag, size = 0x4, scoped, tag = 'scoped memory for tiered_transformer_encoder_layer.2']
    #allocation6 [shape = 'u8[512]{0}', space=vmem, size = 0x400, scoped, tag = 'input window, operand 2, single buffered']
    #allocation7 [shape = 'u8[98304]{0}', space=vmem, size = 0x18000, scoped, tag = 'input window, operand 3, single buffered']
    #allocation8 [shape = 's32[1]{0}', space=sflag, size = 0x4, scoped, tag = 'scoped memory for tiered_transformer_encoder_layer.2']
    #allocation9 [shape = 'u8[32768]{0}', space=vmem, size = 0x8000, scoped, tag = 'input window, operand 4, single buffered']
    #allocation10 [shape = 'u8[512]{0}', space=vmem, size = 0x400, scoped, tag = 'input window, operand 5, single buffered']
    #allocation11 [shape = 's32[1]{0}', space=sflag, size = 0x4, scoped, tag = 'scoped memory for tiered_transformer_encoder_layer.2']
    %11 = vsyncpa [#allocation3], 0
    %s12 = scalar_lea.sflag [#allocation3], 1
    %13 = vsyncpa %s12, 0
    %14 = vsyncpa [#allocation5], 0
    %15 = vsyncpa [#allocation8], 0
    %16 = vsyncpa [#allocation11], 0
    loop: start=0, step=1, limit=4
    $region2: #{tiered_transformer_encoder_layer.2} parent=1 // loop_pre_header
      _
    $region3: #{tiered_transformer_encoder_layer.2} parent=1 // loop_header
      %s18 = sphi 0, %s22
      %p19 = scmp.ge.s32.totalorder %s18, 4
      %s28 = sphi 0, %s30
      %s31 = sphi 0, %s28
      %s32 = sphi 0, %s31
      %s48 = sphi 0, %s32
      %s52 = sphi 0, %s52
      %s54 = sphi 0, %s52
      %s55 = sphi 0, %s54
      %s69 = sphi 0, %s55
      %s73 = sphi 0, %s73
      %s75 = sphi 0, %s73
      %s76 = sphi 0, %s75
      %s90 = sphi 0, %s76
      %s94 = sphi 0, %s94
      %s96 = sphi 0, %s94
      %s97 = sphi 0, %s96
      %s111 = sphi 0, %s97
      %s115 = sphi 0, %s115
      %s117 = sphi 0, %s115
      %s118 = sphi 0, %s117
      %s132 = sphi 0, %s118
      %s136 = sphi 0, %s136
      %s138 = sphi 0, %s136
      %s139 = sphi 0, %s138
      %s153 = sphi 0, %s139
      %s159 = sphi 0, %s161
      %s162 = sphi 0, %s159
      %s163 = sphi 0, %s162
      %s179 = sphi 0, %s163
    $region4: #{tiered_transformer_encoder_layer.2} parent=1 // loop_header_branch
      %21 = sbr.rel (%p19) target = $region8
    $region5: #{tiered_transformer_encoder_layer.2} parent=1 // loop_body
      %s23 = ssub.s32 %s18, 1
      %s24 = ssub.s32 %s18, 2
      %s25 = sadd.s32 %s18, 1
      %s26 = ssub.s32 %s18, %s25
      %p27 = scmp.eq.s32.totalorder %s26, 0
      %s29 = sadd.s32 %s28, 1
      %s30 = scalar_select %p27, %s28, %s29
      %p33 = pneg %p27
      %p34 = scmp.eq.s32.totalorder %s18, 1
      %p35 = por %p33, %p34
      %p36 = scmp.ne.s32.totalorder %s28, %s31
      %p37 = scmp.eq.s32.totalorder %s18, 0
      %p38 = por %p36, %p37
      %p39 = scmp.ne.s32.totalorder %s28, %s31
      %p40 = scmp.eq.s32.totalorder %s23, 1
      %p41 = por %p39, %p40
      %p42 = scmp.ne.s32.totalorder %s31, %s32
      %p43 = scmp.eq.s32.totalorder %s23, 0
      %p44 = por %p42, %p43
      %p45 = scmp.ne.s32.totalorder %s31, %s32
      %p46 = scmp.eq.s32.totalorder %s24, 1
      %p47 = por %p45, %p46
      %p49 = scmp.ne.s32.totalorder %s32, %s48
      %p50 = scmp.eq.s32.totalorder %s24, 0
      %p51 = por %p49, %p50
      %s53 = sadd.s32 %s52, 1
      %p56 = scmp.eq.s32.totalorder %s18, 1
      %p57 = scmp.ne.s32.totalorder %s52, %s54
      %p58 = scmp.eq.s32.totalorder %s18, 0
      %p59 = por %p57, %p58
      %p60 = scmp.ne.s32.totalorder %s52, %s54
      %p61 = scmp.eq.s32.totalorder %s23, 1
      %p62 = por %p60, %p61
      %p63 = scmp.ne.s32.totalorder %s54, %s55
      %p64 = scmp.eq.s32.totalorder %s23, 0
      %p65 = por %p63, %p64
      %p66 = scmp.ne.s32.totalorder %s54, %s55
      %p67 = scmp.eq.s32.totalorder %s24, 1
      %p68 = por %p66, %p67
      %p70 = scmp.ne.s32.totalorder %s55, %s69
      %p71 = scmp.eq.s32.totalorder %s24, 0
      %p72 = por %p70, %p71
      %s74 = sadd.s32 %s73, 1
      %p77 = scmp.eq.s32.totalorder %s18, 1
      %p78 = scmp.ne.s32.totalorder %s73, %s75
      %p79 = scmp.eq.s32.totalorder %s18, 0
      %p80 = por %p78, %p79
      %p81 = scmp.ne.s32.totalorder %s73, %s75
      %p82 = scmp.eq.s32.totalorder %s23, 1
      %p83 = por %p81, %p82
      %p84 = scmp.ne.s32.totalorder %s75, %s76
      %p85 = scmp.eq.s32.totalorder %s23, 0
      %p86 = por %p84, %p85
      %p87 = scmp.ne.s32.totalorder %s75, %s76
      %p88 = scmp.eq.s32.totalorder %s24, 1
      %p89 = por %p87, %p88
      %p91 = scmp.ne.s32.totalorder %s76, %s90
      %p92 = scmp.eq.s32.totalorder %s24, 0
      %p93 = por %p91, %p92
      %s95 = sadd.s32 %s94, 1
      %p98 = scmp.eq.s32.totalorder %s18, 1
      %p99 = scmp.ne.s32.totalorder %s94, %s96
      %p100 = scmp.eq.s32.totalorder %s18, 0
      %p101 = por %p99, %p100
      %p102 = scmp.ne.s32.totalorder %s94, %s96
      %p103 = scmp.eq.s32.totalorder %s23, 1
      %p104 = por %p102, %p103
      %p105 = scmp.ne.s32.totalorder %s96, %s97
      %p106 = scmp.eq.s32.totalorder %s23, 0
      %p107 = por %p105, %p106
      %p108 = scmp.ne.s32.totalorder %s96, %s97
      %p109 = scmp.eq.s32.totalorder %s24, 1
      %p110 = por %p108, %p109
      %p112 = scmp.ne.s32.totalorder %s97, %s111
      %p113 = scmp.eq.s32.totalorder %s24, 0
      %p114 = por %p112, %p113
      %s116 = sadd.s32 %s115, 1
      %p119 = scmp.eq.s32.totalorder %s18, 1
      %p120 = scmp.ne.s32.totalorder %s115, %s117
      %p121 = scmp.eq.s32.totalorder %s18, 0
      %p122 = por %p120, %p121
      %p123 = scmp.ne.s32.totalorder %s115, %s117
      %p124 = scmp.eq.s32.totalorder %s23, 1
      %p125 = por %p123, %p124
      %p126 = scmp.ne.s32.totalorder %s117, %s118
      %p127 = scmp.eq.s32.totalorder %s23, 0
      %p128 = por %p126, %p127
      %p129 = scmp.ne.s32.totalorder %s117, %s118
      %p130 = scmp.eq.s32.totalorder %s24, 1
      %p131 = por %p129, %p130
      %p133 = scmp.ne.s32.totalorder %s118, %s132
      %p134 = scmp.eq.s32.totalorder %s24, 0
      %p135 = por %p133, %p134
      %s137 = sadd.s32 %s136, 1
      %p140 = scmp.eq.s32.totalorder %s18, 1
      %p141 = scmp.ne.s32.totalorder %s136, %s138
      %p142 = scmp.eq.s32.totalorder %s18, 0
      %p143 = por %p141, %p142
      %p144 = scmp.ne.s32.totalorder %s136, %s138
      %p145 = scmp.eq.s32.totalorder %s23, 1
      %p146 = por %p144, %p145
      %p147 = scmp.ne.s32.totalorder %s138, %s139
      %p148 = scmp.eq.s32.totalorder %s23, 0
      %p149 = por %p147, %p148
      %p150 = scmp.ne.s32.totalorder %s138, %s139
      %p151 = scmp.eq.s32.totalorder %s24, 1
      %p152 = por %p150, %p151
      %p154 = scmp.ne.s32.totalorder %s139, %s153
      %p155 = scmp.eq.s32.totalorder %s24, 0
      %p156 = por %p154, %p155
      %s157 = ssub.s32 %s18, %s25
      %p158 = scmp.eq.s32.totalorder %s157, 0
      %s160 = sadd.s32 %s159, 1
      %s161 = scalar_select %p158, %s159, %s160
      %p164 = pneg %p158
      %p165 = scmp.eq.s32.totalorder %s18, 1
      %p166 = por %p164, %p165
      %p167 = scmp.ne.s32.totalorder %s159, %s162
      %p168 = scmp.eq.s32.totalorder %s18, 0
      %p169 = por %p167, %p168
      %p170 = scmp.ne.s32.totalorder %s159, %s162
      %p171 = scmp.eq.s32.totalorder %s23, 1
      %p172 = por %p170, %p171
      %p173 = scmp.ne.s32.totalorder %s162, %s163
      %p174 = scmp.eq.s32.totalorder %s23, 0
      %p175 = por %p173, %p174
      %p176 = scmp.ne.s32.totalorder %s162, %s163
      %p177 = scmp.eq.s32.totalorder %s24, 1
      %p178 = por %p176, %p177
      %p180 = scmp.ne.s32.totalorder %s163, %s179
      %p181 = scmp.eq.s32.totalorder %s24, 0
      %p182 = por %p180, %p181
      %p183 = scmp.le.s32.totalorder 1, %s18
      %p184 = scmp.lt.s32.totalorder %s18, 3
      %p185 = pnand %p183, %p184
      %p186 = pneg %p185
      // Predicated region
      $region9: #{tiered_transformer_encoder_layer.2} parent=5 // pred_check
        _
      $region10: #{tiered_transformer_encoder_layer.2} parent=5 // pred_check_branch
        %188 = sbr.rel (%p185) target = $region12
      $region11: #{tiered_transformer_encoder_layer.2} parent=5 // pred_region
        %s189 = ssub.s32 %s18, 1
        // Predicated region
        $region13: #{tiered_transformer_encoder_layer.2} parent=11 // pred_check
          %p190 = pneg %p65
        $region14: #{tiered_transformer_encoder_layer.2} parent=11 // pred_check_branch
          %192 = sbr.rel (%p190) target = $region16
        $region15: #{tiered_transformer_encoder_layer.2} parent=11 // pred_region
          %s194 = ssub.s32 16, 16
          %195 = vsyncadd [#allocation5], %s194
          %s197 = sshll.u32 [#allocation4], 4
          %s198 = int_to_ptr.vmem [resolvable:$true] %s197
          %200 = dma.hbm_to_vmem [thread:$0]  %s1, 16, %s198, [#allocation5]
        $region16: #{tiered_transformer_encoder_layer.2} parent=11 // pred_fallthru
          _
        // Predicated region
        $region17: #{tiered_transformer_encoder_layer.2} parent=11 // pred_check
          %p201 = pneg %p86
        $region18: #{tiered_transformer_encoder_layer.2} parent=11 // pred_check_branch
          %203 = sbr.rel (%p201) target = $region20
        $region19: #{tiered_transformer_encoder_layer.2} parent=11 // pred_region
          %s205 = ssub.s32 16, 16
          %206 = vsyncadd [#allocation5], %s205
          %s208 = sshll.u32 [#allocation6], 4
          %s209 = int_to_ptr.vmem [resolvable:$true] %s208
          %211 = dma.hbm_to_vmem [thread:$0]  %s2, 16, %s209, [#allocation5]
        $region20: #{tiered_transformer_encoder_layer.2} parent=11 // pred_fallthru
          _
        // Predicated region
        $region21: #{tiered_transformer_encoder_layer.2} parent=11 // pred_check
          %p212 = pneg %p107
        $region22: #{tiered_transformer_encoder_layer.2} parent=11 // pred_check_branch
          %214 = sbr.rel (%p212) target = $region24
        $region23: #{tiered_transformer_encoder_layer.2} parent=11 // pred_region
          %s216 = ssub.s32 3072, 3072
          %217 = vsyncadd [#allocation8], %s216
          %s218 = sshll.u32 [#allocation7], 4
          %s219 = int_to_ptr.vmem [resolvable:$true] %s218
          %224 = dma.hbm_to_vmem [thread:$0]  %s3, 3072, %s219, [#allocation8], 192, 192, 12
        $region24: #{tiered_transformer_encoder_layer.2} parent=11 // pred_fallthru
          _
        // Predicated region
        $region25: #{tiered_transformer_encoder_layer.2} parent=11 // pred_check
          %p225 = pneg %p128
        $region26: #{tiered_transformer_encoder_layer.2} parent=11 // pred_check_branch
          %227 = sbr.rel (%p225) target = $region28
        $region27: #{tiered_transformer_encoder_layer.2} parent=11 // pred_region
          %s229 = ssub.s32 1024, 1024
          %230 = vsyncadd [#allocation8], %s229
          %s231 = sshll.u32 [#allocation9], 4
          %s232 = int_to_ptr.vmem [resolvable:$true] %s231
          %237 = dma.hbm_to_vmem [thread:$0]  %s4, 1024, %s232, [#allocation8], 64, 64, 4
        $region28: #{tiered_transformer_encoder_layer.2} parent=11 // pred_fallthru
          _
        // Predicated region
        $region29: #{tiered_transformer_encoder_layer.2} parent=11 // pred_check
          %p238 = pneg %p149
        $region30: #{tiered_transformer_encoder_layer.2} parent=11 // pred_check_branch
          %240 = sbr.rel (%p238) target = $region32
        $region31: #{tiered_transformer_encoder_layer.2} parent=11 // pred_region
          %s242 = ssub.s32 16, 16
          %243 = vsyncadd [#allocation11], %s242
          %s245 = sshll.u32 [#allocation10], 4
          %s246 = int_to_ptr.vmem [resolvable:$true] %s245
          %248 = dma.hbm_to_vmem [thread:$0]  %s5, 16, %s246, [#allocation11]
        $region32: #{tiered_transformer_encoder_layer.2} parent=11 // pred_fallthru
          _
      $region12: #{tiered_transformer_encoder_layer.2} parent=5 // pred_fallthru
        _
      %p249 = scmp.lt.s32.totalorder %s18, 2
      // Predicated region
      $region33: #{tiered_transformer_encoder_layer.2} parent=5 // pred_check
        %p250 = pneg %p249
      $region34: #{tiered_transformer_encoder_layer.2} parent=5 // pred_check_branch
        %252 = sbr.rel (%p250) target = $region36
      $region35: #{tiered_transformer_encoder_layer.2} parent=5 // pred_region
        // Predicated region
        $region37: #{tiered_transformer_encoder_layer.2} parent=35 // pred_check
          %p253 = pneg %p38
        $region38: #{tiered_transformer_encoder_layer.2} parent=35 // pred_check_branch
          %255 = sbr.rel (%p253) target = $region40
        $region39: #{tiered_transformer_encoder_layer.2} parent=35 // pred_region
          %s256 = sand.u32 %s28, 1
          %s257 = scalar_lea.sflag [#allocation3], %s256
          %s258 = sand.u32 %s28, 1
          %s259 = smul.addr %s258, 16
          %s260 = scalar_lea.vmem [#allocation2], %s259
          %s261 = smul.u32 2, %s18
          %s263 = ssub.s32 256, 256
          %264 = vsyncadd %s257, %s263
          %s265 = smul.addr %s261, 128
          %s266 = scalar_lea.hbm %s0, %s265
          %s267 = sshll.u32 %s260, 4
          %s268 = int_to_ptr.vmem [resolvable:$true] %s267
          %273 = dma.hbm_to_vmem [thread:$0]  %s266, 256, %s268, %s257, 128, 128, 8
        $region40: #{tiered_transformer_encoder_layer.2} parent=35 // pred_fallthru
          _
      $region36: #{tiered_transformer_encoder_layer.2} parent=5 // pred_fallthru
        _
      %p274 = scmp.le.s32.totalorder 1, %s18
      %p275 = scmp.lt.s32.totalorder %s18, 3
      %p276 = pnand %p274, %p275
      %p277 = pneg %p276
      // Predicated region
      $region41: #{tiered_transformer_encoder_layer.2} parent=5 // pred_check
        _
      $region42: #{tiered_transformer_encoder_layer.2} parent=5 // pred_check_branch
        %279 = sbr.rel (%p276) target = $region44
      $region43: #{tiered_transformer_encoder_layer.2} parent=5 // pred_region
        %s280 = ssub.s32 %s18, 1
        %s281 = sand.u32 %s31, 1
        %s282 = scalar_lea.sflag [#allocation3], %s281
        %s283 = sand.u32 %s31, 1
        %s284 = smul.addr %s283, 16
        %s285 = scalar_lea.vmem [#allocation2], %s284
        // Predicated region
        $region45: #{tiered_transformer_encoder_layer.2} parent=43 // pred_check
          %p286 = pneg %p44
        $region46: #{tiered_transformer_encoder_layer.2} parent=43 // pred_check_branch
          %288 = sbr.rel (%p286) target = $region48
        $region47: #{tiered_transformer_encoder_layer.2} parent=43 // pred_region
          %289 = dma.done %s282, 256
        $region48: #{tiered_transformer_encoder_layer.2} parent=43 // pred_fallthru
          _
        // Predicated region
        $region49: #{tiered_transformer_encoder_layer.2} parent=43 // pred_check
          %p290 = pneg %p65
        $region50: #{tiered_transformer_encoder_layer.2} parent=43 // pred_check_branch
          %292 = sbr.rel (%p290) target = $region52
        $region51: #{tiered_transformer_encoder_layer.2} parent=43 // pred_region
          %293 = dma.done [#allocation5], 16
        $region52: #{tiered_transformer_encoder_layer.2} parent=43 // pred_fallthru
          _
        // Predicated region
        $region53: #{tiered_transformer_encoder_layer.2} parent=43 // pred_check
          %p294 = pneg %p86
        $region54: #{tiered_transformer_encoder_layer.2} parent=43 // pred_check_branch
          %296 = sbr.rel (%p294) target = $region56
        $region55: #{tiered_transformer_encoder_layer.2} parent=43 // pred_region
          %297 = dma.done [#allocation5], 16
        $region56: #{tiered_transformer_encoder_layer.2} parent=43 // pred_fallthru
          _
        // Predicated region
        $region57: #{tiered_transformer_encoder_layer.2} parent=43 // pred_check
          %p298 = pneg %p107
        $region58: #{tiered_transformer_encoder_layer.2} parent=43 // pred_check_branch
          %300 = sbr.rel (%p298) target = $region60
        $region59: #{tiered_transformer_encoder_layer.2} parent=43 // pred_region
          %301 = dma.done [#allocation8], 3072
        $region60: #{tiered_transformer_encoder_layer.2} parent=43 // pred_fallthru
          _
        // Predicated region
        $region61: #{tiered_transformer_encoder_layer.2} parent=43 // pred_check
          %p302 = pneg %p128
        $region62: #{tiered_transformer_encoder_layer.2} parent=43 // pred_check_branch
          %304 = sbr.rel (%p302) target = $region64
        $region63: #{tiered_transformer_encoder_layer.2} parent=43 // pred_region
          %305 = dma.done [#allocation8], 1024
        $region64: #{tiered_transformer_encoder_layer.2} parent=43 // pred_fallthru
          _
        // Predicated region
        $region65: #{tiered_transformer_encoder_layer.2} parent=43 // pred_check
          %p306 = pneg %p149
        $region66: #{tiered_transformer_encoder_layer.2} parent=43 // pred_check_branch
          %308 = sbr.rel (%p306) target = $region68
        $region67: #{tiered_transformer_encoder_layer.2} parent=43 // pred_region
          %309 = dma.done [#allocation11], 16
        $region68: #{tiered_transformer_encoder_layer.2} parent=43 // pred_fallthru
          _
        %s310 = sand.u32 %s31, 1
        %s311 = scalar_lea.sflag [#allocation3], %s310
        %s312 = sand.u32 %s31, 1
        %s313 = smul.addr %s312, 16
        %s314 = scalar_lea.vmem [#allocation2], %s313
        %p315 = pneg %p44
        %p316 = pneg %p41
        %p317 = pneg %p65
        %p318 = pneg %p62
        %p319 = pneg %p86
        %p320 = pneg %p83
        %p321 = pneg %p107
        %p322 = pneg %p104
        %p323 = pneg %p128
        %p324 = pneg %p125
        %p325 = pneg %p149
        %p326 = pneg %p146
        %p327 = pneg %p175
        %p328 = pneg %p172
        %s329 = smul.u32 2, %s23
        %p330 = scmp.lt.s32.totalorder %s329, 3
        %s331 = scalar_select %p330, %s329, 3
        %s332 = smul.addr %s331, 8
        %s333 = scalar_lea.vmem %s6, %s332
        %s334 = smul.u32 2, %s23
        %s335 = smul.u32 2, %s23
        %p336 = scmp.lt.s32.totalorder %s335, 3
        %s337 = scalar_select %p336, %s335, 3
        %s338 = smul.addr %s337, 8
        %s339 = scalar_lea.vmem %s6, %s338
        %s340 = smul.u32 2, %s23
        %v342 = vld [vmem:[%s285] sm:$0xff]
        %v343 = vld [vmem:[%s285 + $0x8] sm:$0xff]
        %v344 = vld [vmem:[#allocation4] sm:$0x1]
        %v345 = vld [vmem:[#allocation6] sm:$0x1]
        %v346 = vld [vmem:[#allocation10] sm:$0x1]
        %347 = vadd.xlane.f32.xlu0 %v342
        %v348 = vpop.xlane.xlu0 %347
        %349 = vadd.xlane.f32.xlu0 %v343
        %v350 = vpop.xlane.xlu0 %349
        %v351 = vrcp.pop 128.0
        %v352 = vmul.f32 %v348, %v351
        %v353 = vmul.f32 %v350, %v351
        %v354 = vsub.f32 %v342, %v352
        %v355 = vsub.f32 %v343, %v353
        %v356 = vmul.f32 %v354, %v354
        %v357 = vmul.f32 %v355, %v355
        %358 = vadd.xlane.f32.xlu0 %v356
        %v359 = vpop.xlane.xlu0 %358
        %360 = vadd.xlane.f32.xlu0 %v357
        %v361 = vpop.xlane.xlu0 %360
        %v362 = vmul.f32 %v359, %v351
        %v363 = vmul.f32 %v361, %v351
        %v364 = vadd.f32 %v362, 1e-05
        %v365 = vadd.f32 %v363, 1e-05
        %v366 = vrsqrt.pop %v364
        %v367 = vrsqrt.pop %v365
        %v368 = vmul.f32 %v354, %v366
        %v369 = vmul.f32 %v355, %v367
        %v371 = vlaneseq
        %v372 = vshrl.u32 %v371, 7
        %v373 = vsub.s32 0, %v372
        %v374 = vrot.slane %v344, %v373
        %v376 = vmul.f32 %v368, %v374
        %v377 = vmul.f32 %v369, %v374
        %v379 = vlaneseq
        %v380 = vshrl.u32 %v379, 7
        %v381 = vsub.s32 0, %v380
        %v382 = vrot.slane %v345, %v381
        %v384 = vadd.f32 %v376, %v382
        %v385 = vadd.f32 %v377, %v382
        %v386 = vpack.c.bf16 %v385, %v384
        %v387 = vld [vmem:[#allocation7] sm:$0xff]
        %v388 = vld [vmem:[#allocation7 + $0x8] sm:$0xf]
        %v389 = vld [vmem:[#allocation7 + $0xc] sm:$0xff]
        %v390 = vld [vmem:[#allocation7 + $0x14] sm:$0xf]
        %v391 = vld [vmem:[#allocation7 + $0x18] sm:$0xff]
        %v392 = vld [vmem:[#allocation7 + $0x20] sm:$0xf]
        %v393 = vld [vmem:[#allocation7 + $0x24] sm:$0xff]
        %v394 = vld [vmem:[#allocation7 + $0x2c] sm:$0xf]
        %v395 = vld [vmem:[#allocation7 + $0x30] sm:$0xff]
        %v396 = vld [vmem:[#allocation7 + $0x38] sm:$0xf]
        %v397 = vld [vmem:[#allocation7 + $0x3c] sm:$0xff]
        %v398 = vld [vmem:[#allocation7 + $0x44] sm:$0xf]
        %v399 = vld [vmem:[#allocation7 + $0x48] sm:$0xff]
        %v400 = vld [vmem:[#allocation7 + $0x50] sm:$0xf]
        %v401 = vld [vmem:[#allocation7 + $0x54] sm:$0xff]
        %v402 = vld [vmem:[#allocation7 + $0x5c] sm:$0xf]
        %v403 = vld [vmem:[#allocation7 + $0x60] sm:$0xff]
        %v404 = vld [vmem:[#allocation7 + $0x68] sm:$0xf]
        %v405 = vld [vmem:[#allocation7 + $0x6c] sm:$0xff]
        %v406 = vld [vmem:[#allocation7 + $0x74] sm:$0xf]
        %v407 = vld [vmem:[#allocation7 + $0x78] sm:$0xff]
        %v408 = vld [vmem:[#allocation7 + $0x80] sm:$0xf]
        %v409 = vld [vmem:[#allocation7 + $0x84] sm:$0xff]
        %v410 = vld [vmem:[#allocation7 + $0x8c] sm:$0xf]
        %v411 = vld [vmem:[#allocation7 + $0x90] sm:$0xff]
        %v412 = vld [vmem:[#allocation7 + $0x98] sm:$0xf]
        %v413 = vld [vmem:[#allocation7 + $0x9c] sm:$0xff]
        %v414 = vld [vmem:[#allocation7 + $0xa4] sm:$0xf]
        %v415 = vld [vmem:[#allocation7 + $0xa8] sm:$0xff]
        %v416 = vld [vmem:[#allocation7 + $0xb0] sm:$0xf]
        %v417 = vld [vmem:[#allocation7 + $0xb4] sm:$0xff]
        %v418 = vld [vmem:[#allocation7 + $0xbc] sm:$0xf]
        %v451 = vunpack.c.l.b16 %v387
        %v452 = vunpack.c.h.b16 %v387
        %v453 = vunpack.c.l.b16 %v388
        %v454 = vunpack.c.l.b16 %v389
        %v455 = vunpack.c.h.b16 %v389
        %v456 = vunpack.c.l.b16 %v390
        %v457 = vunpack.c.l.b16 %v391
        %v458 = vunpack.c.h.b16 %v391
        %v459 = vunpack.c.l.b16 %v392
        %v460 = vunpack.c.l.b16 %v393
        %v461 = vunpack.c.h.b16 %v393
        %v462 = vunpack.c.l.b16 %v394
        %v463 = vunpack.c.l.b16 %v395
        %v464 = vunpack.c.h.b16 %v395
        %v465 = vunpack.c.l.b16 %v396
        %v466 = vunpack.c.l.b16 %v397
        %v467 = vunpack.c.h.b16 %v397
        %v468 = vunpack.c.l.b16 %v398
        %v469 = vunpack.c.l.b16 %v399
        %v470 = vunpack.c.h.b16 %v399
        %v471 = vunpack.c.l.b16 %v400
        %v472 = vunpack.c.l.b16 %v401
        %v473 = vunpack.c.h.b16 %v401
        %v474 = vunpack.c.l.b16 %v402
        %v475 = vunpack.c.l.b16 %v403
        %v476 = vunpack.c.h.b16 %v403
        %v477 = vunpack.c.l.b16 %v404
        %v478 = vunpack.c.l.b16 %v405
        %v479 = vunpack.c.h.b16 %v405
        %v480 = vunpack.c.l.b16 %v406
        %v481 = vunpack.c.l.b16 %v407
        %v482 = vunpack.c.h.b16 %v407
        %v483 = vunpack.c.l.b16 %v408
        %v484 = vunpack.c.l.b16 %v409
        %v485 = vunpack.c.h.b16 %v409
        %v486 = vunpack.c.l.b16 %v410
        %v487 = vunpack.c.l.b16 %v411
        %v488 = vunpack.c.h.b16 %v411
        %v489 = vunpack.c.l.b16 %v412
        %v490 = vunpack.c.l.b16 %v413
        %v491 = vunpack.c.h.b16 %v413
        %v492 = vunpack.c.l.b16 %v414
        %v493 = vunpack.c.l.b16 %v415
        %v494 = vunpack.c.h.b16 %v415
        %v495 = vunpack.c.l.b16 %v416
        %v496 = vunpack.c.l.b16 %v417
        %v497 = vunpack.c.h.b16 %v417
        %v498 = vunpack.c.l.b16 %v418
        %v499 = vpack.c.b16 %v454, %v451
        %v500 = vpack.c.b16 %v455, %v452
        %v501 = vpack.c.b16 %v456, %v453
        %v502 = vpack.c.b16 %v460, %v457
        %v503 = vpack.c.b16 %v461, %v458
        %v504 = vpack.c.b16 %v462, %v459
        %v505 = vpack.c.b16 %v466, %v463
        %v506 = vpack.c.b16 %v467, %v464
        %v507 = vpack.c.b16 %v468, %v465
        %v508 = vpack.c.b16 %v472, %v469
        %v509 = vpack.c.b16 %v473, %v470
        %v510 = vpack.c.b16 %v474, %v471
        %v511 = vpack.c.b16 %v478, %v475
        %v512 = vpack.c.b16 %v479, %v476
        %v513 = vpack.c.b16 %v480, %v477
        %v514 = vpack.c.b16 %v484, %v481
        %v515 = vpack.c.b16 %v485, %v482
        %v516 = vpack.c.b16 %v486, %v483
        %v517 = vpack.c.b16 %v490, %v487
        %v518 = vpack.c.b16 %v491, %v488
        %v519 = vpack.c.b16 %v492, %v489
        %v520 = vpack.c.b16 %v496, %v493
        %v521 = vpack.c.b16 %v497, %v494
        %v522 = vpack.c.b16 %v498, %v495
        %547 = vmatprep.subr.bf16.mxu0 %v521
        %548 = vmatpush1.bf16.msra.mxu0 %v520
        %549 = vmatprep.subr.bf16.mxu0 %v518
        %550 = vmatpush1.bf16.msra.mxu0 %v517
        %551 = vmatprep.subr.bf16.mxu0 %v515
        %552 = vmatpush1.bf16.msra.mxu0 %v514
        %553 = vmatprep.subr.bf16.mxu0 %v512
        %554 = vmatpush1.bf16.msra.mxu0 %v511
        %555 = vmatprep.subr.bf16.mxu0 %v509
        %556 = vmatpush1.bf16.msra.mxu0 %v508
        %557 = vmatprep.subr.bf16.mxu0 %v506
        %558 = vmatpush1.bf16.msra.mxu0 %v505
        %559 = vmatprep.subr.bf16.mxu0 %v503
        %560 = vmatpush1.bf16.msra.mxu0 %v502
        %561 = vmatprep.subr.bf16.mxu0 %v500
        %562 = vmatpush1.bf16.msra.mxu0 %v499
        %563 = vmatprep.subr.bf16.mxu0 0
        %564 = vmatpush2.bf16.msra.mxu0 0
        %565 = vmatprep.subr.bf16.mxu0 0
        %566 = vmatpush2.bf16.msra.mxu0 0
        %567 = vmatprep.subr.bf16.mxu0 0
        %568 = vmatpush2.bf16.msra.mxu0 0
        %569 = vmatprep.subr.bf16.mxu0 0
        %570 = vmatpush2.bf16.msra.mxu0 0
        %571 = vmatprep.subr.bf16.mxu0 0
        %572 = vmatpush2.bf16.msra.mxu0 0
        %573 = vmatprep.subr.bf16.mxu0 0
        %574 = vmatpush2.bf16.msra.mxu0 0
        %575 = vmatprep.subr.bf16.mxu0 0
        %576 = vmatpush2.bf16.msra.mxu0 0
        %577 = vmatprep.subr.bf16.mxu0 0
        %578 = vmatpush2.bf16.msra.mxu0 0
        %579 = vmatprep.mubr.bf16.mxu0 0
        %580 = vmatmul.mubr.bf16.gmra.mxu0 %v386
        %v581 = vpop.f32.mrf.mxu0
        %v582 = vadd.f32 0.0, %v581
        %v583 = vpop.f32.mrf.mxu0
        %v584 = vadd.f32 0.0, %v583
        %v585 = vpop.f32.mrf.mxu0
        %v586 = vadd.f32 0.0, %v585
        %v587 = vpop.f32.mrf.mxu0
        %v588 = vadd.f32 0.0, %v587
        %589 = vdwg.mxu0
        %590 = vmatprep.subr.bf16.mxu0 0
        %591 = vmatpush1.bf16.msra.mxu0 %v522
        %592 = vmatprep.subr.bf16.mxu0 0
        %593 = vmatpush1.bf16.msra.mxu0 %v519
        %594 = vmatprep.subr.bf16.mxu0 0
        %595 = vmatpush1.bf16.msra.mxu0 %v516
        %596 = vmatprep.subr.bf16.mxu0 0
        %597 = vmatpush1.bf16.msra.mxu0 %v513
        %598 = vmatprep.subr.bf16.mxu0 0
        %599 = vmatpush1.bf16.msra.mxu0 %v510
        %600 = vmatprep.subr.bf16.mxu0 0
        %601 = vmatpush1.bf16.msra.mxu0 %v507
        %602 = vmatprep.subr.bf16.mxu0 0
        %603 = vmatpush1.bf16.msra.mxu0 %v504
        %604 = vmatprep.subr.bf16.mxu0 0
        %605 = vmatpush1.bf16.msra.mxu0 %v501
        %606 = vmatprep.subr.bf16.mxu0 0
        %607 = vmatpush2.bf16.msra.mxu0 0
        %608 = vmatprep.subr.bf16.mxu0 0
        %609 = vmatpush2.bf16.msra.mxu0 0
        %610 = vmatprep.subr.bf16.mxu0 0
        %611 = vmatpush2.bf16.msra.mxu0 0
        %612 = vmatprep.subr.bf16.mxu0 0
        %613 = vmatpush2.bf16.msra.mxu0 0
        %614 = vmatprep.subr.bf16.mxu0 0
        %615 = vmatpush2.bf16.msra.mxu0 0
        %616 = vmatprep.subr.bf16.mxu0 0
        %617 = vmatpush2.bf16.msra.mxu0 0
        %618 = vmatprep.subr.bf16.mxu0 0
        %619 = vmatpush2.bf16.msra.mxu0 0
        %620 = vmatprep.subr.bf16.mxu0 0
        %621 = vmatpush2.bf16.msra.mxu0 0
        %622 = vmatprep.mubr.bf16.mxu0 0
        %623 = vmatmul.mubr.bf16.gmra.mxu0 %v386
        %v624 = vpop.f32.mrf.mxu0
        %v625 = vadd.f32 0.0, %v624
        %v626 = vpop.f32.mrf.mxu0
        %v627 = vpop.f32.mrf.mxu0
        %v628 = vadd.f32 0.0, %v627
        %v629 = vpop.f32.mrf.mxu0
        %630 = vdwg.mxu0
        %v631 = vlaneseq
        %v632 = vshrl.u32 %v631, 7
        %v633 = vlaneseq
        %v634 = vand.u32 %v633, 127
        %vm635 = vcmp.le.s32.totalorder %v634, %v632
        %v636 = vsel %vm635, 0.0, -1e+30
        %v637 = vpack.c.bf16 %v582, %v582
        %v638 = vpack.c.bf16 %v586, %v586
        %v639 = vpack.c.bf16 %v584, %v584
        %v640 = vpack.c.bf16 %v588, %v588
        %v641 = vpack.c.bf16 %v625, %v625
        %v642 = vpack.c.bf16 %v628, %v628
        %vm643 = vcmask 261120
        %v645 = vsel %vm643, %v637, 0
        %v648 = vsel %vm643, %v639, 0
        %650 = vmatprep.subr.bf16.mxu0 0
        %651 = vmatpush1.bf16.xpose.msra.mxu0 0
        %652 = vmatprep.subr.bf16.mxu0 0
        %653 = vmatpush1.bf16.xpose.msra.mxu0 0
        %654 = vmatprep.subr.bf16.mxu0 0
        %655 = vmatpush1.bf16.xpose.msra.mxu0 0
        %656 = vmatprep.subr.bf16.mxu0 0
        %657 = vmatpush1.bf16.xpose.msra.mxu0 0
        %658 = vmatprep.subr.bf16.mxu0 0
        %659 = vmatpush1.bf16.xpose.msra.mxu0 0
        %660 = vmatprep.subr.bf16.mxu0 0
        %661 = vmatpush1.bf16.xpose.msra.mxu0 0
        %662 = vmatprep.subr.bf16.mxu0 0
        %663 = vmatpush1.bf16.xpose.msra.mxu0 0
        %664 = vmatprep.subr.bf16.mxu0 0
        %665 = vmatpush1.bf16.xpose.msra.mxu0 %v648
        %666 = vmatprep.subr.bf16.mxu0 0
        %667 = vmatpush2.bf16.xpose.msra.mxu0 0
        %668 = vmatprep.subr.bf16.mxu0 0
        %669 = vmatpush2.bf16.xpose.msra.mxu0 0
        %670 = vmatprep.subr.bf16.mxu0 0
        %671 = vmatpush2.bf16.xpose.msra.mxu0 0
        %672 = vmatprep.subr.bf16.mxu0 0
        %673 = vmatpush2.bf16.xpose.msra.mxu0 0
        %674 = vmatprep.subr.bf16.mxu0 0
        %675 = vmatpush2.bf16.xpose.msra.mxu0 0
        %676 = vmatprep.subr.bf16.mxu0 0
        %677 = vmatpush2.bf16.xpose.msra.mxu0 0
        %678 = vmatprep.subr.bf16.mxu0 0
        %679 = vmatpush2.bf16.xpose.msra.mxu0 0
        %680 = vmatprep.subr.bf16.mxu0 0
        %681 = vmatpush2.bf16.xpose.msra.mxu0 0
        %682 = vmatprep.mubr.bf16.mxu0 0
        %683 = vmatmul.mubr.bf16.gmra.mxu0 %v645
        %v684 = vpop.f32.mrf.mxu0
        %v685 = vadd.f32 0.0, %v684
        %v686 = vpop.f32.mrf.mxu0
        %v687 = vpop.f32.mrf.mxu0
        %v688 = vpop.f32.mrf.mxu0
        %689 = vdwg.mxu0
        %v691 = vsel %vm643, %v638, 0
        %v694 = vsel %vm643, %v640, 0
        %696 = vmatprep.subr.bf16.mxu0 0
        %697 = vmatpush1.bf16.xpose.msra.mxu0 0
        %698 = vmatprep.subr.bf16.mxu0 0
        %699 = vmatpush1.bf16.xpose.msra.mxu0 0
        %700 = vmatprep.subr.bf16.mxu0 0
        %701 = vmatpush1.bf16.xpose.msra.mxu0 0
        %702 = vmatprep.subr.bf16.mxu0 0
        %703 = vmatpush1.bf16.xpose.msra.mxu0 0
        %704 = vmatprep.subr.bf16.mxu0 0
        %705 = vmatpush1.bf16.xpose.msra.mxu0 0
        %706 = vmatprep.subr.bf16.mxu0 0
        %707 = vmatpush1.bf16.xpose.msra.mxu0 0
        %708 = vmatprep.subr.bf16.mxu0 0
        %709 = vmatpush1.bf16.xpose.msra.mxu0 0
        %710 = vmatprep.subr.bf16.mxu0 0
        %711 = vmatpush1.bf16.xpose.msra.mxu0 %v694
        %712 = vmatprep.subr.bf16.mxu0 0
        %713 = vmatpush2.bf16.xpose.msra.mxu0 0
        %714 = vmatprep.subr.bf16.mxu0 0
        %715 = vmatpush2.bf16.xpose.msra.mxu0 0
        %716 = vmatprep.subr.bf16.mxu0 0
        %717 = vmatpush2.bf16.xpose.msra.mxu0 0
        %718 = vmatprep.subr.bf16.mxu0 0
        %719 = vmatpush2.bf16.xpose.msra.mxu0 0
        %720 = vmatprep.subr.bf16.mxu0 0
        %721 = vmatpush2.bf16.xpose.msra.mxu0 0
        %722 = vmatprep.subr.bf16.mxu0 0
        %723 = vmatpush2.bf16.xpose.msra.mxu0 0
        %724 = vmatprep.subr.bf16.mxu0 0
        %725 = vmatpush2.bf16.xpose.msra.mxu0 0
        %726 = vmatprep.subr.bf16.mxu0 0
        %727 = vmatpush2.bf16.xpose.msra.mxu0 0
        %728 = vmatprep.mubr.bf16.mxu0 0
        %729 = vmatmul.mubr.bf16.gmra.mxu0 %v691
        %v730 = vpop.f32.mrf.mxu0
        %v731 = vadd.f32 0.0, %v730
        %v732 = vpop.f32.mrf.mxu0
        %v733 = vpop.f32.mrf.mxu0
        %v734 = vpop.f32.mrf.mxu0
        %735 = vdwg.mxu0
        %v736 = vmul.f32 %v685, 0.17677669
        %v737 = vmul.f32 %v731, 0.17677669
        %v738 = vadd.f32 %v736, %v636
        %v739 = vadd.f32 %v737, %v636
        %vm740 = vcmask 64512
        %v741 = vsel %vm740, %v738, -inf
        %742 = vmax.xlane.f32.xlu0 %v741
        %v743 = vpop.xlane.xlu0 %742
        %v744 = vsel %vm740, %v739, -inf
        %745 = vmax.xlane.f32.xlu0 %v744
        %v746 = vpop.xlane.xlu0 %745
        %v747 = vsub.f32 %v738, %v743
        %v748 = vsub.f32 %v739, %v746
        %v749 = vmul.f32 %v747, 1.442695
        %v750 = vpow.pop %v749
        %v751 = vmul.f32 %v748, 1.442695
        %v752 = vpow.pop %v751
        %v753 = vsel %vm740, %v750, 0.0
        %754 = vadd.xlane.f32.xlu0 %v753
        %v755 = vpop.xlane.xlu0 %754
        %v756 = vsel %vm740, %v752, 0.0
        %757 = vadd.xlane.f32.xlu0 %v756
        %v758 = vpop.xlane.xlu0 %757
        %v759 = vrcp.pop %v755
        %v760 = vmul.f32 1.0, %v759
        %v761 = vrcp.pop %v758
        %v762 = vmul.f32 1.0, %v761
        %v763 = vmul.f32 %v750, %v760
        %v764 = vmul.f32 %v752, %v762
        %v765 = vpack.c.bf16 %v763, %v763
        %v766 = vpack.c.bf16 %v764, %v764
        %v768 = vsel %vm740, %v765, 0
        %vm770 = vcmask 1043456
        %v772 = vsel %vm770, %v641, 0
        %774 = vmatprep.subr.bf16.mxu0 0
        %775 = vmatpush1.bf16.msra.mxu0 0
        %776 = vmatprep.subr.bf16.mxu0 0
        %777 = vmatpush1.bf16.msra.mxu0 0
        %778 = vmatprep.subr.bf16.mxu0 0
        %779 = vmatpush1.bf16.msra.mxu0 0
        %780 = vmatprep.subr.bf16.mxu0 0
        %781 = vmatpush1.bf16.msra.mxu0 0
        %782 = vmatprep.subr.bf16.mxu0 0
        %783 = vmatpush1.bf16.msra.mxu0 0
        %784 = vmatprep.subr.bf16.mxu0 0
        %785 = vmatpush1.bf16.msra.mxu0 0
        %786 = vmatprep.subr.bf16.mxu0 0
        %787 = vmatpush1.bf16.msra.mxu0 0
        %788 = vmatprep.subr.bf16.mxu0 0
        %789 = vmatpush1.bf16.msra.mxu0 %v772
        %790 = vmatprep.subr.bf16.mxu0 0
        %791 = vmatpush2.bf16.msra.mxu0 0
        %792 = vmatprep.subr.bf16.mxu0 0
        %793 = vmatpush2.bf16.msra.mxu0 0
        %794 = vmatprep.subr.bf16.mxu0 0
        %795 = vmatpush2.bf16.msra.mxu0 0
        %796 = vmatprep.subr.bf16.mxu0 0
        %797 = vmatpush2.bf16.msra.mxu0 0
        %798 = vmatprep.subr.bf16.mxu0 0
        %799 = vmatpush2.bf16.msra.mxu0 0
        %800 = vmatprep.subr.bf16.mxu0 0
        %801 = vmatpush2.bf16.msra.mxu0 0
        %802 = vmatprep.subr.bf16.mxu0 0
        %803 = vmatpush2.bf16.msra.mxu0 0
        %804 = vmatprep.subr.bf16.mxu0 0
        %805 = vmatpush2.bf16.msra.mxu0 0
        %806 = vmatprep.mubr.bf16.mxu0 0
        %807 = vmatmul.mubr.bf16.gmra.mxu0 %v768
        %v808 = vpop.f32.mrf.mxu0
        %v809 = vadd.f32 0.0, %v808
        %v810 = vpop.f32.mrf.mxu0
        %v811 = vpop.f32.mrf.mxu0
        %v812 = vpop.f32.mrf.mxu0
        %813 = vdwg.mxu0
        %v815 = vsel %vm740, %v766, 0
        %v818 = vsel %vm770, %v642, 0
        %820 = vmatprep.subr.bf16.mxu0 0
        %821 = vmatpush1.bf16.msra.mxu0 0
        %822 = vmatprep.subr.bf16.mxu0 0
        %823 = vmatpush1.bf16.msra.mxu0 0
        %824 = vmatprep.subr.bf16.mxu0 0
        %825 = vmatpush1.bf16.msra.mxu0 0
        %826 = vmatprep.subr.bf16.mxu0 0
        %827 = vmatpush1.bf16.msra.mxu0 0
        %828 = vmatprep.subr.bf16.mxu0 0
        %829 = vmatpush1.bf16.msra.mxu0 0
        %830 = vmatprep.subr.bf16.mxu0 0
        %831 = vmatpush1.bf16.msra.mxu0 0
        %832 = vmatprep.subr.bf16.mxu0 0
        %833 = vmatpush1.bf16.msra.mxu0 0
        %834 = vmatprep.subr.bf16.mxu0 0
        %835 = vmatpush1.bf16.msra.mxu0 %v818
        %836 = vmatprep.subr.bf16.mxu0 0
        %837 = vmatpush2.bf16.msra.mxu0 0
        %838 = vmatprep.subr.bf16.mxu0 0
        %839 = vmatpush2.bf16.msra.mxu0 0
        %840 = vmatprep.subr.bf16.mxu0 0
        %841 = vmatpush2.bf16.msra.mxu0 0
        %842 = vmatprep.subr.bf16.mxu0 0
        %843 = vmatpush2.bf16.msra.mxu0 0
        %844 = vmatprep.subr.bf16.mxu0 0
        %845 = vmatpush2.bf16.msra.mxu0 0
        %846 = vmatprep.subr.bf16.mxu0 0
        %847 = vmatpush2.bf16.msra.mxu0 0
        %848 = vmatprep.subr.bf16.mxu0 0
        %849 = vmatpush2.bf16.msra.mxu0 0
        %850 = vmatprep.subr.bf16.mxu0 0
        %851 = vmatpush2.bf16.msra.mxu0 0
        %852 = vmatprep.mubr.bf16.mxu0 0
        %853 = vmatmul.mubr.bf16.gmra.mxu0 %v815
        %v854 = vpop.f32.mrf.mxu0
        %v855 = vadd.f32 0.0, %v854
        %v856 = vpop.f32.mrf.mxu0
        %v857 = vpop.f32.mrf.mxu0
        %v858 = vpop.f32.mrf.mxu0
        %859 = vdwg.mxu0
        %v860 = vpack.c.bf16 %v855, %v809
        %v861 = vld [vmem:[#allocation9] sm:$0xf]
        %v862 = vld [vmem:[#allocation9 + $0x4] sm:$0xf]
        %v863 = vld [vmem:[#allocation9 + $0x8] sm:$0xf]
        %v864 = vld [vmem:[#allocation9 + $0xc] sm:$0xf]
        %866 = vrot.lane.b32.xlu0 %v637, 96
        %v867 = vpop.permute.xlu0 %866
        %869 = vrot.lane.b32.xlu0 %v639, 96
        %v870 = vpop.permute.xlu0 %869
        %v872 = vsel %vm643, %v867, 0
        %v875 = vsel %vm643, %v870, 0
        %877 = vmatprep.subr.bf16.mxu0 0
        %878 = vmatpush1.bf16.xpose.msra.mxu0 0
        %879 = vmatprep.subr.bf16.mxu0 0
        %880 = vmatpush1.bf16.xpose.msra.mxu0 0
        %881 = vmatprep.subr.bf16.mxu0 0
        %882 = vmatpush1.bf16.xpose.msra.mxu0 0
        %883 = vmatprep.subr.bf16.mxu0 0
        %884 = vmatpush1.bf16.xpose.msra.mxu0 0
        %885 = vmatprep.subr.bf16.mxu0 0
        %886 = vmatpush1.bf16.xpose.msra.mxu0 0
        %887 = vmatprep.subr.bf16.mxu0 0
        %888 = vmatpush1.bf16.xpose.msra.mxu0 0
        %889 = vmatprep.subr.bf16.mxu0 0
        %890 = vmatpush1.bf16.xpose.msra.mxu0 0
        %891 = vmatprep.subr.bf16.mxu0 0
        %892 = vmatpush1.bf16.xpose.msra.mxu0 %v875
        %893 = vmatprep.subr.bf16.mxu0 0
        %894 = vmatpush2.bf16.xpose.msra.mxu0 0
        %895 = vmatprep.subr.bf16.mxu0 0
        %896 = vmatpush2.bf16.xpose.msra.mxu0 0
        %897 = vmatprep.subr.bf16.mxu0 0
        %898 = vmatpush2.bf16.xpose.msra.mxu0 0
        %899 = vmatprep.subr.bf16.mxu0 0
        %900 = vmatpush2.bf16.xpose.msra.mxu0 0
        %901 = vmatprep.subr.bf16.mxu0 0
        %902 = vmatpush2.bf16.xpose.msra.mxu0 0
        %903 = vmatprep.subr.bf16.mxu0 0
        %904 = vmatpush2.bf16.xpose.msra.mxu0 0
        %905 = vmatprep.subr.bf16.mxu0 0
        %906 = vmatpush2.bf16.xpose.msra.mxu0 0
        %907 = vmatprep.subr.bf16.mxu0 0
        %908 = vmatpush2.bf16.xpose.msra.mxu0 0
        %909 = vmatprep.mubr.bf16.mxu0 0
        %910 = vmatmul.mubr.bf16.gmra.mxu0 %v872
        %v911 = vpop.f32.mrf.mxu0
        %v912 = vadd.f32 0.0, %v911
        %v913 = vpop.f32.mrf.mxu0
        %v914 = vpop.f32.mrf.mxu0
        %v915 = vpop.f32.mrf.mxu0
        %916 = vdwg.mxu0
        %918 = vrot.lane.b32.xlu0 %v638, 96
        %v919 = vpop.permute.xlu0 %918
        %921 = vrot.lane.b32.xlu0 %v640, 96
        %v922 = vpop.permute.xlu0 %921
        %v924 = vsel %vm643, %v919, 0
        %v927 = vsel %vm643, %v922, 0
        %929 = vmatprep.subr.bf16.mxu0 0
        %930 = vmatpush1.bf16.xpose.msra.mxu0 0
        %931 = vmatprep.subr.bf16.mxu0 0
        %932 = vmatpush1.bf16.xpose.msra.mxu0 0
        %933 = vmatprep.subr.bf16.mxu0 0
        %934 = vmatpush1.bf16.xpose.msra.mxu0 0
        %935 = vmatprep.subr.bf16.mxu0 0
        %936 = vmatpush1.bf16.xpose.msra.mxu0 0
        %937 = vmatprep.subr.bf16.mxu0 0
        %938 = vmatpush1.bf16.xpose.msra.mxu0 0
        %939 = vmatprep.subr.bf16.mxu0 0
        %940 = vmatpush1.bf16.xpose.msra.mxu0 0
        %941 = vmatprep.subr.bf16.mxu0 0
        %942 = vmatpush1.bf16.xpose.msra.mxu0 0
        %943 = vmatprep.subr.bf16.mxu0 0
        %944 = vmatpush1.bf16.xpose.msra.mxu0 %v927
        %945 = vmatprep.subr.bf16.mxu0 0
        %946 = vmatpush2.bf16.xpose.msra.mxu0 0
        %947 = vmatprep.subr.bf16.mxu0 0
        %948 = vmatpush2.bf16.xpose.msra.mxu0 0
        %949 = vmatprep.subr.bf16.mxu0 0
        %950 = vmatpush2.bf16.xpose.msra.mxu0 0
        %951 = vmatprep.subr.bf16.mxu0 0
        %952 = vmatpush2.bf16.xpose.msra.mxu0 0
        %953 = vmatprep.subr.bf16.mxu0 0
        %954 = vmatpush2.bf16.xpose.msra.mxu0 0
        %955 = vmatprep.subr.bf16.mxu0 0
        %956 = vmatpush2.bf16.xpose.msra.mxu0 0
        %957 = vmatprep.subr.bf16.mxu0 0
        %958 = vmatpush2.bf16.xpose.msra.mxu0 0
        %959 = vmatprep.subr.bf16.mxu0 0
        %960 = vmatpush2.bf16.xpose.msra.mxu0 0
        %961 = vmatprep.mubr.bf16.mxu0 0
        %962 = vmatmul.mubr.bf16.gmra.mxu0 %v924
        %v963 = vpop.f32.mrf.mxu0
        %v964 = vadd.f32 0.0, %v963
        %v965 = vpop.f32.mrf.mxu0
        %v966 = vpop.f32.mrf.mxu0
        %v967 = vpop.f32.mrf.mxu0
        %968 = vdwg.mxu0
        %v969 = vmul.f32 %v912, 0.17677669
        %v970 = vmul.f32 %v964, 0.17677669
        %v971 = vadd.f32 %v969, %v636
        %v972 = vadd.f32 %v970, %v636
        %v973 = vsel %vm740, %v971, -inf
        %974 = vmax.xlane.f32.xlu0 %v973
        %v975 = vpop.xlane.xlu0 %974
        %v976 = vsel %vm740, %v972, -inf
        %977 = vmax.xlane.f32.xlu0 %v976
        %v978 = vpop.xlane.xlu0 %977
        %v979 = vsub.f32 %v971, %v975
        %v980 = vsub.f32 %v972, %v978
        %v981 = vmul.f32 %v979, 1.442695
        %v982 = vpow.pop %v981
        %v983 = vmul.f32 %v980, 1.442695
        %v984 = vpow.pop %v983
        %v985 = vsel %vm740, %v982, 0.0
        %986 = vadd.xlane.f32.xlu0 %v985
        %v987 = vpop.xlane.xlu0 %986
        %v988 = vsel %vm740, %v984, 0.0
        %989 = vadd.xlane.f32.xlu0 %v988
        %v990 = vpop.xlane.xlu0 %989
        %v991 = vrcp.pop %v987
        %v992 = vmul.f32 1.0, %v991
        %v993 = vrcp.pop %v990
        %v994 = vmul.f32 1.0, %v993
        %v995 = vmul.f32 %v982, %v992
        %v996 = vmul.f32 %v984, %v994
        %v997 = vpack.c.bf16 %v995, %v995
        %v998 = vpack.c.bf16 %v996, %v996
        %1000 = vrot.lane.b32.xlu0 %v641, 96
        %v1001 = vpop.permute.xlu0 %1000
        %v1003 = vsel %vm740, %v997, 0
        %v1006 = vsel %vm770, %v1001, 0
        %1008 = vmatprep.subr.bf16.mxu0 0
        %1009 = vmatpush1.bf16.msra.mxu0 0
        %1010 = vmatprep.subr.bf16.mxu0 0
        %1011 = vmatpush1.bf16.msra.mxu0 0
        %1012 = vmatprep.subr.bf16.mxu0 0
        %1013 = vmatpush1.bf16.msra.mxu0 0
        %1014 = vmatprep.subr.bf16.mxu0 0
        %1015 = vmatpush1.bf16.msra.mxu0 0
        %1016 = vmatprep.subr.bf16.mxu0 0
        %1017 = vmatpush1.bf16.msra.mxu0 0
        %1018 = vmatprep.subr.bf16.mxu0 0
        %1019 = vmatpush1.bf16.msra.mxu0 0
        %1020 = vmatprep.subr.bf16.mxu0 0
        %1021 = vmatpush1.bf16.msra.mxu0 0
        %1022 = vmatprep.subr.bf16.mxu0 0
        %1023 = vmatpush1.bf16.msra.mxu0 %v1006
        %1024 = vmatprep.subr.bf16.mxu0 0
        %1025 = vmatpush2.bf16.msra.mxu0 0
        %1026 = vmatprep.subr.bf16.mxu0 0
        %1027 = vmatpush2.bf16.msra.mxu0 0
        %1028 = vmatprep.subr.bf16.mxu0 0
        %1029 = vmatpush2.bf16.msra.mxu0 0
        %1030 = vmatprep.subr.bf16.mxu0 0
        %1031 = vmatpush2.bf16.msra.mxu0 0
        %1032 = vmatprep.subr.bf16.mxu0 0
        %1033 = vmatpush2.bf16.msra.mxu0 0
        %1034 = vmatprep.subr.bf16.mxu0 0
        %1035 = vmatpush2.bf16.msra.mxu0 0
        %1036 = vmatprep.subr.bf16.mxu0 0
        %1037 = vmatpush2.bf16.msra.mxu0 0
        %1038 = vmatprep.subr.bf16.mxu0 0
        %1039 = vmatpush2.bf16.msra.mxu0 0
        %1040 = vmatprep.mubr.bf16.mxu0 0
        %1041 = vmatmul.mubr.bf16.gmra.mxu0 %v1003
        %v1042 = vpop.f32.mrf.mxu0
        %v1043 = vadd.f32 0.0, %v1042
        %v1044 = vpop.f32.mrf.mxu0
        %v1045 = vpop.f32.mrf.mxu0
        %v1046 = vpop.f32.mrf.mxu0
        %1047 = vdwg.mxu0
        %1049 = vrot.lane.b32.xlu0 %v642, 96
        %v1050 = vpop.permute.xlu0 %1049
        %v1052 = vsel %vm740, %v998, 0
        %v1055 = vsel %vm770, %v1050, 0
        %1057 = vmatprep.subr.bf16.mxu0 0
        %1058 = vmatpush1.bf16.msra.mxu0 0
        %1059 = vmatprep.subr.bf16.mxu0 0
        %1060 = vmatpush1.bf16.msra.mxu0 0
        %1061 = vmatprep.subr.bf16.mxu0 0
        %1062 = vmatpush1.bf16.msra.mxu0 0
        %1063 = vmatprep.subr.bf16.mxu0 0
        %1064 = vmatpush1.bf16.msra.mxu0 0
        %1065 = vmatprep.subr.bf16.mxu0 0
        %1066 = vmatpush1.bf16.msra.mxu0 0
        %1067 = vmatprep.subr.bf16.mxu0 0
        %1068 = vmatpush1.bf16.msra.mxu0 0
        %1069 = vmatprep.subr.bf16.mxu0 0
        %1070 = vmatpush1.bf16.msra.mxu0 0
        %1071 = vmatprep.subr.bf16.mxu0 0
        %1072 = vmatpush1.bf16.msra.mxu0 %v1055
        %1073 = vmatprep.subr.bf16.mxu0 0
        %1074 = vmatpush2.bf16.msra.mxu0 0
        %1075 = vmatprep.subr.bf16.mxu0 0
        %1076 = vmatpush2.bf16.msra.mxu0 0
        %1077 = vmatprep.subr.bf16.mxu0 0
        %1078 = vmatpush2.bf16.msra.mxu0 0
        %1079 = vmatprep.subr.bf16.mxu0 0
        %1080 = vmatpush2.bf16.msra.mxu0 0
        %1081 = vmatprep.subr.bf16.mxu0 0
        %1082 = vmatpush2.bf16.msra.mxu0 0
        %1083 = vmatprep.subr.bf16.mxu0 0
        %1084 = vmatpush2.bf16.msra.mxu0 0
        %1085 = vmatprep.subr.bf16.mxu0 0
        %1086 = vmatpush2.bf16.msra.mxu0 0
        %1087 = vmatprep.subr.bf16.mxu0 0
        %1088 = vmatpush2.bf16.msra.mxu0 0
        %1089 = vmatprep.mubr.bf16.mxu0 0
        %1090 = vmatmul.mubr.bf16.gmra.mxu0 %v1052
        %v1091 = vpop.f32.mrf.mxu0
        %v1092 = vadd.f32 0.0, %v1091
        %v1093 = vpop.f32.mrf.mxu0
        %v1094 = vpop.f32.mrf.mxu0
        %v1095 = vpop.f32.mrf.mxu0
        %1096 = vdwg.mxu0
        %v1097 = vpack.c.bf16 %v1092, %v1043
        %v1098 = vld [vmem:[#allocation9 + $0x10] sm:$0xf]
        %v1099 = vld [vmem:[#allocation9 + $0x14] sm:$0xf]
        %v1100 = vld [vmem:[#allocation9 + $0x18] sm:$0xf]
        %v1101 = vld [vmem:[#allocation9 + $0x1c] sm:$0xf]
        %v1106 = vunpack.c.l.b16 %v1098
        %v1107 = vunpack.c.l.b16 %v1099
        %v1108 = vunpack.c.l.b16 %v1100
        %v1109 = vunpack.c.l.b16 %v1101
        %v1110 = vpack.c.b16 %v1107, %v1106
        %v1111 = vpack.c.b16 %v1109, %v1108
        %v1115 = vsel %vm643, %v1097, 0
        %1117 = vmatprep.subr.bf16.mxu0 0
        %1118 = vmatpush1.bf16.msra.mxu0 0
        %1119 = vmatprep.subr.bf16.mxu0 0
        %1120 = vmatpush1.bf16.msra.mxu0 0
        %1121 = vmatprep.subr.bf16.mxu0 0
        %1122 = vmatpush1.bf16.msra.mxu0 0
        %1123 = vmatprep.subr.bf16.mxu0 0
        %1124 = vmatpush1.bf16.msra.mxu0 0
        %1125 = vmatprep.subr.bf16.mxu0 0
        %1126 = vmatpush1.bf16.msra.mxu0 0
        %1127 = vmatprep.subr.bf16.mxu0 0
        %1128 = vmatpush1.bf16.msra.mxu0 0
        %1129 = vmatprep.subr.bf16.mxu0 0
        %1130 = vmatpush1.bf16.msra.mxu0 %v1111
        %1131 = vmatprep.subr.bf16.mxu0 0
        %1132 = vmatpush1.bf16.msra.mxu0 %v1110
        %1133 = vmatprep.subr.bf16.mxu0 0
        %1134 = vmatpush2.bf16.msra.mxu0 0
        %1135 = vmatprep.subr.bf16.mxu0 0
        %1136 = vmatpush2.bf16.msra.mxu0 0
        %1137 = vmatprep.subr.bf16.mxu0 0
        %1138 = vmatpush2.bf16.msra.mxu0 0
        %1139 = vmatprep.subr.bf16.mxu0 0
        %1140 = vmatpush2.bf16.msra.mxu0 0
        %1141 = vmatprep.subr.bf16.mxu0 0
        %1142 = vmatpush2.bf16.msra.mxu0 0
        %1143 = vmatprep.subr.bf16.mxu0 0
        %1144 = vmatpush2.bf16.msra.mxu0 0
        %1145 = vmatprep.subr.bf16.mxu0 0
        %1146 = vmatpush2.bf16.msra.mxu0 0
        %1147 = vmatprep.subr.bf16.mxu0 0
        %1148 = vmatpush2.bf16.msra.mxu0 0
        %1149 = vmatprep.mubr.bf16.mxu0 0
        %1150 = vmatmul.mubr.bf16.gmra.mxu0 %v1115
        %v1151 = vpop.f32.mrf.mxu0
        %v1152 = vadd.f32 0.0, %v1151
        %v1153 = vpop.f32.mrf.mxu0
        %v1154 = vpop.f32.mrf.mxu0
        %v1155 = vadd.f32 0.0, %v1154
        %v1156 = vpop.f32.mrf.mxu0
        %1157 = vdwg.mxu0
        %v1162 = vunpack.c.l.b16 %v861
        %v1163 = vunpack.c.l.b16 %v862
        %v1164 = vunpack.c.l.b16 %v863
        %v1165 = vunpack.c.l.b16 %v864
        %v1166 = vpack.c.b16 %v1163, %v1162
        %v1167 = vpack.c.b16 %v1165, %v1164
        %v1171 = vsel %vm643, %v860, 0
        %1173 = vmatprep.subr.bf16.mxu0 0
        %1174 = vmatpush1.bf16.msra.mxu0 0
        %1175 = vmatprep.subr.bf16.mxu0 0
        %1176 = vmatpush1.bf16.msra.mxu0 0
        %1177 = vmatprep.subr.bf16.mxu0 0
        %1178 = vmatpush1.bf16.msra.mxu0 0
        %1179 = vmatprep.subr.bf16.mxu0 0
        %1180 = vmatpush1.bf16.msra.mxu0 0
        %1181 = vmatprep.subr.bf16.mxu0 0
        %1182 = vmatpush1.bf16.msra.mxu0 0
        %1183 = vmatprep.subr.bf16.mxu0 0
        %1184 = vmatpush1.bf16.msra.mxu0 0
        %1185 = vmatprep.subr.bf16.mxu0 0
        %1186 = vmatpush1.bf16.msra.mxu0 %v1167
        %1187 = vmatprep.subr.bf16.mxu0 0
        %1188 = vmatpush1.bf16.msra.mxu0 %v1166
        %1189 = vmatprep.subr.bf16.mxu0 0
        %1190 = vmatpush2.bf16.msra.mxu0 0
        %1191 = vmatprep.subr.bf16.mxu0 0
        %1192 = vmatpush2.bf16.msra.mxu0 0
        %1193 = vmatprep.subr.bf16.mxu0 0
        %1194 = vmatpush2.bf16.msra.mxu0 0
        %1195 = vmatprep.subr.bf16.mxu0 0
        %1196 = vmatpush2.bf16.msra.mxu0 0
        %1197 = vmatprep.subr.bf16.mxu0 0
        %1198 = vmatpush2.bf16.msra.mxu0 0
        %1199 = vmatprep.subr.bf16.mxu0 0
        %1200 = vmatpush2.bf16.msra.mxu0 0
        %1201 = vmatprep.subr.bf16.mxu0 0
        %1202 = vmatpush2.bf16.msra.mxu0 0
        %1203 = vmatprep.subr.bf16.mxu0 0
        %1204 = vmatpush2.bf16.msra.mxu0 0
        %1205 = vmatprep.mubr.bf16.mxu0 0
        %1206 = vmatmul.mubr.bf16.gmra.mxu0 %v1171
        %v1207 = vpop.f32.mrf.mxu0
        %v1208 = vadd.f32 %v1152, %v1207
        %v1209 = vpop.f32.mrf.mxu0
        %v1210 = vpop.f32.mrf.mxu0
        %v1211 = vadd.f32 %v1155, %v1210
        %v1212 = vpop.f32.mrf.mxu0
        %1213 = vdwg.mxu0
        %1214 = vrot.lane.b32.xlu0 %v637, 64
        %v1215 = vpop.permute.xlu0 %1214
        %1216 = vrot.lane.b32.xlu0 %v639, 64
        %v1217 = vpop.permute.xlu0 %1216
        %v1219 = vsel %vm643, %v1215, 0
        %v1222 = vsel %vm643, %v1217, 0
        %1224 = vmatprep.subr.bf16.mxu0 0
        %1225 = vmatpush1.bf16.xpose.msra.mxu0 0
        %1226 = vmatprep.subr.bf16.mxu0 0
        %1227 = vmatpush1.bf16.xpose.msra.mxu0 0
        %1228 = vmatprep.subr.bf16.mxu0 0
        %1229 = vmatpush1.bf16.xpose.msra.mxu0 0
        %1230 = vmatprep.subr.bf16.mxu0 0
        %1231 = vmatpush1.bf16.xpose.msra.mxu0 0
        %1232 = vmatprep.subr.bf16.mxu0 0
        %1233 = vmatpush1.bf16.xpose.msra.mxu0 0
        %1234 = vmatprep.subr.bf16.mxu0 0
        %1235 = vmatpush1.bf16.xpose.msra.mxu0 0
        %1236 = vmatprep.subr.bf16.mxu0 0
        %1237 = vmatpush1.bf16.xpose.msra.mxu0 0
        %1238 = vmatprep.subr.bf16.mxu0 0
        %1239 = vmatpush1.bf16.xpose.msra.mxu0 %v1222
        %1240 = vmatprep.subr.bf16.mxu0 0
        %1241 = vmatpush2.bf16.xpose.msra.mxu0 0
        %1242 = vmatprep.subr.bf16.mxu0 0
        %1243 = vmatpush2.bf16.xpose.msra.mxu0 0
        %1244 = vmatprep.subr.bf16.mxu0 0
        %1245 = vmatpush2.bf16.xpose.msra.mxu0 0
        %1246 = vmatprep.subr.bf16.mxu0 0
        %1247 = vmatpush2.bf16.xpose.msra.mxu0 0
        %1248 = vmatprep.subr.bf16.mxu0 0
        %1249 = vmatpush2.bf16.xpose.msra.mxu0 0
        %1250 = vmatprep.subr.bf16.mxu0 0
        %1251 = vmatpush2.bf16.xpose.msra.mxu0 0
        %1252 = vmatprep.subr.bf16.mxu0 0
        %1253 = vmatpush2.bf16.xpose.msra.mxu0 0
        %1254 = vmatprep.subr.bf16.mxu0 0
        %1255 = vmatpush2.bf16.xpose.msra.mxu0 0
        %1256 = vmatprep.mubr.bf16.mxu0 0
        %1257 = vmatmul.mubr.bf16.gmra.mxu0 %v1219
        %v1258 = vpop.f32.mrf.mxu0
        %v1259 = vadd.f32 0.0, %v1258
        %v1260 = vpop.f32.mrf.mxu0
        %v1261 = vpop.f32.mrf.mxu0
        %v1262 = vpop.f32.mrf.mxu0
        %1263 = vdwg.mxu0
        %1264 = vrot.lane.b32.xlu0 %v638, 64
        %v1265 = vpop.permute.xlu0 %1264
        %1266 = vrot.lane.b32.xlu0 %v640, 64
        %v1267 = vpop.permute.xlu0 %1266
        %v1269 = vsel %vm643, %v1265, 0
        %v1272 = vsel %vm643, %v1267, 0
        %1274 = vmatprep.subr.bf16.mxu0 0
        %1275 = vmatpush1.bf16.xpose.msra.mxu0 0
        %1276 = vmatprep.subr.bf16.mxu0 0
        %1277 = vmatpush1.bf16.xpose.msra.mxu0 0
        %1278 = vmatprep.subr.bf16.mxu0 0
        %1279 = vmatpush1.bf16.xpose.msra.mxu0 0
        %1280 = vmatprep.subr.bf16.mxu0 0
        %1281 = vmatpush1.bf16.xpose.msra.mxu0 0
        %1282 = vmatprep.subr.bf16.mxu0 0
        %1283 = vmatpush1.bf16.xpose.msra.mxu0 0
        %1284 = vmatprep.subr.bf16.mxu0 0
        %1285 = vmatpush1.bf16.xpose.msra.mxu0 0
        %1286 = vmatprep.subr.bf16.mxu0 0
        %1287 = vmatpush1.bf16.xpose.msra.mxu0 0
        %1288 = vmatprep.subr.bf16.mxu0 0
        %1289 = vmatpush1.bf16.xpose.msra.mxu0 %v1272
        %1290 = vmatprep.subr.bf16.mxu0 0
        %1291 = vmatpush2.bf16.xpose.msra.mxu0 0
        %1292 = vmatprep.subr.bf16.mxu0 0
        %1293 = vmatpush2.bf16.xpose.msra.mxu0 0
        %1294 = vmatprep.subr.bf16.mxu0 0
        %1295 = vmatpush2.bf16.xpose.msra.mxu0 0
        %1296 = vmatprep.subr.bf16.mxu0 0
        %1297 = vmatpush2.bf16.xpose.msra.mxu0 0
        %1298 = vmatprep.subr.bf16.mxu0 0
        %1299 = vmatpush2.bf16.xpose.msra.mxu0 0
        %1300 = vmatprep.subr.bf16.mxu0 0
        %1301 = vmatpush2.bf16.xpose.msra.mxu0 0
        %1302 = vmatprep.subr.bf16.mxu0 0
        %1303 = vmatpush2.bf16.xpose.msra.mxu0 0
        %1304 = vmatprep.subr.bf16.mxu0 0
        %1305 = vmatpush2.bf16.xpose.msra.mxu0 0
        %1306 = vmatprep.mubr.bf16.mxu0 0
        %1307 = vmatmul.mubr.bf16.gmra.mxu0 %v1269
        %v1308 = vpop.f32.mrf.mxu0
        %v1309 = vadd.f32 0.0, %v1308
        %v1310 = vpop.f32.mrf.mxu0
        %v1311 = vpop.f32.mrf.mxu0
        %v1312 = vpop.f32.mrf.mxu0
        %1313 = vdwg.mxu0
        %v1314 = vmul.f32 %v1259, 0.17677669
        %v1315 = vmul.f32 %v1309, 0.17677669
        %v1316 = vadd.f32 %v1314, %v636
        %v1317 = vadd.f32 %v1315, %v636
        %v1318 = vsel %vm740, %v1316, -inf
        %1319 = vmax.xlane.f32.xlu0 %v1318
        %v1320 = vpop.xlane.xlu0 %1319
        %v1321 = vsel %vm740, %v1317, -inf
        %1322 = vmax.xlane.f32.xlu0 %v1321
        %v1323 = vpop.xlane.xlu0 %1322
        %v1324 = vsub.f32 %v1316, %v1320
        %v1325 = vsub.f32 %v1317, %v1323
        %v1326 = vmul.f32 %v1324, 1.442695
        %v1327 = vpow.pop %v1326
        %v1328 = vmul.f32 %v1325, 1.442695
        %v1329 = vpow.pop %v1328
        %v1330 = vsel %vm740, %v1327, 0.0
        %1331 = vadd.xlane.f32.xlu0 %v1330
        %v1332 = vpop.xlane.xlu0 %1331
        %v1333 = vsel %vm740, %v1329, 0.0
        %1334 = vadd.xlane.f32.xlu0 %v1333
        %v1335 = vpop.xlane.xlu0 %1334
        %v1336 = vrcp.pop %v1332
        %v1337 = vmul.f32 1.0, %v1336
        %v1338 = vrcp.pop %v1335
        %v1339 = vmul.f32 1.0, %v1338
        %v1340 = vmul.f32 %v1327, %v1337
        %v1341 = vmul.f32 %v1329, %v1339
        %v1342 = vpack.c.bf16 %v1340, %v1340
        %v1343 = vpack.c.bf16 %v1341, %v1341
        %1344 = vrot.lane.b32.xlu0 %v641, 64
        %v1345 = vpop.permute.xlu0 %1344
        %v1347 = vsel %vm740, %v1342, 0
        %v1350 = vsel %vm770, %v1345, 0
        %1352 = vmatprep.subr.bf16.mxu0 0
        %1353 = vmatpush1.bf16.msra.mxu0 0
        %1354 = vmatprep.subr.bf16.mxu0 0
        %1355 = vmatpush1.bf16.msra.mxu0 0
        %1356 = vmatprep.subr.bf16.mxu0 0
        %1357 = vmatpush1.bf16.msra.mxu0 0
        %1358 = vmatprep.subr.bf16.mxu0 0
        %1359 = vmatpush1.bf16.msra.mxu0 0
        %1360 = vmatprep.subr.bf16.mxu0 0
        %1361 = vmatpush1.bf16.msra.mxu0 0
        %1362 = vmatprep.subr.bf16.mxu0 0
        %1363 = vmatpush1.bf16.msra.mxu0 0
        %1364 = vmatprep.subr.bf16.mxu0 0
        %1365 = vmatpush1.bf16.msra.mxu0 0
        %1366 = vmatprep.subr.bf16.mxu0 0
        %1367 = vmatpush1.bf16.msra.mxu0 %v1350
        %1368 = vmatprep.subr.bf16.mxu0 0
        %1369 = vmatpush2.bf16.msra.mxu0 0
        %1370 = vmatprep.subr.bf16.mxu0 0
        %1371 = vmatpush2.bf16.msra.mxu0 0
        %1372 = vmatprep.subr.bf16.mxu0 0
        %1373 = vmatpush2.bf16.msra.mxu0 0
        %1374 = vmatprep.subr.bf16.mxu0 0
        %1375 = vmatpush2.bf16.msra.mxu0 0
        %1376 = vmatprep.subr.bf16.mxu0 0
        %1377 = vmatpush2.bf16.msra.mxu0 0
        %1378 = vmatprep.subr.bf16.mxu0 0
        %1379 = vmatpush2.bf16.msra.mxu0 0
        %1380 = vmatprep.subr.bf16.mxu0 0
        %1381 = vmatpush2.bf16.msra.mxu0 0
        %1382 = vmatprep.subr.bf16.mxu0 0
        %1383 = vmatpush2.bf16.msra.mxu0 0
        %1384 = vmatprep.mubr.bf16.mxu0 0
        %1385 = vmatmul.mubr.bf16.gmra.mxu0 %v1347
        %v1386 = vpop.f32.mrf.mxu0
        %v1387 = vadd.f32 0.0, %v1386
        %v1388 = vpop.f32.mrf.mxu0
        %v1389 = vpop.f32.mrf.mxu0
        %v1390 = vpop.f32.mrf.mxu0
        %1391 = vdwg.mxu0
        %1392 = vrot.lane.b32.xlu0 %v642, 64
        %v1393 = vpop.permute.xlu0 %1392
        %v1395 = vsel %vm740, %v1343, 0
        %v1398 = vsel %vm770, %v1393, 0
        %1400 = vmatprep.subr.bf16.mxu0 0
        %1401 = vmatpush1.bf16.msra.mxu0 0
        %1402 = vmatprep.subr.bf16.mxu0 0
        %1403 = vmatpush1.bf16.msra.mxu0 0
        %1404 = vmatprep.subr.bf16.mxu0 0
        %1405 = vmatpush1.bf16.msra.mxu0 0
        %1406 = vmatprep.subr.bf16.mxu0 0
        %1407 = vmatpush1.bf16.msra.mxu0 0
        %1408 = vmatprep.subr.bf16.mxu0 0
        %1409 = vmatpush1.bf16.msra.mxu0 0
        %1410 = vmatprep.subr.bf16.mxu0 0
        %1411 = vmatpush1.bf16.msra.mxu0 0
        %1412 = vmatprep.subr.bf16.mxu0 0
        %1413 = vmatpush1.bf16.msra.mxu0 0
        %1414 = vmatprep.subr.bf16.mxu0 0
        %1415 = vmatpush1.bf16.msra.mxu0 %v1398
        %1416 = vmatprep.subr.bf16.mxu0 0
        %1417 = vmatpush2.bf16.msra.mxu0 0
        %1418 = vmatprep.subr.bf16.mxu0 0
        %1419 = vmatpush2.bf16.msra.mxu0 0
        %1420 = vmatprep.subr.bf16.mxu0 0
        %1421 = vmatpush2.bf16.msra.mxu0 0
        %1422 = vmatprep.subr.bf16.mxu0 0
        %1423 = vmatpush2.bf16.msra.mxu0 0
        %1424 = vmatprep.subr.bf16.mxu0 0
        %1425 = vmatpush2.bf16.msra.mxu0 0
        %1426 = vmatprep.subr.bf16.mxu0 0
        %1427 = vmatpush2.bf16.msra.mxu0 0
        %1428 = vmatprep.subr.bf16.mxu0 0
        %1429 = vmatpush2.bf16.msra.mxu0 0
        %1430 = vmatprep.subr.bf16.mxu0 0
        %1431 = vmatpush2.bf16.msra.mxu0 0
        %1432 = vmatprep.mubr.bf16.mxu0 0
        %1433 = vmatmul.mubr.bf16.gmra.mxu0 %v1395
        %v1434 = vpop.f32.mrf.mxu0
        %v1435 = vadd.f32 0.0, %v1434
        %v1436 = vpop.f32.mrf.mxu0
        %v1437 = vpop.f32.mrf.mxu0
        %v1438 = vpop.f32.mrf.mxu0
        %1439 = vdwg.mxu0
        %v1440 = vpack.c.bf16 %v1435, %v1387
        %v1441 = vld [vmem:[#allocation9 + $0x20] sm:$0xf]
        %v1442 = vld [vmem:[#allocation9 + $0x24] sm:$0xf]
        %v1443 = vld [vmem:[#allocation9 + $0x28] sm:$0xf]
        %v1444 = vld [vmem:[#allocation9 + $0x2c] sm:$0xf]
        %v1449 = vunpack.c.l.b16 %v1441
        %v1450 = vunpack.c.l.b16 %v1442
        %v1451 = vunpack.c.l.b16 %v1443
        %v1452 = vunpack.c.l.b16 %v1444
        %v1453 = vpack.c.b16 %v1450, %v1449
        %v1454 = vpack.c.b16 %v1452, %v1451
        %v1458 = vsel %vm643, %v1440, 0
        %1460 = vmatprep.subr.bf16.mxu0 0
        %1461 = vmatpush1.bf16.msra.mxu0 0
        %1462 = vmatprep.subr.bf16.mxu0 0
        %1463 = vmatpush1.bf16.msra.mxu0 0
        %1464 = vmatprep.subr.bf16.mxu0 0
        %1465 = vmatpush1.bf16.msra.mxu0 0
        %1466 = vmatprep.subr.bf16.mxu0 0
        %1467 = vmatpush1.bf16.msra.mxu0 0
        %1468 = vmatprep.subr.bf16.mxu0 0
        %1469 = vmatpush1.bf16.msra.mxu0 0
        %1470 = vmatprep.subr.bf16.mxu0 0
        %1471 = vmatpush1.bf16.msra.mxu0 0
        %1472 = vmatprep.subr.bf16.mxu0 0
        %1473 = vmatpush1.bf16.msra.mxu0 %v1454
        %1474 = vmatprep.subr.bf16.mxu0 0
        %1475 = vmatpush1.bf16.msra.mxu0 %v1453
        %1476 = vmatprep.subr.bf16.mxu0 0
        %1477 = vmatpush2.bf16.msra.mxu0 0
        %1478 = vmatprep.subr.bf16.mxu0 0
        %1479 = vmatpush2.bf16.msra.mxu0 0
        %1480 = vmatprep.subr.bf16.mxu0 0
        %1481 = vmatpush2.bf16.msra.mxu0 0
        %1482 = vmatprep.subr.bf16.mxu0 0
        %1483 = vmatpush2.bf16.msra.mxu0 0
        %1484 = vmatprep.subr.bf16.mxu0 0
        %1485 = vmatpush2.bf16.msra.mxu0 0
        %1486 = vmatprep.subr.bf16.mxu0 0
        %1487 = vmatpush2.bf16.msra.mxu0 0
        %1488 = vmatprep.subr.bf16.mxu0 0
        %1489 = vmatpush2.bf16.msra.mxu0 0
        %1490 = vmatprep.subr.bf16.mxu0 0
        %1491 = vmatpush2.bf16.msra.mxu0 0
        %1492 = vmatprep.mubr.bf16.mxu0 0
        %1493 = vmatmul.mubr.bf16.gmra.mxu0 %v1458
        %v1494 = vpop.f32.mrf.mxu0
        %v1495 = vadd.f32 0.0, %v1494
        %v1496 = vpop.f32.mrf.mxu0
        %v1497 = vpop.f32.mrf.mxu0
        %v1498 = vadd.f32 0.0, %v1497
        %v1499 = vpop.f32.mrf.mxu0
        %1500 = vdwg.mxu0
        %v1501 = vadd.f32 %v1208, %v1495
        %v1502 = vadd.f32 %v1211, %v1498
        %1503 = vrot.lane.b32.xlu0 %v637, 32
        %v1504 = vpop.permute.xlu0 %1503
        %1505 = vrot.lane.b32.xlu0 %v639, 32
        %v1506 = vpop.permute.xlu0 %1505
        %v1508 = vsel %vm643, %v1504, 0
        %v1511 = vsel %vm643, %v1506, 0
        %1513 = vmatprep.subr.bf16.mxu0 0
        %1514 = vmatpush1.bf16.xpose.msra.mxu0 0
        %1515 = vmatprep.subr.bf16.mxu0 0
        %1516 = vmatpush1.bf16.xpose.msra.mxu0 0
        %1517 = vmatprep.subr.bf16.mxu0 0
        %1518 = vmatpush1.bf16.xpose.msra.mxu0 0
        %1519 = vmatprep.subr.bf16.mxu0 0
        %1520 = vmatpush1.bf16.xpose.msra.mxu0 0
        %1521 = vmatprep.subr.bf16.mxu0 0
        %1522 = vmatpush1.bf16.xpose.msra.mxu0 0
        %1523 = vmatprep.subr.bf16.mxu0 0
        %1524 = vmatpush1.bf16.xpose.msra.mxu0 0
        %1525 = vmatprep.subr.bf16.mxu0 0
        %1526 = vmatpush1.bf16.xpose.msra.mxu0 0
        %1527 = vmatprep.subr.bf16.mxu0 0
        %1528 = vmatpush1.bf16.xpose.msra.mxu0 %v1511
        %1529 = vmatprep.subr.bf16.mxu0 0
        %1530 = vmatpush2.bf16.xpose.msra.mxu0 0
        %1531 = vmatprep.subr.bf16.mxu0 0
        %1532 = vmatpush2.bf16.xpose.msra.mxu0 0
        %1533 = vmatprep.subr.bf16.mxu0 0
        %1534 = vmatpush2.bf16.xpose.msra.mxu0 0
        %1535 = vmatprep.subr.bf16.mxu0 0
        %1536 = vmatpush2.bf16.xpose.msra.mxu0 0
        %1537 = vmatprep.subr.bf16.mxu0 0
        %1538 = vmatpush2.bf16.xpose.msra.mxu0 0
        %1539 = vmatprep.subr.bf16.mxu0 0
        %1540 = vmatpush2.bf16.xpose.msra.mxu0 0
        %1541 = vmatprep.subr.bf16.mxu0 0
        %1542 = vmatpush2.bf16.xpose.msra.mxu0 0
        %1543 = vmatprep.subr.bf16.mxu0 0
        %1544 = vmatpush2.bf16.xpose.msra.mxu0 0
        %1545 = vmatprep.mubr.bf16.mxu0 0
        %1546 = vmatmul.mubr.bf16.gmra.mxu0 %v1508
        %v1547 = vpop.f32.mrf.mxu0
        %v1548 = vadd.f32 0.0, %v1547
        %v1549 = vpop.f32.mrf.mxu0
        %v1550 = vpop.f32.mrf.mxu0
        %v1551 = vpop.f32.mrf.mxu0
        %1552 = vdwg.mxu0
        %1553 = vrot.lane.b32.xlu0 %v638, 32
        %v1554 = vpop.permute.xlu0 %1553
        %1555 = vrot.lane.b32.xlu0 %v640, 32
        %v1556 = vpop.permute.xlu0 %1555
        %v1558 = vsel %vm643, %v1554, 0
        %v1561 = vsel %vm643, %v1556, 0
        %1563 = vmatprep.subr.bf16.mxu0 0
        %1564 = vmatpush1.bf16.xpose.msra.mxu0 0
        %1565 = vmatprep.subr.bf16.mxu0 0
        %1566 = vmatpush1.bf16.xpose.msra.mxu0 0
        %1567 = vmatprep.subr.bf16.mxu0 0
        %1568 = vmatpush1.bf16.xpose.msra.mxu0 0
        %1569 = vmatprep.subr.bf16.mxu0 0
        %1570 = vmatpush1.bf16.xpose.msra.mxu0 0
        %1571 = vmatprep.subr.bf16.mxu0 0
        %1572 = vmatpush1.bf16.xpose.msra.mxu0 0
        %1573 = vmatprep.subr.bf16.mxu0 0
        %1574 = vmatpush1.bf16.xpose.msra.mxu0 0
        %1575 = vmatprep.subr.bf16.mxu0 0
        %1576 = vmatpush1.bf16.xpose.msra.mxu0 0
        %1577 = vmatprep.subr.bf16.mxu0 0
        %1578 = vmatpush1.bf16.xpose.msra.mxu0 %v1561
        %1579 = vmatprep.subr.bf16.mxu0 0
        %1580 = vmatpush2.bf16.xpose.msra.mxu0 0
        %1581 = vmatprep.subr.bf16.mxu0 0
        %1582 = vmatpush2.bf16.xpose.msra.mxu0 0
        %1583 = vmatprep.subr.bf16.mxu0 0
        %1584 = vmatpush2.bf16.xpose.msra.mxu0 0
        %1585 = vmatprep.subr.bf16.mxu0 0
        %1586 = vmatpush2.bf16.xpose.msra.mxu0 0
        %1587 = vmatprep.subr.bf16.mxu0 0
        %1588 = vmatpush2.bf16.xpose.msra.mxu0 0
        %1589 = vmatprep.subr.bf16.mxu0 0
        %1590 = vmatpush2.bf16.xpose.msra.mxu0 0
        %1591 = vmatprep.subr.bf16.mxu0 0
        %1592 = vmatpush2.bf16.xpose.msra.mxu0 0
        %1593 = vmatprep.subr.bf16.mxu0 0
        %1594 = vmatpush2.bf16.xpose.msra.mxu0 0
        %1595 = vmatprep.mubr.bf16.mxu0 0
        %1596 = vmatmul.mubr.bf16.gmra.mxu0 %v1558
        %v1597 = vpop.f32.mrf.mxu0
        %v1598 = vadd.f32 0.0, %v1597
        %v1599 = vpop.f32.mrf.mxu0
        %v1600 = vpop.f32.mrf.mxu0
        %v1601 = vpop.f32.mrf.mxu0
        %1602 = vdwg.mxu0
        %v1603 = vmul.f32 %v1548, 0.17677669
        %v1604 = vmul.f32 %v1598, 0.17677669
        %v1605 = vadd.f32 %v1603, %v636
        %v1606 = vadd.f32 %v1604, %v636
        %v1607 = vsel %vm740, %v1605, -inf
        %1608 = vmax.xlane.f32.xlu0 %v1607
        %v1609 = vpop.xlane.xlu0 %1608
        %v1610 = vsel %vm740, %v1606, -inf
        %1611 = vmax.xlane.f32.xlu0 %v1610
        %v1612 = vpop.xlane.xlu0 %1611
        %v1613 = vsub.f32 %v1605, %v1609
        %v1614 = vsub.f32 %v1606, %v1612
        %v1615 = vmul.f32 %v1613, 1.442695
        %v1616 = vpow.pop %v1615
        %v1617 = vmul.f32 %v1614, 1.442695
        %v1618 = vpow.pop %v1617
        %v1619 = vsel %vm740, %v1616, 0.0
        %1620 = vadd.xlane.f32.xlu0 %v1619
        %v1621 = vpop.xlane.xlu0 %1620
        %v1622 = vsel %vm740, %v1618, 0.0
        %1623 = vadd.xlane.f32.xlu0 %v1622
        %v1624 = vpop.xlane.xlu0 %1623
        %v1625 = vrcp.pop %v1621
        %v1626 = vmul.f32 1.0, %v1625
        %v1627 = vrcp.pop %v1624
        %v1628 = vmul.f32 1.0, %v1627
        %v1629 = vmul.f32 %v1616, %v1626
        %v1630 = vmul.f32 %v1618, %v1628
        %v1631 = vpack.c.bf16 %v1629, %v1629
        %v1632 = vpack.c.bf16 %v1630, %v1630
        %1633 = vrot.lane.b32.xlu0 %v641, 32
        %v1634 = vpop.permute.xlu0 %1633
        %v1636 = vsel %vm740, %v1631, 0
        %v1639 = vsel %vm770, %v1634, 0
        %1641 = vmatprep.subr.bf16.mxu0 0
        %1642 = vmatpush1.bf16.msra.mxu0 0
        %1643 = vmatprep.subr.bf16.mxu0 0
        %1644 = vmatpush1.bf16.msra.mxu0 0
        %1645 = vmatprep.subr.bf16.mxu0 0
        %1646 = vmatpush1.bf16.msra.mxu0 0
        %1647 = vmatprep.subr.bf16.mxu0 0
        %1648 = vmatpush1.bf16.msra.mxu0 0
        %1649 = vmatprep.subr.bf16.mxu0 0
        %1650 = vmatpush1.bf16.msra.mxu0 0
        %1651 = vmatprep.subr.bf16.mxu0 0
        %1652 = vmatpush1.bf16.msra.mxu0 0
        %1653 = vmatprep.subr.bf16.mxu0 0
        %1654 = vmatpush1.bf16.msra.mxu0 0
        %1655 = vmatprep.subr.bf16.mxu0 0
        %1656 = vmatpush1.bf16.msra.mxu0 %v1639
        %1657 = vmatprep.subr.bf16.mxu0 0
        %1658 = vmatpush2.bf16.msra.mxu0 0
        %1659 = vmatprep.subr.bf16.mxu0 0
        %1660 = vmatpush2.bf16.msra.mxu0 0
        %1661 = vmatprep.subr.bf16.mxu0 0
        %1662 = vmatpush2.bf16.msra.mxu0 0
        %1663 = vmatprep.subr.bf16.mxu0 0
        %1664 = vmatpush2.bf16.msra.mxu0 0
        %1665 = vmatprep.subr.bf16.mxu0 0
        %1666 = vmatpush2.bf16.msra.mxu0 0
        %1667 = vmatprep.subr.bf16.mxu0 0
        %1668 = vmatpush2.bf16.msra.mxu0 0
        %1669 = vmatprep.subr.bf16.mxu0 0
        %1670 = vmatpush2.bf16.msra.mxu0 0
        %1671 = vmatprep.subr.bf16.mxu0 0
        %1672 = vmatpush2.bf16.msra.mxu0 0
        %1673 = vmatprep.mubr.bf16.mxu0 0
        %1674 = vmatmul.mubr.bf16.gmra.mxu0 %v1636
        %v1675 = vpop.f32.mrf.mxu0
        %v1676 = vadd.f32 0.0, %v1675
        %v1677 = vpop.f32.mrf.mxu0
        %v1678 = vpop.f32.mrf.mxu0
        %v1679 = vpop.f32.mrf.mxu0
        %1680 = vdwg.mxu0
        %1681 = vrot.lane.b32.xlu0 %v642, 32
        %v1682 = vpop.permute.xlu0 %1681
        %v1684 = vsel %vm740, %v1632, 0
        %v1687 = vsel %vm770, %v1682, 0
        %1689 = vmatprep.subr.bf16.mxu0 0
        %1690 = vmatpush1.bf16.msra.mxu0 0
        %1691 = vmatprep.subr.bf16.mxu0 0
        %1692 = vmatpush1.bf16.msra.mxu0 0
        %1693 = vmatprep.subr.bf16.mxu0 0
        %1694 = vmatpush1.bf16.msra.mxu0 0
        %1695 = vmatprep.subr.bf16.mxu0 0
        %1696 = vmatpush1.bf16.msra.mxu0 0
        %1697 = vmatprep.subr.bf16.mxu0 0
        %1698 = vmatpush1.bf16.msra.mxu0 0
        %1699 = vmatprep.subr.bf16.mxu0 0
        %1700 = vmatpush1.bf16.msra.mxu0 0
        %1701 = vmatprep.subr.bf16.mxu0 0
        %1702 = vmatpush1.bf16.msra.mxu0 0
        %1703 = vmatprep.subr.bf16.mxu0 0
        %1704 = vmatpush1.bf16.msra.mxu0 %v1687
        %1705 = vmatprep.subr.bf16.mxu0 0
        %1706 = vmatpush2.bf16.msra.mxu0 0
        %1707 = vmatprep.subr.bf16.mxu0 0
        %1708 = vmatpush2.bf16.msra.mxu0 0
        %1709 = vmatprep.subr.bf16.mxu0 0
        %1710 = vmatpush2.bf16.msra.mxu0 0
        %1711 = vmatprep.subr.bf16.mxu0 0
        %1712 = vmatpush2.bf16.msra.mxu0 0
        %1713 = vmatprep.subr.bf16.mxu0 0
        %1714 = vmatpush2.bf16.msra.mxu0 0
        %1715 = vmatprep.subr.bf16.mxu0 0
        %1716 = vmatpush2.bf16.msra.mxu0 0
        %1717 = vmatprep.subr.bf16.mxu0 0
        %1718 = vmatpush2.bf16.msra.mxu0 0
        %1719 = vmatprep.subr.bf16.mxu0 0
        %1720 = vmatpush2.bf16.msra.mxu0 0
        %1721 = vmatprep.mubr.bf16.mxu0 0
        %1722 = vmatmul.mubr.bf16.gmra.mxu0 %v1684
        %v1723 = vpop.f32.mrf.mxu0
        %v1724 = vadd.f32 0.0, %v1723
        %v1725 = vpop.f32.mrf.mxu0
        %v1726 = vpop.f32.mrf.mxu0
        %v1727 = vpop.f32.mrf.mxu0
        %1728 = vdwg.mxu0
        %v1729 = vpack.c.bf16 %v1724, %v1676
        %v1730 = vld [vmem:[#allocation9 + $0x30] sm:$0xf]
        %v1731 = vld [vmem:[#allocation9 + $0x34] sm:$0xf]
        %v1732 = vld [vmem:[#allocation9 + $0x38] sm:$0xf]
        %v1733 = vld [vmem:[#allocation9 + $0x3c] sm:$0xf]
        %v1738 = vunpack.c.l.b16 %v1730
        %v1739 = vunpack.c.l.b16 %v1731
        %v1740 = vunpack.c.l.b16 %v1732
        %v1741 = vunpack.c.l.b16 %v1733
        %v1742 = vpack.c.b16 %v1739, %v1738
        %v1743 = vpack.c.b16 %v1741, %v1740
        %v1747 = vsel %vm643, %v1729, 0
        %1749 = vmatprep.subr.bf16.mxu0 0
        %1750 = vmatpush1.bf16.msra.mxu0 0
        %1751 = vmatprep.subr.bf16.mxu0 0
        %1752 = vmatpush1.bf16.msra.mxu0 0
        %1753 = vmatprep.subr.bf16.mxu0 0
        %1754 = vmatpush1.bf16.msra.mxu0 0
        %1755 = vmatprep.subr.bf16.mxu0 0
        %1756 = vmatpush1.bf16.msra.mxu0 0
        %1757 = vmatprep.subr.bf16.mxu0 0
        %1758 = vmatpush1.bf16.msra.mxu0 0
        %1759 = vmatprep.subr.bf16.mxu0 0
        %1760 = vmatpush1.bf16.msra.mxu0 0
        %1761 = vmatprep.subr.bf16.mxu0 0
        %1762 = vmatpush1.bf16.msra.mxu0 %v1743
        %1763 = vmatprep.subr.bf16.mxu0 0
        %1764 = vmatpush1.bf16.msra.mxu0 %v1742
        %1765 = vmatprep.subr.bf16.mxu0 0
        %1766 = vmatpush2.bf16.msra.mxu0 0
        %1767 = vmatprep.subr.bf16.mxu0 0
        %1768 = vmatpush2.bf16.msra.mxu0 0
        %1769 = vmatprep.subr.bf16.mxu0 0
        %1770 = vmatpush2.bf16.msra.mxu0 0
        %1771 = vmatprep.subr.bf16.mxu0 0
        %1772 = vmatpush2.bf16.msra.mxu0 0
        %1773 = vmatprep.subr.bf16.mxu0 0
        %1774 = vmatpush2.bf16.msra.mxu0 0
        %1775 = vmatprep.subr.bf16.mxu0 0
        %1776 = vmatpush2.bf16.msra.mxu0 0
        %1777 = vmatprep.subr.bf16.mxu0 0
        %1778 = vmatpush2.bf16.msra.mxu0 0
        %1779 = vmatprep.subr.bf16.mxu0 0
        %1780 = vmatpush2.bf16.msra.mxu0 0
        %1781 = vmatprep.mubr.bf16.mxu0 0
        %1782 = vmatmul.mubr.bf16.gmra.mxu0 %v1747
        %v1783 = vpop.f32.mrf.mxu0
        %v1784 = vadd.f32 0.0, %v1783
        %v1785 = vpop.f32.mrf.mxu0
        %v1786 = vpop.f32.mrf.mxu0
        %v1787 = vadd.f32 0.0, %v1786
        %v1788 = vpop.f32.mrf.mxu0
        %1789 = vdwg.mxu0
        %v1790 = vadd.f32 %v1501, %v1784
        %v1791 = vadd.f32 %v1502, %v1787
        %v1793 = vlaneseq
        %v1794 = vshrl.u32 %v1793, 7
        %v1795 = vsub.s32 0, %v1794
        %v1796 = vrot.slane %v346, %v1795
        %v1798 = vadd.f32 %v1790, %v1796
        %v1799 = vadd.f32 %v1791, %v1796
        %v1800 = vadd.f32 %v342, %v1798
        %v1801 = vadd.f32 %v343, %v1799
        %1802 = vst [vmem:[%s339] sm:$0xff] %v1800
        %1803 = vst [vmem:[%s339 + $0x8] sm:$0xff] %v1801
        %s1804 = smul.u32 2, %s23
        %p1805 = scmp.lt.s32.totalorder %s1804, 3
        %s1806 = scalar_select %p1805, %s1804, 3
        %s1807 = smul.addr %s1806, 8
        %s1808 = scalar_lea.vmem %s6, %s1807
        // Predicated region
        $region69: #{tiered_transformer_encoder_layer.2} parent=43 // pred_check
          %p1809 = pneg %p172
        $region70: #{tiered_transformer_encoder_layer.2} parent=43 // pred_check_branch
          %1811 = sbr.rel (%p1809) target = $region72
        $region71: #{tiered_transformer_encoder_layer.2} parent=43 // pred_region
          %s1812 = smul.u32 2, %s23
        $region72: #{tiered_transformer_encoder_layer.2} parent=43 // pred_fallthru
          _
      $region44: #{tiered_transformer_encoder_layer.2} parent=5 // pred_fallthru
        _
      %p1813 = scmp.le.s32.totalorder 2, %s18
      // Predicated region
      $region73: #{tiered_transformer_encoder_layer.2} parent=5 // pred_check
        %p1814 = pneg %p1813
      $region74: #{tiered_transformer_encoder_layer.2} parent=5 // pred_check_branch
        %1816 = sbr.rel (%p1814) target = $region76
      $region75: #{tiered_transformer_encoder_layer.2} parent=5 // pred_region
        %s1817 = ssub.s32 %s18, 2
        // Predicated region
        $region77: #{tiered_transformer_encoder_layer.2} parent=75 // pred_check
          %p1818 = pneg %p178
        $region78: #{tiered_transformer_encoder_layer.2} parent=75 // pred_check_branch
          %1820 = sbr.rel (%p1818) target = $region80
        $region79: #{tiered_transformer_encoder_layer.2} parent=75 // pred_region
          %s1821 = smul.u32 2, %s24
          %p1822 = scmp.lt.s32.totalorder %s1821, 3
          %s1823 = scalar_select %p1822, %s1821, 3
          %s1824 = smul.addr %s1823, 8
          %s1825 = scalar_lea.vmem %s6, %s1824
        $region80: #{tiered_transformer_encoder_layer.2} parent=75 // pred_fallthru
          _
      $region76: #{tiered_transformer_encoder_layer.2} parent=5 // pred_fallthru
        _
    $region6: #{tiered_transformer_encoder_layer.2} parent=1 // loop_footer
      %s22 = sadd.s32 1, %s18
    $region7: #{tiered_transformer_encoder_layer.2} parent=1 // loop_footer_branch
      %17 = sbr.rel target = $region3
    $region8: #{tiered_transformer_encoder_layer.2} parent=1 // loop_exit
      _
    %1826 = vsyncpa [#allocation3], 1
    %s1827 = scalar_lea.sflag [#allocation3], 1
    %1828 = vsyncpa %s1827, 1
    %1829 = vsyncpa [#allocation5], 1
    %1830 = vsyncpa [#allocation8], 1
    %1831 = vsyncpa [#allocation11], 1

// kernel: tiered_transformer_encoder_layer.3
$region0: #{tiered_transformer_encoder_layer.3}
  #allocation0 [shape = 'u32[]', space=smem, size = 0x4, offset = 0x4, fixed_abs, tag = 'smem constant byte address 0x4 - core index']
  #allocation1 [shape = 'u32[144,128]{1,0:T(1,128)}', space=vmem, size = 0x12000, scoped, tag = 'internal scratch']
  %s0 = inlined_call_operand.vmem [shape: f32[2,16,128], index: 0, kind: input, shape index: {}]
  %s1 = inlined_call_operand.vmem [shape: f32[1,128], index: 1, kind: input, shape index: {}]
  %s2 = inlined_call_operand.vmem [shape: f32[1,128], index: 2, kind: input, shape index: {}]
  %s3 = inlined_call_operand.hbm [shape: bf16[128,384], index: 3, kind: input, shape index: {}]
  %s4 = inlined_call_operand.vmem [shape: bf16[128,128], index: 4, kind: input, shape index: {}]
  %s5 = inlined_call_operand.vmem [shape: f32[1,128], index: 5, kind: input, shape index: {}]
  %s6 = inlined_call_operand.vmem [shape: f32[1,128], index: 6, kind: input, shape index: {}]
  %s7 = inlined_call_operand.vmem [shape: f32[1,128], index: 7, kind: input, shape index: {}]
  %s8 = inlined_call_operand.vmem [shape: bf16[128,512], index: 8, kind: input, shape index: {}]
  %s9 = inlined_call_operand.vmem [shape: f32[1,512], index: 9, kind: input, shape index: {}]
  %s10 = inlined_call_operand.hbm [shape: bf16[512,128], index: 10, kind: input, shape index: {}]
  %s11 = inlined_call_operand.vmem [shape: f32[1,128], index: 11, kind: input, shape index: {}]
  %s12 = inlined_call_operand.hbm [shape: f32[2,16,128], index: 12, kind: output, shape index: {}]
  %s13 = sld [smem:[#allocation0]]
  $region89: #{tiered_transformer_encoder_layer.3} parent=0
    _
  %s15 = ssub.s32 1, %s13
  %s16 = scalar_select 0, %s15, %s13
  $region1: #{tiered_transformer_encoder_layer.3} parent=0
    #allocation2 [shape = 'u8[98304]{0}', space=vmem, size = 0x18000, scoped, tag = 'input window, operand 3, single buffered']
    #allocation3 [shape = 's32[2]{0}', space=sflag, size = 0x8, scoped, tag = 'scoped memory for tiered_transformer_encoder_layer.3']
    #allocation4 [shape = 's32[2]{0}', space=sflag, size = 0x8, scoped, tag = 'scoped memory for tiered_transformer_encoder_layer.3']
    #allocation5 [shape = 'u8[131072]{0}', space=vmem, size = 0x20000, scoped, tag = 'input window, operand 10, single buffered']
    #allocation6 [shape = 's32[1]{0}', space=sflag, size = 0x4, scoped, tag = 'scoped memory for tiered_transformer_encoder_layer.3']
    #allocation7 [shape = 'u8[16384]{0}', space=vmem, size = 0x4000, scoped, tag = 'output window, operand 0']
    %17 = vsyncpa [#allocation3], 0
    %18 = vsyncpa [#allocation6], 0
    %19 = vsyncpa [#allocation4], 0
    %s20 = scalar_lea.sflag [#allocation4], 1
    %21 = vsyncpa %s20, 0
    loop: start=0, step=1, limit=4
    $region2: #{tiered_transformer_encoder_layer.3} parent=1 // loop_pre_header
      _
    $region3: #{tiered_transformer_encoder_layer.3} parent=1 // loop_header
      %s23 = sphi 0, %s27
      %p24 = scmp.ge.s32.totalorder %s23, 4
      %s33 = sphi 0, %s35
      %s36 = sphi 0, %s33
      %s37 = sphi 0, %s36
      %s53 = sphi 0, %s37
      %s57 = sphi 0, %s57
      %s59 = sphi 0, %s57
      %s60 = sphi 0, %s59
      %s74 = sphi 0, %s60
      %s78 = sphi 0, %s78
      %s80 = sphi 0, %s78
      %s81 = sphi 0, %s80
      %s95 = sphi 0, %s81
      %s99 = sphi 0, %s99
      %s101 = sphi 0, %s99
      %s102 = sphi 0, %s101
      %s116 = sphi 0, %s102
      %s120 = sphi 0, %s120
      %s122 = sphi 0, %s120
      %s123 = sphi 0, %s122
      %s137 = sphi 0, %s123
      %s141 = sphi 0, %s141
      %s143 = sphi 0, %s141
      %s144 = sphi 0, %s143
      %s158 = sphi 0, %s144
      %s162 = sphi 0, %s162
      %s164 = sphi 0, %s162
      %s165 = sphi 0, %s164
      %s179 = sphi 0, %s165
      %s183 = sphi 0, %s183
      %s185 = sphi 0, %s183
      %s186 = sphi 0, %s185
      %s200 = sphi 0, %s186
      %s204 = sphi 0, %s204
      %s206 = sphi 0, %s204
      %s207 = sphi 0, %s206
      %s221 = sphi 0, %s207
      %s225 = sphi 0, %s225
      %s227 = sphi 0, %s225
      %s228 = sphi 0, %s227
      %s242 = sphi 0, %s228
      %s246 = sphi 0, %s246
      %s248 = sphi 0, %s246
      %s249 = sphi 0, %s248
      %s263 = sphi 0, %s249
      %s267 = sphi 0, %s267
      %s269 = sphi 0, %s267
      %s270 = sphi 0, %s269
      %s284 = sphi 0, %s270
      %s290 = sphi 0, %s292
      %s293 = sphi 0, %s290
      %s294 = sphi 0, %s293
      %s310 = sphi 0, %s294
    $region4: #{tiered_transformer_encoder_layer.3} parent=1 // loop_header_branch
      %26 = sbr.rel (%p24) target = $region8
    $region5: #{tiered_transformer_encoder_layer.3} parent=1 // loop_body
      %s28 = ssub.s32 %s23, 1
      %s29 = ssub.s32 %s23, 2
      %s30 = sadd.s32 %s23, 1
      %s31 = ssub.s32 %s23, %s30
      %p32 = scmp.eq.s32.totalorder %s31, 0
      %s34 = sadd.s32 %s33, 1
      %s35 = scalar_select %p32, %s33, %s34
      %p38 = pneg %p32
      %p39 = scmp.eq.s32.totalorder %s23, 1
      %p40 = por %p38, %p39
      %p41 = scmp.ne.s32.totalorder %s33, %s36
      %p42 = scmp.eq.s32.totalorder %s23, 0
      %p43 = por %p41, %p42
      %p44 = scmp.ne.s32.totalorder %s33, %s36
      %p45 = scmp.eq.s32.totalorder %s28, 1
      %p46 = por %p44, %p45
      %p47 = scmp.ne.s32.totalorder %s36, %s37
      %p48 = scmp.eq.s32.totalorder %s28, 0
      %p49 = por %p47, %p48
      %p50 = scmp.ne.s32.totalorder %s36, %s37
      %p51 = scmp.eq.s32.totalorder %s29, 1
      %p52 = por %p50, %p51
      %p54 = scmp.ne.s32.totalorder %s37, %s53
      %p55 = scmp.eq.s32.totalorder %s29, 0
      %p56 = por %p54, %p55
      %s58 = sadd.s32 %s57, 1
      %p61 = scmp.eq.s32.totalorder %s23, 1
      %p62 = scmp.ne.s32.totalorder %s57, %s59
      %p63 = scmp.eq.s32.totalorder %s23, 0
      %p64 = por %p62, %p63
      %p65 = scmp.ne.s32.totalorder %s57, %s59
      %p66 = scmp.eq.s32.totalorder %s28, 1
      %p67 = por %p65, %p66
      %p68 = scmp.ne.s32.totalorder %s59, %s60
      %p69 = scmp.eq.s32.totalorder %s28, 0
      %p70 = por %p68, %p69
      %p71 = scmp.ne.s32.totalorder %s59, %s60
      %p72 = scmp.eq.s32.totalorder %s29, 1
      %p73 = por %p71, %p72
      %p75 = scmp.ne.s32.totalorder %s60, %s74
      %p76 = scmp.eq.s32.totalorder %s29, 0
      %p77 = por %p75, %p76
      %s79 = sadd.s32 %s78, 1
      %p82 = scmp.eq.s32.totalorder %s23, 1
      %p83 = scmp.ne.s32.totalorder %s78, %s80
      %p84 = scmp.eq.s32.totalorder %s23, 0
      %p85 = por %p83, %p84
      %p86 = scmp.ne.s32.totalorder %s78, %s80
      %p87 = scmp.eq.s32.totalorder %s28, 1
      %p88 = por %p86, %p87
      %p89 = scmp.ne.s32.totalorder %s80, %s81
      %p90 = scmp.eq.s32.totalorder %s28, 0
      %p91 = por %p89, %p90
      %p92 = scmp.ne.s32.totalorder %s80, %s81
      %p93 = scmp.eq.s32.totalorder %s29, 1
      %p94 = por %p92, %p93
      %p96 = scmp.ne.s32.totalorder %s81, %s95
      %p97 = scmp.eq.s32.totalorder %s29, 0
      %p98 = por %p96, %p97
      %s100 = sadd.s32 %s99, 1
      %p103 = scmp.eq.s32.totalorder %s23, 1
      %p104 = scmp.ne.s32.totalorder %s99, %s101
      %p105 = scmp.eq.s32.totalorder %s23, 0
      %p106 = por %p104, %p105
      %p107 = scmp.ne.s32.totalorder %s99, %s101
      %p108 = scmp.eq.s32.totalorder %s28, 1
      %p109 = por %p107, %p108
      %p110 = scmp.ne.s32.totalorder %s101, %s102
      %p111 = scmp.eq.s32.totalorder %s28, 0
      %p112 = por %p110, %p111
      %p113 = scmp.ne.s32.totalorder %s101, %s102
      %p114 = scmp.eq.s32.totalorder %s29, 1
      %p115 = por %p113, %p114
      %p117 = scmp.ne.s32.totalorder %s102, %s116
      %p118 = scmp.eq.s32.totalorder %s29, 0
      %p119 = por %p117, %p118
      %s121 = sadd.s32 %s120, 1
      %p124 = scmp.eq.s32.totalorder %s23, 1
      %p125 = scmp.ne.s32.totalorder %s120, %s122
      %p126 = scmp.eq.s32.totalorder %s23, 0
      %p127 = por %p125, %p126
      %p128 = scmp.ne.s32.totalorder %s120, %s122
      %p129 = scmp.eq.s32.totalorder %s28, 1
      %p130 = por %p128, %p129
      %p131 = scmp.ne.s32.totalorder %s122, %s123
      %p132 = scmp.eq.s32.totalorder %s28, 0
      %p133 = por %p131, %p132
      %p134 = scmp.ne.s32.totalorder %s122, %s123
      %p135 = scmp.eq.s32.totalorder %s29, 1
      %p136 = por %p134, %p135
      %p138 = scmp.ne.s32.totalorder %s123, %s137
      %p139 = scmp.eq.s32.totalorder %s29, 0
      %p140 = por %p138, %p139
      %s142 = sadd.s32 %s141, 1
      %p145 = scmp.eq.s32.totalorder %s23, 1
      %p146 = scmp.ne.s32.totalorder %s141, %s143
      %p147 = scmp.eq.s32.totalorder %s23, 0
      %p148 = por %p146, %p147
      %p149 = scmp.ne.s32.totalorder %s141, %s143
      %p150 = scmp.eq.s32.totalorder %s28, 1
      %p151 = por %p149, %p150
      %p152 = scmp.ne.s32.totalorder %s143, %s144
      %p153 = scmp.eq.s32.totalorder %s28, 0
      %p154 = por %p152, %p153
      %p155 = scmp.ne.s32.totalorder %s143, %s144
      %p156 = scmp.eq.s32.totalorder %s29, 1
      %p157 = por %p155, %p156
      %p159 = scmp.ne.s32.totalorder %s144, %s158
      %p160 = scmp.eq.s32.totalorder %s29, 0
      %p161 = por %p159, %p160
      %s163 = sadd.s32 %s162, 1
      %p166 = scmp.eq.s32.totalorder %s23, 1
      %p167 = scmp.ne.s32.totalorder %s162, %s164
      %p168 = scmp.eq.s32.totalorder %s23, 0
      %p169 = por %p167, %p168
      %p170 = scmp.ne.s32.totalorder %s162, %s164
      %p171 = scmp.eq.s32.totalorder %s28, 1
      %p172 = por %p170, %p171
      %p173 = scmp.ne.s32.totalorder %s164, %s165
      %p174 = scmp.eq.s32.totalorder %s28, 0
      %p175 = por %p173, %p174
      %p176 = scmp.ne.s32.totalorder %s164, %s165
      %p177 = scmp.eq.s32.totalorder %s29, 1
      %p178 = por %p176, %p177
      %p180 = scmp.ne.s32.totalorder %s165, %s179
      %p181 = scmp.eq.s32.totalorder %s29, 0
      %p182 = por %p180, %p181
      %s184 = sadd.s32 %s183, 1
      %p187 = scmp.eq.s32.totalorder %s23, 1
      %p188 = scmp.ne.s32.totalorder %s183, %s185
      %p189 = scmp.eq.s32.totalorder %s23, 0
      %p190 = por %p188, %p189
      %p191 = scmp.ne.s32.totalorder %s183, %s185
      %p192 = scmp.eq.s32.totalorder %s28, 1
      %p193 = por %p191, %p192
      %p194 = scmp.ne.s32.totalorder %s185, %s186
      %p195 = scmp.eq.s32.totalorder %s28, 0
      %p196 = por %p194, %p195
      %p197 = scmp.ne.s32.totalorder %s185, %s186
      %p198 = scmp.eq.s32.totalorder %s29, 1
      %p199 = por %p197, %p198
      %p201 = scmp.ne.s32.totalorder %s186, %s200
      %p202 = scmp.eq.s32.totalorder %s29, 0
      %p203 = por %p201, %p202
      %s205 = sadd.s32 %s204, 1
      %p208 = scmp.eq.s32.totalorder %s23, 1
      %p209 = scmp.ne.s32.totalorder %s204, %s206
      %p210 = scmp.eq.s32.totalorder %s23, 0
      %p211 = por %p209, %p210
      %p212 = scmp.ne.s32.totalorder %s204, %s206
      %p213 = scmp.eq.s32.totalorder %s28, 1
      %p214 = por %p212, %p213
      %p215 = scmp.ne.s32.totalorder %s206, %s207
      %p216 = scmp.eq.s32.totalorder %s28, 0
      %p217 = por %p215, %p216
      %p218 = scmp.ne.s32.totalorder %s206, %s207
      %p219 = scmp.eq.s32.totalorder %s29, 1
      %p220 = por %p218, %p219
      %p222 = scmp.ne.s32.totalorder %s207, %s221
      %p223 = scmp.eq.s32.totalorder %s29, 0
      %p224 = por %p222, %p223
      %s226 = sadd.s32 %s225, 1
      %p229 = scmp.eq.s32.totalorder %s23, 1
      %p230 = scmp.ne.s32.totalorder %s225, %s227
      %p231 = scmp.eq.s32.totalorder %s23, 0
      %p232 = por %p230, %p231
      %p233 = scmp.ne.s32.totalorder %s225, %s227
      %p234 = scmp.eq.s32.totalorder %s28, 1
      %p235 = por %p233, %p234
      %p236 = scmp.ne.s32.totalorder %s227, %s228
      %p237 = scmp.eq.s32.totalorder %s28, 0
      %p238 = por %p236, %p237
      %p239 = scmp.ne.s32.totalorder %s227, %s228
      %p240 = scmp.eq.s32.totalorder %s29, 1
      %p241 = por %p239, %p240
      %p243 = scmp.ne.s32.totalorder %s228, %s242
      %p244 = scmp.eq.s32.totalorder %s29, 0
      %p245 = por %p243, %p244
      %s247 = sadd.s32 %s246, 1
      %p250 = scmp.eq.s32.totalorder %s23, 1
      %p251 = scmp.ne.s32.totalorder %s246, %s248
      %p252 = scmp.eq.s32.totalorder %s23, 0
      %p253 = por %p251, %p252
      %p254 = scmp.ne.s32.totalorder %s246, %s248
      %p255 = scmp.eq.s32.totalorder %s28, 1
      %p256 = por %p254, %p255
      %p257 = scmp.ne.s32.totalorder %s248, %s249
      %p258 = scmp.eq.s32.totalorder %s28, 0
      %p259 = por %p257, %p258
      %p260 = scmp.ne.s32.totalorder %s248, %s249
      %p261 = scmp.eq.s32.totalorder %s29, 1
      %p262 = por %p260, %p261
      %p264 = scmp.ne.s32.totalorder %s249, %s263
      %p265 = scmp.eq.s32.totalorder %s29, 0
      %p266 = por %p264, %p265
      %s268 = sadd.s32 %s267, 1
      %p271 = scmp.eq.s32.totalorder %s23, 1
      %p272 = scmp.ne.s32.totalorder %s267, %s269
      %p273 = scmp.eq.s32.totalorder %s23, 0
      %p274 = por %p272, %p273
      %p275 = scmp.ne.s32.totalorder %s267, %s269
      %p276 = scmp.eq.s32.totalorder %s28, 1
      %p277 = por %p275, %p276
      %p278 = scmp.ne.s32.totalorder %s269, %s270
      %p279 = scmp.eq.s32.totalorder %s28, 0
      %p280 = por %p278, %p279
      %p281 = scmp.ne.s32.totalorder %s269, %s270
      %p282 = scmp.eq.s32.totalorder %s29, 1
      %p283 = por %p281, %p282
      %p285 = scmp.ne.s32.totalorder %s270, %s284
      %p286 = scmp.eq.s32.totalorder %s29, 0
      %p287 = por %p285, %p286
      %s288 = ssub.s32 %s23, %s30
      %p289 = scmp.eq.s32.totalorder %s288, 0
      %s291 = sadd.s32 %s290, 1
      %s292 = scalar_select %p289, %s290, %s291
      %p295 = pneg %p289
      %p296 = scmp.eq.s32.totalorder %s23, 1
      %p297 = por %p295, %p296
      %p298 = scmp.ne.s32.totalorder %s290, %s293
      %p299 = scmp.eq.s32.totalorder %s23, 0
      %p300 = por %p298, %p299
      %p301 = scmp.ne.s32.totalorder %s290, %s293
      %p302 = scmp.eq.s32.totalorder %s28, 1
      %p303 = por %p301, %p302
      %p304 = scmp.ne.s32.totalorder %s293, %s294
      %p305 = scmp.eq.s32.totalorder %s28, 0
      %p306 = por %p304, %p305
      %p307 = scmp.ne.s32.totalorder %s293, %s294
      %p308 = scmp.eq.s32.totalorder %s29, 1
      %p309 = por %p307, %p308
      %p311 = scmp.ne.s32.totalorder %s294, %s310
      %p312 = scmp.eq.s32.totalorder %s29, 0
      %p313 = por %p311, %p312
      %p314 = scmp.le.s32.totalorder 1, %s23
      %p315 = scmp.lt.s32.totalorder %s23, 3
      %p316 = pnand %p314, %p315
      %p317 = pneg %p316
      // Predicated region
      $region9: #{tiered_transformer_encoder_layer.3} parent=5 // pred_check
        _
      $region10: #{tiered_transformer_encoder_layer.3} parent=5 // pred_check_branch
        %319 = sbr.rel (%p316) target = $region12
      $region11: #{tiered_transformer_encoder_layer.3} parent=5 // pred_region
        %s320 = ssub.s32 %s23, 1
        // Predicated region
        $region13: #{tiered_transformer_encoder_layer.3} parent=11 // pred_check
          %p321 = pneg %p70
        $region14: #{tiered_transformer_encoder_layer.3} parent=11 // pred_check_branch
          %323 = sbr.rel (%p321) target = $region16
        $region15: #{tiered_transformer_encoder_layer.3} parent=11 // pred_region
          _
        $region16: #{tiered_transformer_encoder_layer.3} parent=11 // pred_fallthru
          _
        // Predicated region
        $region17: #{tiered_transformer_encoder_layer.3} parent=11 // pred_check
          %p324 = pneg %p91
        $region18: #{tiered_transformer_encoder_layer.3} parent=11 // pred_check_branch
          %326 = sbr.rel (%p324) target = $region20
        $region19: #{tiered_transformer_encoder_layer.3} parent=11 // pred_region
          _
        $region20: #{tiered_transformer_encoder_layer.3} parent=11 // pred_fallthru
          _
        // Predicated region
        $region21: #{tiered_transformer_encoder_layer.3} parent=11 // pred_check
          %p327 = pneg %p112
        $region22: #{tiered_transformer_encoder_layer.3} parent=11 // pred_check_branch
          %329 = sbr.rel (%p327) target = $region24
        $region23: #{tiered_transformer_encoder_layer.3} parent=11 // pred_region
          %s331 = ssub.s32 3072, 3072
          %332 = vsyncadd [#allocation3], %s331
          %s333 = sshll.u32 [#allocation2], 4
          %s334 = int_to_ptr.vmem [resolvable:$true] %s333
          %339 = dma.hbm_to_vmem [thread:$0]  %s3, 3072, %s334, [#allocation3], 192, 192, 12
        $region24: #{tiered_transformer_encoder_layer.3} parent=11 // pred_fallthru
          _
        // Predicated region
        $region25: #{tiered_transformer_encoder_layer.3} parent=11 // pred_check
          %p340 = pneg %p133
        $region26: #{tiered_transformer_encoder_layer.3} parent=11 // pred_check_branch
          %342 = sbr.rel (%p340) target = $region28
        $region27: #{tiered_transformer_encoder_layer.3} parent=11 // pred_region
          _
        $region28: #{tiered_transformer_encoder_layer.3} parent=11 // pred_fallthru
          _
        // Predicated region
        $region29: #{tiered_transformer_encoder_layer.3} parent=11 // pred_check
          %p343 = pneg %p154
        $region30: #{tiered_transformer_encoder_layer.3} parent=11 // pred_check_branch
          %345 = sbr.rel (%p343) target = $region32
        $region31: #{tiered_transformer_encoder_layer.3} parent=11 // pred_region
          _
        $region32: #{tiered_transformer_encoder_layer.3} parent=11 // pred_fallthru
          _
        // Predicated region
        $region33: #{tiered_transformer_encoder_layer.3} parent=11 // pred_check
          %p346 = pneg %p175
        $region34: #{tiered_transformer_encoder_layer.3} parent=11 // pred_check_branch
          %348 = sbr.rel (%p346) target = $region36
        $region35: #{tiered_transformer_encoder_layer.3} parent=11 // pred_region
          _
        $region36: #{tiered_transformer_encoder_layer.3} parent=11 // pred_fallthru
          _
        // Predicated region
        $region37: #{tiered_transformer_encoder_layer.3} parent=11 // pred_check
          %p349 = pneg %p196
        $region38: #{tiered_transformer_encoder_layer.3} parent=11 // pred_check_branch
          %351 = sbr.rel (%p349) target = $region40
        $region39: #{tiered_transformer_encoder_layer.3} parent=11 // pred_region
          _
        $region40: #{tiered_transformer_encoder_layer.3} parent=11 // pred_fallthru
          _
        // Predicated region
        $region41: #{tiered_transformer_encoder_layer.3} parent=11 // pred_check
          %p352 = pneg %p217
        $region42: #{tiered_transformer_encoder_layer.3} parent=11 // pred_check_branch
          %354 = sbr.rel (%p352) target = $region44
        $region43: #{tiered_transformer_encoder_layer.3} parent=11 // pred_region
          _
        $region44: #{tiered_transformer_encoder_layer.3} parent=11 // pred_fallthru
          _
        // Predicated region
        $region45: #{tiered_transformer_encoder_layer.3} parent=11 // pred_check
          %p355 = pneg %p238
        $region46: #{tiered_transformer_encoder_layer.3} parent=11 // pred_check_branch
          %357 = sbr.rel (%p355) target = $region48
        $region47: #{tiered_transformer_encoder_layer.3} parent=11 // pred_region
          _
        $region48: #{tiered_transformer_encoder_layer.3} parent=11 // pred_fallthru
          _
        // Predicated region
        $region49: #{tiered_transformer_encoder_layer.3} parent=11 // pred_check
          %p358 = pneg %p259
        $region50: #{tiered_transformer_encoder_layer.3} parent=11 // pred_check_branch
          %360 = sbr.rel (%p358) target = $region52
        $region51: #{tiered_transformer_encoder_layer.3} parent=11 // pred_region
          %s362 = ssub.s32 4096, 4096
          %363 = vsyncadd [#allocation6], %s362
          %s364 = sshll.u32 [#allocation5], 4
          %s365 = int_to_ptr.vmem [resolvable:$true] %s364
          %370 = dma.hbm_to_vmem [thread:$0]  %s10, 4096, %s365, [#allocation6], 64, 64, 4
        $region52: #{tiered_transformer_encoder_layer.3} parent=11 // pred_fallthru
          _
        // Predicated region
        $region53: #{tiered_transformer_encoder_layer.3} parent=11 // pred_check
          %p371 = pneg %p280
        $region54: #{tiered_transformer_encoder_layer.3} parent=11 // pred_check_branch
          %373 = sbr.rel (%p371) target = $region56
        $region55: #{tiered_transformer_encoder_layer.3} parent=11 // pred_region
          _
        $region56: #{tiered_transformer_encoder_layer.3} parent=11 // pred_fallthru
          _
      $region12: #{tiered_transformer_encoder_layer.3} parent=5 // pred_fallthru
        _
      %p374 = scmp.lt.s32.totalorder %s23, 2
      // Predicated region
      $region57: #{tiered_transformer_encoder_layer.3} parent=5 // pred_check
        %p375 = pneg %p374
      $region58: #{tiered_transformer_encoder_layer.3} parent=5 // pred_check_branch
        %377 = sbr.rel (%p375) target = $region60
      $region59: #{tiered_transformer_encoder_layer.3} parent=5 // pred_region
        // Predicated region
        $region61: #{tiered_transformer_encoder_layer.3} parent=59 // pred_check
          %p378 = pneg %p43
        $region62: #{tiered_transformer_encoder_layer.3} parent=59 // pred_check_branch
          %380 = sbr.rel (%p378) target = $region64
        $region63: #{tiered_transformer_encoder_layer.3} parent=59 // pred_region
          %p381 = scmp.lt.s32.totalorder %s23, 1
          %s382 = scalar_select %p381, %s23, 1
          %s383 = smul.addr %s382, 2
          %s384 = smul.addr %s383, 8
          %s385 = scalar_lea.vmem %s0, %s384
        $region64: #{tiered_transformer_encoder_layer.3} parent=59 // pred_fallthru
          _
      $region60: #{tiered_transformer_encoder_layer.3} parent=5 // pred_fallthru
        _
      %p386 = scmp.le.s32.totalorder 1, %s23
      %p387 = scmp.lt.s32.totalorder %s23, 3
      %p388 = pnand %p386, %p387
      %p389 = pneg %p388
      // Predicated region
      $region65: #{tiered_transformer_encoder_layer.3} parent=5 // pred_check
        _
      $region66: #{tiered_transformer_encoder_layer.3} parent=5 // pred_check_branch
        %391 = sbr.rel (%p388) target = $region68
      $region67: #{tiered_transformer_encoder_layer.3} parent=5 // pred_region
        %s392 = ssub.s32 %s23, 1
        // Predicated region
        $region69: #{tiered_transformer_encoder_layer.3} parent=67 // pred_check
          %p393 = pneg %p112
        $region70: #{tiered_transformer_encoder_layer.3} parent=67 // pred_check_branch
          %395 = sbr.rel (%p393) target = $region72
        $region71: #{tiered_transformer_encoder_layer.3} parent=67 // pred_region
          %396 = dma.done [#allocation3], 3072
        $region72: #{tiered_transformer_encoder_layer.3} parent=67 // pred_fallthru
          _
        // Predicated region
        $region73: #{tiered_transformer_encoder_layer.3} parent=67 // pred_check
          %p397 = pneg %p259
        $region74: #{tiered_transformer_encoder_layer.3} parent=67 // pred_check_branch
          %399 = sbr.rel (%p397) target = $region76
        $region75: #{tiered_transformer_encoder_layer.3} parent=67 // pred_region
          %400 = dma.done [#allocation6], 4096
        $region76: #{tiered_transformer_encoder_layer.3} parent=67 // pred_fallthru
          _
        %p401 = scmp.lt.s32.totalorder %s28, 1
        %s402 = scalar_select %p401, %s28, 1
        %s403 = smul.addr %s402, 2
        %s404 = smul.addr %s403, 8
        %s405 = scalar_lea.vmem %s0, %s404
        %p406 = pneg %p49
        %p407 = pneg %p46
        %p408 = pneg %p70
        %p409 = pneg %p67
        %p410 = pneg %p91
        %p411 = pneg %p88
        %p412 = pneg %p112
        %p413 = pneg %p109
        %p414 = pneg %p133
        %p415 = pneg %p130
        %p416 = pneg %p154
        %p417 = pneg %p151
        %p418 = pneg %p175
        %p419 = pneg %p172
        %p420 = pneg %p196
        %p421 = pneg %p193
        %p422 = pneg %p217
        %p423 = pneg %p214
        %p424 = pneg %p238
        %p425 = pneg %p235
        %p426 = pneg %p259
        %p427 = pneg %p256
        %p428 = pneg %p280
        %p429 = pneg %p277
        %p430 = pneg %p306
        %p431 = pneg %p303
        %s432 = sand.u32 %s293, 1
        %s433 = scalar_lea.sflag [#allocation4], %s432
        %s434 = sand.u32 %s293, 1
        %s435 = smul.addr %s434, 16
        %s436 = scalar_lea.vmem [#allocation7], %s435
        %p437 = scmp.lt.s32.totalorder %s28, 1
        %s438 = scalar_select %p437, %s28, 1
        %s439 = smul.addr %s438, 2
        %s440 = smul.addr %s439, 8
        %s441 = scalar_lea.vmem %s0, %s440
        %v443 = vld [vmem:[%s441] sm:$0xff]
        %v444 = vld [vmem:[%s441 + $0x8] sm:$0xff]
        %v445 = vld [vmem:[%s1] sm:$0x1]
        %v446 = vld [vmem:[%s2] sm:$0x1]
        %v447 = vld [vmem:[%s5] sm:$0x1]
        %448 = vadd.xlane.f32.xlu0 %v443
        %v449 = vpop.xlane.xlu0 %448
        %450 = vadd.xlane.f32.xlu0 %v444
        %v451 = vpop.xlane.xlu0 %450
        %v452 = vrcp.pop 128.0
        %v453 = vmul.f32 %v449, %v452
        %v454 = vmul.f32 %v451, %v452
        %v455 = vsub.f32 %v443, %v453
        %v456 = vsub.f32 %v444, %v454
        %v457 = vmul.f32 %v455, %v455
        %v458 = vmul.f32 %v456, %v456
        %459 = vadd.xlane.f32.xlu0 %v457
        %v460 = vpop.xlane.xlu0 %459
        %461 = vadd.xlane.f32.xlu0 %v458
        %v462 = vpop.xlane.xlu0 %461
        %v463 = vmul.f32 %v460, %v452
        %v464 = vmul.f32 %v462, %v452
        %v465 = vadd.f32 %v463, 1e-05
        %v466 = vadd.f32 %v464, 1e-05
        %v467 = vrsqrt.pop %v465
        %v468 = vrsqrt.pop %v466
        %v469 = vmul.f32 %v455, %v467
        %v470 = vmul.f32 %v456, %v468
        %v472 = vlaneseq
        %v473 = vshrl.u32 %v472, 7
        %v474 = vsub.s32 0, %v473
        %v475 = vrot.slane %v445, %v474
        %v477 = vmul.f32 %v469, %v475
        %v478 = vmul.f32 %v470, %v475
        %v480 = vlaneseq
        %v481 = vshrl.u32 %v480, 7
        %v482 = vsub.s32 0, %v481
        %v483 = vrot.slane %v446, %v482
        %v485 = vadd.f32 %v477, %v483
        %v486 = vadd.f32 %v478, %v483
        %v487 = vpack.c.bf16 %v486, %v485
        %v488 = vld [vmem:[#allocation2] sm:$0xff]
        %v489 = vld [vmem:[#allocation2 + $0x8] sm:$0xf]
        %v490 = vld [vmem:[#allocation2 + $0xc] sm:$0xff]
        %v491 = vld [vmem:[#allocation2 + $0x14] sm:$0xf]
        %v492 = vld [vmem:[#allocation2 + $0x18] sm:$0xff]
        %v493 = vld [vmem:[#allocation2 + $0x20] sm:$0xf]
        %v494 = vld [vmem:[#allocation2 + $0x24] sm:$0xff]
        %v495 = vld [vmem:[#allocation2 + $0x2c] sm:$0xf]
        %v496 = vld [vmem:[#allocation2 + $0x30] sm:$0xff]
        %v497 = vld [vmem:[#allocation2 + $0x38] sm:$0xf]
        %v498 = vld [vmem:[#allocation2 + $0x3c] sm:$0xff]
        %v499 = vld [vmem:[#allocation2 + $0x44] sm:$0xf]
        %v500 = vld [vmem:[#allocation2 + $0x48] sm:$0xff]
        %v501 = vld [vmem:[#allocation2 + $0x50] sm:$0xf]
        %v502 = vld [vmem:[#allocation2 + $0x54] sm:$0xff]
        %v503 = vld [vmem:[#allocation2 + $0x5c] sm:$0xf]
        %v504 = vld [vmem:[#allocation2 + $0x60] sm:$0xff]
        %v505 = vld [vmem:[#allocation2 + $0x68] sm:$0xf]
        %v506 = vld [vmem:[#allocation2 + $0x6c] sm:$0xff]
        %v507 = vld [vmem:[#allocation2 + $0x74] sm:$0xf]
        %v508 = vld [vmem:[#allocation2 + $0x78] sm:$0xff]
        %v509 = vld [vmem:[#allocation2 + $0x80] sm:$0xf]
        %v510 = vld [vmem:[#allocation2 + $0x84] sm:$0xff]
        %v511 = vld [vmem:[#allocation2 + $0x8c] sm:$0xf]
        %v512 = vld [vmem:[#allocation2 + $0x90] sm:$0xff]
        %v513 = vld [vmem:[#allocation2 + $0x98] sm:$0xf]
        %v514 = vld [vmem:[#allocation2 + $0x9c] sm:$0xff]
        %v515 = vld [vmem:[#allocation2 + $0xa4] sm:$0xf]
        %v516 = vld [vmem:[#allocation2 + $0xa8] sm:$0xff]
        %v517 = vld [vmem:[#allocation2 + $0xb0] sm:$0xf]
        %v518 = vld [vmem:[#allocation2 + $0xb4] sm:$0xff]
        %v519 = vld [vmem:[#allocation2 + $0xbc] sm:$0xf]
        %v552 = vunpack.c.l.b16 %v488
        %v553 = vunpack.c.h.b16 %v488
        %v554 = vunpack.c.l.b16 %v489
        %v555 = vunpack.c.l.b16 %v490
        %v556 = vunpack.c.h.b16 %v490
        %v557 = vunpack.c.l.b16 %v491
        %v558 = vunpack.c.l.b16 %v492
        %v559 = vunpack.c.h.b16 %v492
        %v560 = vunpack.c.l.b16 %v493
        %v561 = vunpack.c.l.b16 %v494
        %v562 = vunpack.c.h.b16 %v494
        %v563 = vunpack.c.l.b16 %v495
        %v564 = vunpack.c.l.b16 %v496
        %v565 = vunpack.c.h.b16 %v496
        %v566 = vunpack.c.l.b16 %v497
        %v567 = vunpack.c.l.b16 %v498
        %v568 = vunpack.c.h.b16 %v498
        %v569 = vunpack.c.l.b16 %v499
        %v570 = vunpack.c.l.b16 %v500
        %v571 = vunpack.c.h.b16 %v500
        %v572 = vunpack.c.l.b16 %v501
        %v573 = vunpack.c.l.b16 %v502
        %v574 = vunpack.c.h.b16 %v502
        %v575 = vunpack.c.l.b16 %v503
        %v576 = vunpack.c.l.b16 %v504
        %v577 = vunpack.c.h.b16 %v504
        %v578 = vunpack.c.l.b16 %v505
        %v579 = vunpack.c.l.b16 %v506
        %v580 = vunpack.c.h.b16 %v506
        %v581 = vunpack.c.l.b16 %v507
        %v582 = vunpack.c.l.b16 %v508
        %v583 = vunpack.c.h.b16 %v508
        %v584 = vunpack.c.l.b16 %v509
        %v585 = vunpack.c.l.b16 %v510
        %v586 = vunpack.c.h.b16 %v510
        %v587 = vunpack.c.l.b16 %v511
        %v588 = vunpack.c.l.b16 %v512
        %v589 = vunpack.c.h.b16 %v512
        %v590 = vunpack.c.l.b16 %v513
        %v591 = vunpack.c.l.b16 %v514
        %v592 = vunpack.c.h.b16 %v514
        %v593 = vunpack.c.l.b16 %v515
        %v594 = vunpack.c.l.b16 %v516
        %v595 = vunpack.c.h.b16 %v516
        %v596 = vunpack.c.l.b16 %v517
        %v597 = vunpack.c.l.b16 %v518
        %v598 = vunpack.c.h.b16 %v518
        %v599 = vunpack.c.l.b16 %v519
        %v600 = vpack.c.b16 %v555, %v552
        %v601 = vpack.c.b16 %v556, %v553
        %v602 = vpack.c.b16 %v557, %v554
        %v603 = vpack.c.b16 %v561, %v558
        %v604 = vpack.c.b16 %v562, %v559
        %v605 = vpack.c.b16 %v563, %v560
        %v606 = vpack.c.b16 %v567, %v564
        %v607 = vpack.c.b16 %v568, %v565
        %v608 = vpack.c.b16 %v569, %v566
        %v609 = vpack.c.b16 %v573, %v570
        %v610 = vpack.c.b16 %v574, %v571
        %v611 = vpack.c.b16 %v575, %v572
        %v612 = vpack.c.b16 %v579, %v576
        %v613 = vpack.c.b16 %v580, %v577
        %v614 = vpack.c.b16 %v581, %v578
        %v615 = vpack.c.b16 %v585, %v582
        %v616 = vpack.c.b16 %v586, %v583
        %v617 = vpack.c.b16 %v587, %v584
        %v618 = vpack.c.b16 %v591, %v588
        %v619 = vpack.c.b16 %v592, %v589
        %v620 = vpack.c.b16 %v593, %v590
        %v621 = vpack.c.b16 %v597, %v594
        %v622 = vpack.c.b16 %v598, %v595
        %v623 = vpack.c.b16 %v599, %v596
        %648 = vmatprep.subr.bf16.mxu0 %v622
        %649 = vmatpush1.bf16.msra.mxu0 %v621
        %650 = vmatprep.subr.bf16.mxu0 %v619
        %651 = vmatpush1.bf16.msra.mxu0 %v618
        %652 = vmatprep.subr.bf16.mxu0 %v616
        %653 = vmatpush1.bf16.msra.mxu0 %v615
        %654 = vmatprep.subr.bf16.mxu0 %v613
        %655 = vmatpush1.bf16.msra.mxu0 %v612
        %656 = vmatprep.subr.bf16.mxu0 %v610
        %657 = vmatpush1.bf16.msra.mxu0 %v609
        %658 = vmatprep.subr.bf16.mxu0 %v607
        %659 = vmatpush1.bf16.msra.mxu0 %v606
        %660 = vmatprep.subr.bf16.mxu0 %v604
        %661 = vmatpush1.bf16.msra.mxu0 %v603
        %662 = vmatprep.subr.bf16.mxu0 %v601
        %663 = vmatpush1.bf16.msra.mxu0 %v600
        %664 = vmatprep.subr.bf16.mxu0 0
        %665 = vmatpush2.bf16.msra.mxu0 0
        %666 = vmatprep.subr.bf16.mxu0 0
        %667 = vmatpush2.bf16.msra.mxu0 0
        %668 = vmatprep.subr.bf16.mxu0 0
        %669 = vmatpush2.bf16.msra.mxu0 0
        %670 = vmatprep.subr.bf16.mxu0 0
        %671 = vmatpush2.bf16.msra.mxu0 0
        %672 = vmatprep.subr.bf16.mxu0 0
        %673 = vmatpush2.bf16.msra.mxu0 0
        %674 = vmatprep.subr.bf16.mxu0 0
        %675 = vmatpush2.bf16.msra.mxu0 0
        %676 = vmatprep.subr.bf16.mxu0 0
        %677 = vmatpush2.bf16.msra.mxu0 0
        %678 = vmatprep.subr.bf16.mxu0 0
        %679 = vmatpush2.bf16.msra.mxu0 0
        %680 = vmatprep.mubr.bf16.mxu0 0
        %681 = vmatmul.mubr.bf16.gmra.mxu0 %v487
        %v682 = vpop.f32.mrf.mxu0
        %v683 = vadd.f32 0.0, %v682
        %v684 = vpop.f32.mrf.mxu0
        %v685 = vadd.f32 0.0, %v684
        %v686 = vpop.f32.mrf.mxu0
        %v687 = vadd.f32 0.0, %v686
        %v688 = vpop.f32.mrf.mxu0
        %v689 = vadd.f32 0.0, %v688
        %690 = vdwg.mxu0
        %691 = vmatprep.subr.bf16.mxu0 0
        %692 = vmatpush1.bf16.msra.mxu0 %v623
        %693 = vmatprep.subr.bf16.mxu0 0
        %694 = vmatpush1.bf16.msra.mxu0 %v620
        %695 = vmatprep.subr.bf16.mxu0 0
        %696 = vmatpush1.bf16.msra.mxu0 %v617
        %697 = vmatprep.subr.bf16.mxu0 0
        %698 = vmatpush1.bf16.msra.mxu0 %v614
        %699 = vmatprep.subr.bf16.mxu0 0
        %700 = vmatpush1.bf16.msra.mxu0 %v611
        %701 = vmatprep.subr.bf16.mxu0 0
        %702 = vmatpush1.bf16.msra.mxu0 %v608
        %703 = vmatprep.subr.bf16.mxu0 0
        %704 = vmatpush1.bf16.msra.mxu0 %v605
        %705 = vmatprep.subr.bf16.mxu0 0
        %706 = vmatpush1.bf16.msra.mxu0 %v602
        %707 = vmatprep.subr.bf16.mxu0 0
        %708 = vmatpush2.bf16.msra.mxu0 0
        %709 = vmatprep.subr.bf16.mxu0 0
        %710 = vmatpush2.bf16.msra.mxu0 0
        %711 = vmatprep.subr.bf16.mxu0 0
        %712 = vmatpush2.bf16.msra.mxu0 0
        %713 = vmatprep.subr.bf16.mxu0 0
        %714 = vmatpush2.bf16.msra.mxu0 0
        %715 = vmatprep.subr.bf16.mxu0 0
        %716 = vmatpush2.bf16.msra.mxu0 0
        %717 = vmatprep.subr.bf16.mxu0 0
        %718 = vmatpush2.bf16.msra.mxu0 0
        %719 = vmatprep.subr.bf16.mxu0 0
        %720 = vmatpush2.bf16.msra.mxu0 0
        %721 = vmatprep.subr.bf16.mxu0 0
        %722 = vmatpush2.bf16.msra.mxu0 0
        %723 = vmatprep.mubr.bf16.mxu0 0
        %724 = vmatmul.mubr.bf16.gmra.mxu0 %v487
        %v725 = vpop.f32.mrf.mxu0
        %v726 = vadd.f32 0.0, %v725
        %v727 = vpop.f32.mrf.mxu0
        %v728 = vpop.f32.mrf.mxu0
        %v729 = vadd.f32 0.0, %v728
        %v730 = vpop.f32.mrf.mxu0
        %731 = vdwg.mxu0
        %v732 = vlaneseq
        %v733 = vshrl.u32 %v732, 7
        %v734 = vadd.s32 %v733, 8
        %v735 = vlaneseq
        %v736 = vand.u32 %v735, 127
        %vm737 = vcmp.le.s32.totalorder %v736, %v733
        %vm738 = vcmp.le.s32.totalorder %v736, %v734
        %v739 = vsel %vm737, 0.0, -1e+30
        %v740 = vsel %vm738, 0.0, -1e+30
        %v741 = vpack.c.bf16 %v687, %v683
        %v742 = vpack.c.bf16 %v689, %v685
        %v743 = vpack.c.bf16 %v729, %v726
        %vm744 = vcmask 261120
        %v746 = vsel %vm744, %v741, 0
        %v749 = vsel %vm744, %v742, 0
        %751 = vmatprep.subr.bf16.mxu0 0
        %752 = vmatpush1.bf16.xpose.msra.mxu0 0
        %753 = vmatprep.subr.bf16.mxu0 0
        %754 = vmatpush1.bf16.xpose.msra.mxu0 0
        %755 = vmatprep.subr.bf16.mxu0 0
        %756 = vmatpush1.bf16.xpose.msra.mxu0 0
        %757 = vmatprep.subr.bf16.mxu0 0
        %758 = vmatpush1.bf16.xpose.msra.mxu0 0
        %759 = vmatprep.subr.bf16.mxu0 0
        %760 = vmatpush1.bf16.xpose.msra.mxu0 0
        %761 = vmatprep.subr.bf16.mxu0 0
        %762 = vmatpush1.bf16.xpose.msra.mxu0 0
        %763 = vmatprep.subr.bf16.mxu0 0
        %764 = vmatpush1.bf16.xpose.msra.mxu0 0
        %765 = vmatprep.subr.bf16.mxu0 0
        %766 = vmatpush1.bf16.xpose.msra.mxu0 %v749
        %767 = vmatprep.subr.bf16.mxu0 0
        %768 = vmatpush2.bf16.xpose.msra.mxu0 0
        %769 = vmatprep.subr.bf16.mxu0 0
        %770 = vmatpush2.bf16.xpose.msra.mxu0 0
        %771 = vmatprep.subr.bf16.mxu0 0
        %772 = vmatpush2.bf16.xpose.msra.mxu0 0
        %773 = vmatprep.subr.bf16.mxu0 0
        %774 = vmatpush2.bf16.xpose.msra.mxu0 0
        %775 = vmatprep.subr.bf16.mxu0 0
        %776 = vmatpush2.bf16.xpose.msra.mxu0 0
        %777 = vmatprep.subr.bf16.mxu0 0
        %778 = vmatpush2.bf16.xpose.msra.mxu0 0
        %779 = vmatprep.subr.bf16.mxu0 0
        %780 = vmatpush2.bf16.xpose.msra.mxu0 0
        %781 = vmatprep.subr.bf16.mxu0 0
        %782 = vmatpush2.bf16.xpose.msra.mxu0 0
        %783 = vmatprep.mubr.bf16.mxu0 0
        %784 = vmatmul.mubr.bf16.gmra.mxu0 %v746
        %v785 = vpop.f32.mrf.mxu0
        %v786 = vadd.f32 0.0, %v785
        %v787 = vpop.f32.mrf.mxu0
        %v788 = vpop.f32.mrf.mxu0
        %v789 = vadd.f32 0.0, %v788
        %v790 = vpop.f32.mrf.mxu0
        %791 = vdwg.mxu0
        %v792 = vmul.f32 %v786, 0.17677669
        %v793 = vmul.f32 %v789, 0.17677669
        %v794 = vadd.f32 %v792, %v739
        %v795 = vadd.f32 %v793, %v740
        %vm796 = vcmask 130048
        %v797 = vsel %vm796, %v794, -inf
        %798 = vmax.xlane.f32.xlu0 %v797
        %v799 = vpop.xlane.xlu0 %798
        %v800 = vsel %vm796, %v795, -inf
        %801 = vmax.xlane.f32.xlu0 %v800
        %v802 = vpop.xlane.xlu0 %801
        %v803 = vsub.f32 %v794, %v799
        %v804 = vsub.f32 %v795, %v802
        %v805 = vmul.f32 %v803, 1.442695
        %v806 = vpow.pop %v805
        %v807 = vmul.f32 %v804, 1.442695
        %v808 = vpow.pop %v807
        %v809 = vsel %vm796, %v806, 0.0
        %810 = vadd.xlane.f32.xlu0 %v809
        %v811 = vpop.xlane.xlu0 %810
        %v812 = vsel %vm796, %v808, 0.0
        %813 = vadd.xlane.f32.xlu0 %v812
        %v814 = vpop.xlane.xlu0 %813
        %v815 = vrcp.pop %v811
        %v816 = vmul.f32 1.0, %v815
        %v817 = vrcp.pop %v814
        %v818 = vmul.f32 1.0, %v817
        %v819 = vmul.f32 %v806, %v816
        %v820 = vmul.f32 %v808, %v818
        %v821 = vpack.c.bf16 %v820, %v819
        %v823 = vsel %vm796, %v821, 0
        %825 = vmatprep.subr.bf16.mxu0 0
        %826 = vmatpush1.bf16.msra.mxu0 0
        %827 = vmatprep.subr.bf16.mxu0 0
        %828 = vmatpush1.bf16.msra.mxu0 0
        %829 = vmatprep.subr.bf16.mxu0 0
        %830 = vmatpush1.bf16.msra.mxu0 0
        %831 = vmatprep.subr.bf16.mxu0 0
        %832 = vmatpush1.bf16.msra.mxu0 0
        %833 = vmatprep.subr.bf16.mxu0 0
        %834 = vmatpush1.bf16.msra.mxu0 0
        %835 = vmatprep.subr.bf16.mxu0 0
        %836 = vmatpush1.bf16.msra.mxu0 0
        %837 = vmatprep.subr.bf16.mxu0 0
        %838 = vmatpush1.bf16.msra.mxu0 0
        %839 = vmatprep.subr.bf16.mxu0 0
        %840 = vmatpush1.bf16.msra.mxu0 %v743
        %841 = vmatprep.subr.bf16.mxu0 0
        %842 = vmatpush2.bf16.msra.mxu0 0
        %843 = vmatprep.subr.bf16.mxu0 0
        %844 = vmatpush2.bf16.msra.mxu0 0
        %845 = vmatprep.subr.bf16.mxu0 0
        %846 = vmatpush2.bf16.msra.mxu0 0
        %847 = vmatprep.subr.bf16.mxu0 0
        %848 = vmatpush2.bf16.msra.mxu0 0
        %849 = vmatprep.subr.bf16.mxu0 0
        %850 = vmatpush2.bf16.msra.mxu0 0
        %851 = vmatprep.subr.bf16.mxu0 0
        %852 = vmatpush2.bf16.msra.mxu0 0
        %853 = vmatprep.subr.bf16.mxu0 0
        %854 = vmatpush2.bf16.msra.mxu0 0
        %855 = vmatprep.subr.bf16.mxu0 0
        %856 = vmatpush2.bf16.msra.mxu0 0
        %857 = vmatprep.mubr.bf16.mxu0 0
        %858 = vmatmul.mubr.bf16.gmra.mxu0 %v823
        %v859 = vpop.f32.mrf.mxu0
        %v860 = vadd.f32 0.0, %v859
        %v861 = vpop.f32.mrf.mxu0
        %v862 = vpop.f32.mrf.mxu0
        %v863 = vadd.f32 0.0, %v862
        %v864 = vpop.f32.mrf.mxu0
        %865 = vdwg.mxu0
        %v866 = vpack.c.bf16 %v863, %v860
        %v867 = vld [vmem:[%s4] sm:$0xf]
        %v868 = vld [vmem:[%s4 + $0x4] sm:$0xf]
        %v869 = vld [vmem:[%s4 + $0x8] sm:$0xf]
        %v870 = vld [vmem:[%s4 + $0xc] sm:$0xf]
        %872 = vrot.lane.b32.xlu0 %v741, 96
        %v873 = vpop.permute.xlu0 %872
        %875 = vrot.lane.b32.xlu0 %v742, 96
        %v876 = vpop.permute.xlu0 %875
        %v878 = vsel %vm744, %v873, 0
        %v881 = vsel %vm744, %v876, 0
        %883 = vmatprep.subr.bf16.mxu0 0
        %884 = vmatpush1.bf16.xpose.msra.mxu0 0
        %885 = vmatprep.subr.bf16.mxu0 0
        %886 = vmatpush1.bf16.xpose.msra.mxu0 0
        %887 = vmatprep.subr.bf16.mxu0 0
        %888 = vmatpush1.bf16.xpose.msra.mxu0 0
        %889 = vmatprep.subr.bf16.mxu0 0
        %890 = vmatpush1.bf16.xpose.msra.mxu0 0
        %891 = vmatprep.subr.bf16.mxu0 0
        %892 = vmatpush1.bf16.xpose.msra.mxu0 0
        %893 = vmatprep.subr.bf16.mxu0 0
        %894 = vmatpush1.bf16.xpose.msra.mxu0 0
        %895 = vmatprep.subr.bf16.mxu0 0
        %896 = vmatpush1.bf16.xpose.msra.mxu0 0
        %897 = vmatprep.subr.bf16.mxu0 0
        %898 = vmatpush1.bf16.xpose.msra.mxu0 %v881
        %899 = vmatprep.subr.bf16.mxu0 0
        %900 = vmatpush2.bf16.xpose.msra.mxu0 0
        %901 = vmatprep.subr.bf16.mxu0 0
        %902 = vmatpush2.bf16.xpose.msra.mxu0 0
        %903 = vmatprep.subr.bf16.mxu0 0
        %904 = vmatpush2.bf16.xpose.msra.mxu0 0
        %905 = vmatprep.subr.bf16.mxu0 0
        %906 = vmatpush2.bf16.xpose.msra.mxu0 0
        %907 = vmatprep.subr.bf16.mxu0 0
        %908 = vmatpush2.bf16.xpose.msra.mxu0 0
        %909 = vmatprep.subr.bf16.mxu0 0
        %910 = vmatpush2.bf16.xpose.msra.mxu0 0
        %911 = vmatprep.subr.bf16.mxu0 0
        %912 = vmatpush2.bf16.xpose.msra.mxu0 0
        %913 = vmatprep.subr.bf16.mxu0 0
        %914 = vmatpush2.bf16.xpose.msra.mxu0 0
        %915 = vmatprep.mubr.bf16.mxu0 0
        %916 = vmatmul.mubr.bf16.gmra.mxu0 %v878
        %v917 = vpop.f32.mrf.mxu0
        %v918 = vadd.f32 0.0, %v917
        %v919 = vpop.f32.mrf.mxu0
        %v920 = vpop.f32.mrf.mxu0
        %v921 = vadd.f32 0.0, %v920
        %v922 = vpop.f32.mrf.mxu0
        %923 = vdwg.mxu0
        %v924 = vmul.f32 %v918, 0.17677669
        %v925 = vmul.f32 %v921, 0.17677669
        %v926 = vadd.f32 %v924, %v739
        %v927 = vadd.f32 %v925, %v740
        %v928 = vsel %vm796, %v926, -inf
        %929 = vmax.xlane.f32.xlu0 %v928
        %v930 = vpop.xlane.xlu0 %929
        %v931 = vsel %vm796, %v927, -inf
        %932 = vmax.xlane.f32.xlu0 %v931
        %v933 = vpop.xlane.xlu0 %932
        %v934 = vsub.f32 %v926, %v930
        %v935 = vsub.f32 %v927, %v933
        %v936 = vmul.f32 %v934, 1.442695
        %v937 = vpow.pop %v936
        %v938 = vmul.f32 %v935, 1.442695
        %v939 = vpow.pop %v938
        %v940 = vsel %vm796, %v937, 0.0
        %941 = vadd.xlane.f32.xlu0 %v940
        %v942 = vpop.xlane.xlu0 %941
        %v943 = vsel %vm796, %v939, 0.0
        %944 = vadd.xlane.f32.xlu0 %v943
        %v945 = vpop.xlane.xlu0 %944
        %v946 = vrcp.pop %v942
        %v947 = vmul.f32 1.0, %v946
        %v948 = vrcp.pop %v945
        %v949 = vmul.f32 1.0, %v948
        %v950 = vmul.f32 %v937, %v947
        %v951 = vmul.f32 %v939, %v949
        %v952 = vpack.c.bf16 %v951, %v950
        %954 = vrot.lane.b32.xlu0 %v743, 96
        %v955 = vpop.permute.xlu0 %954
        %v958 = vsel %vm796, %v952, 0
        %960 = vmatprep.subr.bf16.mxu0 0
        %961 = vmatpush1.bf16.msra.mxu0 0
        %962 = vmatprep.subr.bf16.mxu0 0
        %963 = vmatpush1.bf16.msra.mxu0 0
        %964 = vmatprep.subr.bf16.mxu0 0
        %965 = vmatpush1.bf16.msra.mxu0 0
        %966 = vmatprep.subr.bf16.mxu0 0
        %967 = vmatpush1.bf16.msra.mxu0 0
        %968 = vmatprep.subr.bf16.mxu0 0
        %969 = vmatpush1.bf16.msra.mxu0 0
        %970 = vmatprep.subr.bf16.mxu0 0
        %971 = vmatpush1.bf16.msra.mxu0 0
        %972 = vmatprep.subr.bf16.mxu0 0
        %973 = vmatpush1.bf16.msra.mxu0 0
        %974 = vmatprep.subr.bf16.mxu0 0
        %975 = vmatpush1.bf16.msra.mxu0 %v955
        %976 = vmatprep.subr.bf16.mxu0 0
        %977 = vmatpush2.bf16.msra.mxu0 0
        %978 = vmatprep.subr.bf16.mxu0 0
        %979 = vmatpush2.bf16.msra.mxu0 0
        %980 = vmatprep.subr.bf16.mxu0 0
        %981 = vmatpush2.bf16.msra.mxu0 0
        %982 = vmatprep.subr.bf16.mxu0 0
        %983 = vmatpush2.bf16.msra.mxu0 0
        %984 = vmatprep.subr.bf16.mxu0 0
        %985 = vmatpush2.bf16.msra.mxu0 0
        %986 = vmatprep.subr.bf16.mxu0 0
        %987 = vmatpush2.bf16.msra.mxu0 0
        %988 = vmatprep.subr.bf16.mxu0 0
        %989 = vmatpush2.bf16.msra.mxu0 0
        %990 = vmatprep.subr.bf16.mxu0 0
        %991 = vmatpush2.bf16.msra.mxu0 0
        %992 = vmatprep.mubr.bf16.mxu0 0
        %993 = vmatmul.mubr.bf16.gmra.mxu0 %v958
        %v994 = vpop.f32.mrf.mxu0
        %v995 = vadd.f32 0.0, %v994
        %v996 = vpop.f32.mrf.mxu0
        %v997 = vpop.f32.mrf.mxu0
        %v998 = vadd.f32 0.0, %v997
        %v999 = vpop.f32.mrf.mxu0
        %1000 = vdwg.mxu0
        %v1001 = vpack.c.bf16 %v998, %v995
        %v1002 = vld [vmem:[%s4 + $0x10] sm:$0xf]
        %v1003 = vld [vmem:[%s4 + $0x14] sm:$0xf]
        %v1004 = vld [vmem:[%s4 + $0x18] sm:$0xf]
        %v1005 = vld [vmem:[%s4 + $0x1c] sm:$0xf]
        %v1010 = vunpack.c.l.b16 %v1002
        %v1011 = vunpack.c.l.b16 %v1003
        %v1012 = vunpack.c.l.b16 %v1004
        %v1013 = vunpack.c.l.b16 %v1005
        %v1014 = vpack.c.b16 %v1011, %v1010
        %v1015 = vpack.c.b16 %v1013, %v1012
        %v1019 = vsel %vm744, %v1001, 0
        %1021 = vmatprep.subr.bf16.mxu0 0
        %1022 = vmatpush1.bf16.msra.mxu0 0
        %1023 = vmatprep.subr.bf16.mxu0 0
        %1024 = vmatpush1.bf16.msra.mxu0 0
        %1025 = vmatprep.subr.bf16.mxu0 0
        %1026 = vmatpush1.bf16.msra.mxu0 0
        %1027 = vmatprep.subr.bf16.mxu0 0
        %1028 = vmatpush1.bf16.msra.mxu0 0
        %1029 = vmatprep.subr.bf16.mxu0 0
        %1030 = vmatpush1.bf16.msra.mxu0 0
        %1031 = vmatprep.subr.bf16.mxu0 0
        %1032 = vmatpush1.bf16.msra.mxu0 0
        %1033 = vmatprep.subr.bf16.mxu0 0
        %1034 = vmatpush1.bf16.msra.mxu0 %v1015
        %1035 = vmatprep.subr.bf16.mxu0 0
        %1036 = vmatpush1.bf16.msra.mxu0 %v1014
        %1037 = vmatprep.subr.bf16.mxu0 0
        %1038 = vmatpush2.bf16.msra.mxu0 0
        %1039 = vmatprep.subr.bf16.mxu0 0
        %1040 = vmatpush2.bf16.msra.mxu0 0
        %1041 = vmatprep.subr.bf16.mxu0 0
        %1042 = vmatpush2.bf16.msra.mxu0 0
        %1043 = vmatprep.subr.bf16.mxu0 0
        %1044 = vmatpush2.bf16.msra.mxu0 0
        %1045 = vmatprep.subr.bf16.mxu0 0
        %1046 = vmatpush2.bf16.msra.mxu0 0
        %1047 = vmatprep.subr.bf16.mxu0 0
        %1048 = vmatpush2.bf16.msra.mxu0 0
        %1049 = vmatprep.subr.bf16.mxu0 0
        %1050 = vmatpush2.bf16.msra.mxu0 0
        %1051 = vmatprep.subr.bf16.mxu0 0
        %1052 = vmatpush2.bf16.msra.mxu0 0
        %1053 = vmatprep.mubr.bf16.mxu0 0
        %1054 = vmatmul.mubr.bf16.gmra.mxu0 %v1019
        %v1055 = vpop.f32.mrf.mxu0
        %v1056 = vadd.f32 0.0, %v1055
        %v1057 = vpop.f32.mrf.mxu0
        %v1058 = vpop.f32.mrf.mxu0
        %v1059 = vadd.f32 0.0, %v1058
        %v1060 = vpop.f32.mrf.mxu0
        %1061 = vdwg.mxu0
        %v1066 = vunpack.c.l.b16 %v867
        %v1067 = vunpack.c.l.b16 %v868
        %v1068 = vunpack.c.l.b16 %v869
        %v1069 = vunpack.c.l.b16 %v870
        %v1070 = vpack.c.b16 %v1067, %v1066
        %v1071 = vpack.c.b16 %v1069, %v1068
        %v1075 = vsel %vm744, %v866, 0
        %1077 = vmatprep.subr.bf16.mxu0 0
        %1078 = vmatpush1.bf16.msra.mxu0 0
        %1079 = vmatprep.subr.bf16.mxu0 0
        %1080 = vmatpush1.bf16.msra.mxu0 0
        %1081 = vmatprep.subr.bf16.mxu0 0
        %1082 = vmatpush1.bf16.msra.mxu0 0
        %1083 = vmatprep.subr.bf16.mxu0 0
        %1084 = vmatpush1.bf16.msra.mxu0 0
        %1085 = vmatprep.subr.bf16.mxu0 0
        %1086 = vmatpush1.bf16.msra.mxu0 0
        %1087 = vmatprep.subr.bf16.mxu0 0
        %1088 = vmatpush1.bf16.msra.mxu0 0
        %1089 = vmatprep.subr.bf16.mxu0 0
        %1090 = vmatpush1.bf16.msra.mxu0 %v1071
        %1091 = vmatprep.subr.bf16.mxu0 0
        %1092 = vmatpush1.bf16.msra.mxu0 %v1070
        %1093 = vmatprep.subr.bf16.mxu0 0
        %1094 = vmatpush2.bf16.msra.mxu0 0
        %1095 = vmatprep.subr.bf16.mxu0 0
        %1096 = vmatpush2.bf16.msra.mxu0 0
        %1097 = vmatprep.subr.bf16.mxu0 0
        %1098 = vmatpush2.bf16.msra.mxu0 0
        %1099 = vmatprep.subr.bf16.mxu0 0
        %1100 = vmatpush2.bf16.msra.mxu0 0
        %1101 = vmatprep.subr.bf16.mxu0 0
        %1102 = vmatpush2.bf16.msra.mxu0 0
        %1103 = vmatprep.subr.bf16.mxu0 0
        %1104 = vmatpush2.bf16.msra.mxu0 0
        %1105 = vmatprep.subr.bf16.mxu0 0
        %1106 = vmatpush2.bf16.msra.mxu0 0
        %1107 = vmatprep.subr.bf16.mxu0 0
        %1108 = vmatpush2.bf16.msra.mxu0 0
        %1109 = vmatprep.mubr.bf16.mxu0 0
        %1110 = vmatmul.mubr.bf16.gmra.mxu0 %v1075
        %v1111 = vpop.f32.mrf.mxu0
        %v1112 = vadd.f32 %v1056, %v1111
        %v1113 = vpop.f32.mrf.mxu0
        %v1114 = vpop.f32.mrf.mxu0
        %v1115 = vadd.f32 %v1059, %v1114
        %v1116 = vpop.f32.mrf.mxu0
        %1117 = vdwg.mxu0
        %1118 = vrot.lane.b32.xlu0 %v741, 64
        %v1119 = vpop.permute.xlu0 %1118
        %1120 = vrot.lane.b32.xlu0 %v742, 64
        %v1121 = vpop.permute.xlu0 %1120
        %v1123 = vsel %vm744, %v1119, 0
        %v1126 = vsel %vm744, %v1121, 0
        %1128 = vmatprep.subr.bf16.mxu0 0
        %1129 = vmatpush1.bf16.xpose.msra.mxu0 0
        %1130 = vmatprep.subr.bf16.mxu0 0
        %1131 = vmatpush1.bf16.xpose.msra.mxu0 0
        %1132 = vmatprep.subr.bf16.mxu0 0
        %1133 = vmatpush1.bf16.xpose.msra.mxu0 0
        %1134 = vmatprep.subr.bf16.mxu0 0
        %1135 = vmatpush1.bf16.xpose.msra.mxu0 0
        %1136 = vmatprep.subr.bf16.mxu0 0
        %1137 = vmatpush1.bf16.xpose.msra.mxu0 0
        %1138 = vmatprep.subr.bf16.mxu0 0
        %1139 = vmatpush1.bf16.xpose.msra.mxu0 0
        %1140 = vmatprep.subr.bf16.mxu0 0
        %1141 = vmatpush1.bf16.xpose.msra.mxu0 0
        %1142 = vmatprep.subr.bf16.mxu0 0
        %1143 = vmatpush1.bf16.xpose.msra.mxu0 %v1126
        %1144 = vmatprep.subr.bf16.mxu0 0
        %1145 = vmatpush2.bf16.xpose.msra.mxu0 0
        %1146 = vmatprep.subr.bf16.mxu0 0
        %1147 = vmatpush2.bf16.xpose.msra.mxu0 0
        %1148 = vmatprep.subr.bf16.mxu0 0
        %1149 = vmatpush2.bf16.xpose.msra.mxu0 0
        %1150 = vmatprep.subr.bf16.mxu0 0
        %1151 = vmatpush2.bf16.xpose.msra.mxu0 0
        %1152 = vmatprep.subr.bf16.mxu0 0
        %1153 = vmatpush2.bf16.xpose.msra.mxu0 0
        %1154 = vmatprep.subr.bf16.mxu0 0
        %1155 = vmatpush2.bf16.xpose.msra.mxu0 0
        %1156 = vmatprep.subr.bf16.mxu0 0
        %1157 = vmatpush2.bf16.xpose.msra.mxu0 0
        %1158 = vmatprep.subr.bf16.mxu0 0
        %1159 = vmatpush2.bf16.xpose.msra.mxu0 0
        %1160 = vmatprep.mubr.bf16.mxu0 0
        %1161 = vmatmul.mubr.bf16.gmra.mxu0 %v1123
        %v1162 = vpop.f32.mrf.mxu0
        %v1163 = vadd.f32 0.0, %v1162
        %v1164 = vpop.f32.mrf.mxu0
        %v1165 = vpop.f32.mrf.mxu0
        %v1166 = vadd.f32 0.0, %v1165
        %v1167 = vpop.f32.mrf.mxu0
        %1168 = vdwg.mxu0
        %v1169 = vmul.f32 %v1163, 0.17677669
        %v1170 = vmul.f32 %v1166, 0.17677669
        %v1171 = vadd.f32 %v1169, %v739
        %v1172 = vadd.f32 %v1170, %v740
        %v1173 = vsel %vm796, %v1171, -inf
        %1174 = vmax.xlane.f32.xlu0 %v1173
        %v1175 = vpop.xlane.xlu0 %1174
        %v1176 = vsel %vm796, %v1172, -inf
        %1177 = vmax.xlane.f32.xlu0 %v1176
        %v1178 = vpop.xlane.xlu0 %1177
        %v1179 = vsub.f32 %v1171, %v1175
        %v1180 = vsub.f32 %v1172, %v1178
        %v1181 = vmul.f32 %v1179, 1.442695
        %v1182 = vpow.pop %v1181
        %v1183 = vmul.f32 %v1180, 1.442695
        %v1184 = vpow.pop %v1183
        %v1185 = vsel %vm796, %v1182, 0.0
        %1186 = vadd.xlane.f32.xlu0 %v1185
        %v1187 = vpop.xlane.xlu0 %1186
        %v1188 = vsel %vm796, %v1184, 0.0
        %1189 = vadd.xlane.f32.xlu0 %v1188
        %v1190 = vpop.xlane.xlu0 %1189
        %v1191 = vrcp.pop %v1187
        %v1192 = vmul.f32 1.0, %v1191
        %v1193 = vrcp.pop %v1190
        %v1194 = vmul.f32 1.0, %v1193
        %v1195 = vmul.f32 %v1182, %v1192
        %v1196 = vmul.f32 %v1184, %v1194
        %v1197 = vpack.c.bf16 %v1196, %v1195
        %1198 = vrot.lane.b32.xlu0 %v743, 64
        %v1199 = vpop.permute.xlu0 %1198
        %v1202 = vsel %vm796, %v1197, 0
        %1204 = vmatprep.subr.bf16.mxu0 0
        %1205 = vmatpush1.bf16.msra.mxu0 0
        %1206 = vmatprep.subr.bf16.mxu0 0
        %1207 = vmatpush1.bf16.msra.mxu0 0
        %1208 = vmatprep.subr.bf16.mxu0 0
        %1209 = vmatpush1.bf16.msra.mxu0 0
        %1210 = vmatprep.subr.bf16.mxu0 0
        %1211 = vmatpush1.bf16.msra.mxu0 0
        %1212 = vmatprep.subr.bf16.mxu0 0
        %1213 = vmatpush1.bf16.msra.mxu0 0
        %1214 = vmatprep.subr.bf16.mxu0 0
        %1215 = vmatpush1.bf16.msra.mxu0 0
        %1216 = vmatprep.subr.bf16.mxu0 0
        %1217 = vmatpush1.bf16.msra.mxu0 0
        %1218 = vmatprep.subr.bf16.mxu0 0
        %1219 = vmatpush1.bf16.msra.mxu0 %v1199
        %1220 = vmatprep.subr.bf16.mxu0 0
        %1221 = vmatpush2.bf16.msra.mxu0 0
        %1222 = vmatprep.subr.bf16.mxu0 0
        %1223 = vmatpush2.bf16.msra.mxu0 0
        %1224 = vmatprep.subr.bf16.mxu0 0
        %1225 = vmatpush2.bf16.msra.mxu0 0
        %1226 = vmatprep.subr.bf16.mxu0 0
        %1227 = vmatpush2.bf16.msra.mxu0 0
        %1228 = vmatprep.subr.bf16.mxu0 0
        %1229 = vmatpush2.bf16.msra.mxu0 0
        %1230 = vmatprep.subr.bf16.mxu0 0
        %1231 = vmatpush2.bf16.msra.mxu0 0
        %1232 = vmatprep.subr.bf16.mxu0 0
        %1233 = vmatpush2.bf16.msra.mxu0 0
        %1234 = vmatprep.subr.bf16.mxu0 0
        %1235 = vmatpush2.bf16.msra.mxu0 0
        %1236 = vmatprep.mubr.bf16.mxu0 0
        %1237 = vmatmul.mubr.bf16.gmra.mxu0 %v1202
        %v1238 = vpop.f32.mrf.mxu0
        %v1239 = vadd.f32 0.0, %v1238
        %v1240 = vpop.f32.mrf.mxu0
        %v1241 = vpop.f32.mrf.mxu0
        %v1242 = vadd.f32 0.0, %v1241
        %v1243 = vpop.f32.mrf.mxu0
        %1244 = vdwg.mxu0
        %v1245 = vpack.c.bf16 %v1242, %v1239
        %v1246 = vld [vmem:[%s4 + $0x20] sm:$0xf]
        %v1247 = vld [vmem:[%s4 + $0x24] sm:$0xf]
        %v1248 = vld [vmem:[%s4 + $0x28] sm:$0xf]
        %v1249 = vld [vmem:[%s4 + $0x2c] sm:$0xf]
        %v1254 = vunpack.c.l.b16 %v1246
        %v1255 = vunpack.c.l.b16 %v1247
        %v1256 = vunpack.c.l.b16 %v1248
        %v1257 = vunpack.c.l.b16 %v1249
        %v1258 = vpack.c.b16 %v1255, %v1254
        %v1259 = vpack.c.b16 %v1257, %v1256
        %v1263 = vsel %vm744, %v1245, 0
        %1265 = vmatprep.subr.bf16.mxu0 0
        %1266 = vmatpush1.bf16.msra.mxu0 0
        %1267 = vmatprep.subr.bf16.mxu0 0
        %1268 = vmatpush1.bf16.msra.mxu0 0
        %1269 = vmatprep.subr.bf16.mxu0 0
        %1270 = vmatpush1.bf16.msra.mxu0 0
        %1271 = vmatprep.subr.bf16.mxu0 0
        %1272 = vmatpush1.bf16.msra.mxu0 0
        %1273 = vmatprep.subr.bf16.mxu0 0
        %1274 = vmatpush1.bf16.msra.mxu0 0
        %1275 = vmatprep.subr.bf16.mxu0 0
        %1276 = vmatpush1.bf16.msra.mxu0 0
        %1277 = vmatprep.subr.bf16.mxu0 0
        %1278 = vmatpush1.bf16.msra.mxu0 %v1259
        %1279 = vmatprep.subr.bf16.mxu0 0
        %1280 = vmatpush1.bf16.msra.mxu0 %v1258
        %1281 = vmatprep.subr.bf16.mxu0 0
        %1282 = vmatpush2.bf16.msra.mxu0 0
        %1283 = vmatprep.subr.bf16.mxu0 0
        %1284 = vmatpush2.bf16.msra.mxu0 0
        %1285 = vmatprep.subr.bf16.mxu0 0
        %1286 = vmatpush2.bf16.msra.mxu0 0
        %1287 = vmatprep.subr.bf16.mxu0 0
        %1288 = vmatpush2.bf16.msra.mxu0 0
        %1289 = vmatprep.subr.bf16.mxu0 0
        %1290 = vmatpush2.bf16.msra.mxu0 0
        %1291 = vmatprep.subr.bf16.mxu0 0
        %1292 = vmatpush2.bf16.msra.mxu0 0
        %1293 = vmatprep.subr.bf16.mxu0 0
        %1294 = vmatpush2.bf16.msra.mxu0 0
        %1295 = vmatprep.subr.bf16.mxu0 0
        %1296 = vmatpush2.bf16.msra.mxu0 0
        %1297 = vmatprep.mubr.bf16.mxu0 0
        %1298 = vmatmul.mubr.bf16.gmra.mxu0 %v1263
        %v1299 = vpop.f32.mrf.mxu0
        %v1300 = vadd.f32 0.0, %v1299
        %v1301 = vpop.f32.mrf.mxu0
        %v1302 = vpop.f32.mrf.mxu0
        %v1303 = vadd.f32 0.0, %v1302
        %v1304 = vpop.f32.mrf.mxu0
        %1305 = vdwg.mxu0
        %v1306 = vadd.f32 %v1112, %v1300
        %v1307 = vadd.f32 %v1115, %v1303
        %1308 = vrot.lane.b32.xlu0 %v741, 32
        %v1309 = vpop.permute.xlu0 %1308
        %1310 = vrot.lane.b32.xlu0 %v742, 32
        %v1311 = vpop.permute.xlu0 %1310
        %v1313 = vsel %vm744, %v1309, 0
        %v1316 = vsel %vm744, %v1311, 0
        %1318 = vmatprep.subr.bf16.mxu0 0
        %1319 = vmatpush1.bf16.xpose.msra.mxu0 0
        %1320 = vmatprep.subr.bf16.mxu0 0
        %1321 = vmatpush1.bf16.xpose.msra.mxu0 0
        %1322 = vmatprep.subr.bf16.mxu0 0
        %1323 = vmatpush1.bf16.xpose.msra.mxu0 0
        %1324 = vmatprep.subr.bf16.mxu0 0
        %1325 = vmatpush1.bf16.xpose.msra.mxu0 0
        %1326 = vmatprep.subr.bf16.mxu0 0
        %1327 = vmatpush1.bf16.xpose.msra.mxu0 0
        %1328 = vmatprep.subr.bf16.mxu0 0
        %1329 = vmatpush1.bf16.xpose.msra.mxu0 0
        %1330 = vmatprep.subr.bf16.mxu0 0
        %1331 = vmatpush1.bf16.xpose.msra.mxu0 0
        %1332 = vmatprep.subr.bf16.mxu0 0
        %1333 = vmatpush1.bf16.xpose.msra.mxu0 %v1316
        %1334 = vmatprep.subr.bf16.mxu0 0
        %1335 = vmatpush2.bf16.xpose.msra.mxu0 0
        %1336 = vmatprep.subr.bf16.mxu0 0
        %1337 = vmatpush2.bf16.xpose.msra.mxu0 0
        %1338 = vmatprep.subr.bf16.mxu0 0
        %1339 = vmatpush2.bf16.xpose.msra.mxu0 0
        %1340 = vmatprep.subr.bf16.mxu0 0
        %1341 = vmatpush2.bf16.xpose.msra.mxu0 0
        %1342 = vmatprep.subr.bf16.mxu0 0
        %1343 = vmatpush2.bf16.xpose.msra.mxu0 0
        %1344 = vmatprep.subr.bf16.mxu0 0
        %1345 = vmatpush2.bf16.xpose.msra.mxu0 0
        %1346 = vmatprep.subr.bf16.mxu0 0
        %1347 = vmatpush2.bf16.xpose.msra.mxu0 0
        %1348 = vmatprep.subr.bf16.mxu0 0
        %1349 = vmatpush2.bf16.xpose.msra.mxu0 0
        %1350 = vmatprep.mubr.bf16.mxu0 0
        %1351 = vmatmul.mubr.bf16.gmra.mxu0 %v1313
        %v1352 = vpop.f32.mrf.mxu0
        %v1353 = vadd.f32 0.0, %v1352
        %v1354 = vpop.f32.mrf.mxu0
        %v1355 = vpop.f32.mrf.mxu0
        %v1356 = vadd.f32 0.0, %v1355
        %v1357 = vpop.f32.mrf.mxu0
        %1358 = vdwg.mxu0
        %v1359 = vmul.f32 %v1353, 0.17677669
        %v1360 = vmul.f32 %v1356, 0.17677669
        %v1361 = vadd.f32 %v1359, %v739
        %v1362 = vadd.f32 %v1360, %v740
        %v1363 = vsel %vm796, %v1361, -inf
        %1364 = vmax.xlane.f32.xlu0 %v1363
        %v1365 = vpop.xlane.xlu0 %1364
        %v1366 = vsel %vm796, %v1362, -inf
        %1367 = vmax.xlane.f32.xlu0 %v1366
        %v1368 = vpop.xlane.xlu0 %1367
        %v1369 = vsub.f32 %v1361, %v1365
        %v1370 = vsub.f32 %v1362, %v1368
        %v1371 = vmul.f32 %v1369, 1.442695
        %v1372 = vpow.pop %v1371
        %v1373 = vmul.f32 %v1370, 1.442695
        %v1374 = vpow.pop %v1373
        %v1375 = vsel %vm796, %v1372, 0.0
        %1376 = vadd.xlane.f32.xlu0 %v1375
        %v1377 = vpop.xlane.xlu0 %1376
        %v1378 = vsel %vm796, %v1374, 0.0
        %1379 = vadd.xlane.f32.xlu0 %v1378
        %v1380 = vpop.xlane.xlu0 %1379
        %v1381 = vrcp.pop %v1377
        %v1382 = vmul.f32 1.0, %v1381
        %v1383 = vrcp.pop %v1380
        %v1384 = vmul.f32 1.0, %v1383
        %v1385 = vmul.f32 %v1372, %v1382
        %v1386 = vmul.f32 %v1374, %v1384
        %v1387 = vpack.c.bf16 %v1386, %v1385
        %1388 = vrot.lane.b32.xlu0 %v743, 32
        %v1389 = vpop.permute.xlu0 %1388
        %v1392 = vsel %vm796, %v1387, 0
        %1394 = vmatprep.subr.bf16.mxu0 0
        %1395 = vmatpush1.bf16.msra.mxu0 0
        %1396 = vmatprep.subr.bf16.mxu0 0
        %1397 = vmatpush1.bf16.msra.mxu0 0
        %1398 = vmatprep.subr.bf16.mxu0 0
        %1399 = vmatpush1.bf16.msra.mxu0 0
        %1400 = vmatprep.subr.bf16.mxu0 0
        %1401 = vmatpush1.bf16.msra.mxu0 0
        %1402 = vmatprep.subr.bf16.mxu0 0
        %1403 = vmatpush1.bf16.msra.mxu0 0
        %1404 = vmatprep.subr.bf16.mxu0 0
        %1405 = vmatpush1.bf16.msra.mxu0 0
        %1406 = vmatprep.subr.bf16.mxu0 0
        %1407 = vmatpush1.bf16.msra.mxu0 0
        %1408 = vmatprep.subr.bf16.mxu0 0
        %1409 = vmatpush1.bf16.msra.mxu0 %v1389
        %1410 = vmatprep.subr.bf16.mxu0 0
        %1411 = vmatpush2.bf16.msra.mxu0 0
        %1412 = vmatprep.subr.bf16.mxu0 0
        %1413 = vmatpush2.bf16.msra.mxu0 0
        %1414 = vmatprep.subr.bf16.mxu0 0
        %1415 = vmatpush2.bf16.msra.mxu0 0
        %1416 = vmatprep.subr.bf16.mxu0 0
        %1417 = vmatpush2.bf16.msra.mxu0 0
        %1418 = vmatprep.subr.bf16.mxu0 0
        %1419 = vmatpush2.bf16.msra.mxu0 0
        %1420 = vmatprep.subr.bf16.mxu0 0
        %1421 = vmatpush2.bf16.msra.mxu0 0
        %1422 = vmatprep.subr.bf16.mxu0 0
        %1423 = vmatpush2.bf16.msra.mxu0 0
        %1424 = vmatprep.subr.bf16.mxu0 0
        %1425 = vmatpush2.bf16.msra.mxu0 0
        %1426 = vmatprep.mubr.bf16.mxu0 0
        %1427 = vmatmul.mubr.bf16.gmra.mxu0 %v1392
        %v1428 = vpop.f32.mrf.mxu0
        %v1429 = vadd.f32 0.0, %v1428
        %v1430 = vpop.f32.mrf.mxu0
        %v1431 = vpop.f32.mrf.mxu0
        %v1432 = vadd.f32 0.0, %v1431
        %v1433 = vpop.f32.mrf.mxu0
        %1434 = vdwg.mxu0
        %v1435 = vpack.c.bf16 %v1432, %v1429
        %v1436 = vld [vmem:[%s4 + $0x30] sm:$0xf]
        %v1437 = vld [vmem:[%s4 + $0x34] sm:$0xf]
        %v1438 = vld [vmem:[%s4 + $0x38] sm:$0xf]
        %v1439 = vld [vmem:[%s4 + $0x3c] sm:$0xf]
        %v1444 = vunpack.c.l.b16 %v1436
        %v1445 = vunpack.c.l.b16 %v1437
        %v1446 = vunpack.c.l.b16 %v1438
        %v1447 = vunpack.c.l.b16 %v1439
        %v1448 = vpack.c.b16 %v1445, %v1444
        %v1449 = vpack.c.b16 %v1447, %v1446
        %v1453 = vsel %vm744, %v1435, 0
        %1455 = vmatprep.subr.bf16.mxu0 0
        %1456 = vmatpush1.bf16.msra.mxu0 0
        %1457 = vmatprep.subr.bf16.mxu0 0
        %1458 = vmatpush1.bf16.msra.mxu0 0
        %1459 = vmatprep.subr.bf16.mxu0 0
        %1460 = vmatpush1.bf16.msra.mxu0 0
        %1461 = vmatprep.subr.bf16.mxu0 0
        %1462 = vmatpush1.bf16.msra.mxu0 0
        %1463 = vmatprep.subr.bf16.mxu0 0
        %1464 = vmatpush1.bf16.msra.mxu0 0
        %1465 = vmatprep.subr.bf16.mxu0 0
        %1466 = vmatpush1.bf16.msra.mxu0 0
        %1467 = vmatprep.subr.bf16.mxu0 0
        %1468 = vmatpush1.bf16.msra.mxu0 %v1449
        %1469 = vmatprep.subr.bf16.mxu0 0
        %1470 = vmatpush1.bf16.msra.mxu0 %v1448
        %1471 = vmatprep.subr.bf16.mxu0 0
        %1472 = vmatpush2.bf16.msra.mxu0 0
        %1473 = vmatprep.subr.bf16.mxu0 0
        %1474 = vmatpush2.bf16.msra.mxu0 0
        %1475 = vmatprep.subr.bf16.mxu0 0
        %1476 = vmatpush2.bf16.msra.mxu0 0
        %1477 = vmatprep.subr.bf16.mxu0 0
        %1478 = vmatpush2.bf16.msra.mxu0 0
        %1479 = vmatprep.subr.bf16.mxu0 0
        %1480 = vmatpush2.bf16.msra.mxu0 0
        %1481 = vmatprep.subr.bf16.mxu0 0
        %1482 = vmatpush2.bf16.msra.mxu0 0
        %1483 = vmatprep.subr.bf16.mxu0 0
        %1484 = vmatpush2.bf16.msra.mxu0 0
        %1485 = vmatprep.subr.bf16.mxu0 0
        %1486 = vmatpush2.bf16.msra.mxu0 0
        %1487 = vmatprep.mubr.bf16.mxu0 0
        %1488 = vmatmul.mubr.bf16.gmra.mxu0 %v1453
        %v1489 = vpop.f32.mrf.mxu0
        %v1490 = vadd.f32 0.0, %v1489
        %v1491 = vpop.f32.mrf.mxu0
        %v1492 = vpop.f32.mrf.mxu0
        %v1493 = vadd.f32 0.0, %v1492
        %v1494 = vpop.f32.mrf.mxu0
        %1495 = vdwg.mxu0
        %v1496 = vadd.f32 %v1306, %v1490
        %v1497 = vadd.f32 %v1307, %v1493
        %v1499 = vlaneseq
        %v1500 = vshrl.u32 %v1499, 7
        %v1501 = vsub.s32 0, %v1500
        %v1502 = vrot.slane %v447, %v1501
        %v1504 = vadd.f32 %v1496, %v1502
        %v1505 = vadd.f32 %v1497, %v1502
        %v1506 = vadd.f32 %v443, %v1504
        %v1507 = vadd.f32 %v444, %v1505
        %v1508 = vld [vmem:[%s6] sm:$0x1]
        %v1509 = vld [vmem:[%s7] sm:$0x1]
        %v1510 = vld [vmem:[%s9] sm:$0xf]
        %v1511 = vld [vmem:[%s11] sm:$0x1]
        %1512 = vadd.xlane.f32.xlu0 %v1506
        %v1513 = vpop.xlane.xlu0 %1512
        %1514 = vadd.xlane.f32.xlu0 %v1507
        %v1515 = vpop.xlane.xlu0 %1514
        %v1516 = vmul.f32 %v1513, %v452
        %v1517 = vmul.f32 %v1515, %v452
        %v1518 = vsub.f32 %v1506, %v1516
        %v1519 = vsub.f32 %v1507, %v1517
        %v1520 = vmul.f32 %v1518, %v1518
        %v1521 = vmul.f32 %v1519, %v1519
        %1522 = vadd.xlane.f32.xlu0 %v1520
        %v1523 = vpop.xlane.xlu0 %1522
        %1524 = vadd.xlane.f32.xlu0 %v1521
        %v1525 = vpop.xlane.xlu0 %1524
        %v1526 = vmul.f32 %v1523, %v452
        %v1527 = vmul.f32 %v1525, %v452
        %v1528 = vadd.f32 %v1526, 1e-05
        %v1529 = vadd.f32 %v1527, 1e-05
        %v1530 = vrsqrt.pop %v1528
        %v1531 = vrsqrt.pop %v1529
        %v1532 = vmul.f32 %v1518, %v1530
        %v1533 = vmul.f32 %v1519, %v1531
        %v1535 = vlaneseq
        %v1536 = vshrl.u32 %v1535, 7
        %v1537 = vsub.s32 0, %v1536
        %v1538 = vrot.slane %v1508, %v1537
        %v1540 = vmul.f32 %v1532, %v1538
        %v1541 = vmul.f32 %v1533, %v1538
        %v1543 = vlaneseq
        %v1544 = vshrl.u32 %v1543, 7
        %v1545 = vsub.s32 0, %v1544
        %v1546 = vrot.slane %v1509, %v1545
        %v1548 = vadd.f32 %v1540, %v1546
        %v1549 = vadd.f32 %v1541, %v1546
        %v1550 = vpack.c.bf16 %v1549, %v1548
        %v1551 = vld [vmem:[%s8] sm:$0xff]
        %v1552 = vld [vmem:[%s8 + $0x8] sm:$0xff]
        %v1553 = vld [vmem:[%s8 + $0x10] sm:$0xff]
        %v1554 = vld [vmem:[%s8 + $0x18] sm:$0xff]
        %v1555 = vld [vmem:[%s8 + $0x20] sm:$0xff]
        %v1556 = vld [vmem:[%s8 + $0x28] sm:$0xff]
        %v1557 = vld [vmem:[%s8 + $0x30] sm:$0xff]
        %v1558 = vld [vmem:[%s8 + $0x38] sm:$0xff]
        %v1559 = vld [vmem:[%s8 + $0x40] sm:$0xff]
        %v1560 = vld [vmem:[%s8 + $0x48] sm:$0xff]
        %v1561 = vld [vmem:[%s8 + $0x50] sm:$0xff]
        %v1562 = vld [vmem:[%s8 + $0x58] sm:$0xff]
        %v1563 = vld [vmem:[%s8 + $0x60] sm:$0xff]
        %v1564 = vld [vmem:[%s8 + $0x68] sm:$0xff]
        %v1565 = vld [vmem:[%s8 + $0x70] sm:$0xff]
        %v1566 = vld [vmem:[%s8 + $0x78] sm:$0xff]
        %v1567 = vld [vmem:[%s8 + $0x80] sm:$0xff]
        %v1568 = vld [vmem:[%s8 + $0x88] sm:$0xff]
        %v1569 = vld [vmem:[%s8 + $0x90] sm:$0xff]
        %v1570 = vld [vmem:[%s8 + $0x98] sm:$0xff]
        %v1571 = vld [vmem:[%s8 + $0xa0] sm:$0xff]
        %v1572 = vld [vmem:[%s8 + $0xa8] sm:$0xff]
        %v1573 = vld [vmem:[%s8 + $0xb0] sm:$0xff]
        %v1574 = vld [vmem:[%s8 + $0xb8] sm:$0xff]
        %v1575 = vld [vmem:[%s8 + $0xc0] sm:$0xff]
        %v1576 = vld [vmem:[%s8 + $0xc8] sm:$0xff]
        %v1577 = vld [vmem:[%s8 + $0xd0] sm:$0xff]
        %v1578 = vld [vmem:[%s8 + $0xd8] sm:$0xff]
        %v1579 = vld [vmem:[%s8 + $0xe0] sm:$0xff]
        %v1580 = vld [vmem:[%s8 + $0xe8] sm:$0xff]
        %v1581 = vld [vmem:[%s8 + $0xf0] sm:$0xff]
        %v1582 = vld [vmem:[%s8 + $0xf8] sm:$0xff]
        %v1584 = vlaneseq
        %v1585 = vshrl.u32 %v1584, 7
        %v1586 = vsub.s32 0, %v1585
        %v1587 = vrot.slane %v1510, %v1586
        %v1588 = vlaneseq
        %v1589 = vshrl.u32 %v1588, 7
        %v1590 = vsub.s32 1, %v1589
        %v1591 = vrot.slane %v1510, %v1590
        %v1592 = vlaneseq
        %v1593 = vshrl.u32 %v1592, 7
        %v1594 = vsub.s32 2, %v1593
        %v1595 = vrot.slane %v1510, %v1594
        %v1596 = vlaneseq
        %v1597 = vshrl.u32 %v1596, 7
        %v1598 = vsub.s32 3, %v1597
        %v1599 = vrot.slane %v1510, %v1598
        %v1636 = vunpack.c.l.b16 %v1551
        %v1637 = vunpack.c.h.b16 %v1551
        %v1638 = vunpack.c.l.b16 %v1552
        %v1639 = vunpack.c.h.b16 %v1552
        %v1640 = vunpack.c.l.b16 %v1553
        %v1641 = vunpack.c.h.b16 %v1553
        %v1642 = vunpack.c.l.b16 %v1554
        %v1643 = vunpack.c.h.b16 %v1554
        %v1644 = vunpack.c.l.b16 %v1555
        %v1645 = vunpack.c.h.b16 %v1555
        %v1646 = vunpack.c.l.b16 %v1556
        %v1647 = vunpack.c.h.b16 %v1556
        %v1648 = vunpack.c.l.b16 %v1557
        %v1649 = vunpack.c.h.b16 %v1557
        %v1650 = vunpack.c.l.b16 %v1558
        %v1651 = vunpack.c.h.b16 %v1558
        %v1652 = vunpack.c.l.b16 %v1559
        %v1653 = vunpack.c.h.b16 %v1559
        %v1654 = vunpack.c.l.b16 %v1560
        %v1655 = vunpack.c.h.b16 %v1560
        %v1656 = vunpack.c.l.b16 %v1561
        %v1657 = vunpack.c.h.b16 %v1561
        %v1658 = vunpack.c.l.b16 %v1562
        %v1659 = vunpack.c.h.b16 %v1562
        %v1660 = vunpack.c.l.b16 %v1563
        %v1661 = vunpack.c.h.b16 %v1563
        %v1662 = vunpack.c.l.b16 %v1564
        %v1663 = vunpack.c.h.b16 %v1564
        %v1664 = vunpack.c.l.b16 %v1565
        %v1665 = vunpack.c.h.b16 %v1565
        %v1666 = vunpack.c.l.b16 %v1566
        %v1667 = vunpack.c.h.b16 %v1566
        %v1668 = vunpack.c.l.b16 %v1567
        %v1669 = vunpack.c.h.b16 %v1567
        %v1670 = vunpack.c.l.b16 %v1568
        %v1671 = vunpack.c.h.b16 %v1568
        %v1672 = vunpack.c.l.b16 %v1569
        %v1673 = vunpack.c.h.b16 %v1569
        %v1674 = vunpack.c.l.b16 %v1570
        %v1675 = vunpack.c.h.b16 %v1570
        %v1676 = vunpack.c.l.b16 %v1571
        %v1677 = vunpack.c.h.b16 %v1571
        %v1678 = vunpack.c.l.b16 %v1572
        %v1679 = vunpack.c.h.b16 %v1572
        %v1680 = vunpack.c.l.b16 %v1573
        %v1681 = vunpack.c.h.b16 %v1573
        %v1682 = vunpack.c.l.b16 %v1574
        %v1683 = vunpack.c.h.b16 %v1574
        %v1684 = vunpack.c.l.b16 %v1575
        %v1685 = vunpack.c.h.b16 %v1575
        %v1686 = vunpack.c.l.b16 %v1576
        %v1687 = vunpack.c.h.b16 %v1576
        %v1688 = vunpack.c.l.b16 %v1577
        %v1689 = vunpack.c.h.b16 %v1577
        %v1690 = vunpack.c.l.b16 %v1578
        %v1691 = vunpack.c.h.b16 %v1578
        %v1692 = vunpack.c.l.b16 %v1579
        %v1693 = vunpack.c.h.b16 %v1579
        %v1694 = vunpack.c.l.b16 %v1580
        %v1695 = vunpack.c.h.b16 %v1580
        %v1696 = vunpack.c.l.b16 %v1581
        %v1697 = vunpack.c.h.b16 %v1581
        %v1698 = vunpack.c.l.b16 %v1582
        %v1699 = vunpack.c.h.b16 %v1582
        %v1700 = vpack.c.b16 %v1640, %v1636
        %v1701 = vpack.c.b16 %v1641, %v1637
        %v1702 = vpack.c.b16 %v1642, %v1638
        %v1703 = vpack.c.b16 %v1643, %v1639
        %v1704 = vpack.c.b16 %v1648, %v1644
        %v1705 = vpack.c.b16 %v1649, %v1645
        %v1706 = vpack.c.b16 %v1650, %v1646
        %v1707 = vpack.c.b16 %v1651, %v1647
        %v1708 = vpack.c.b16 %v1656, %v1652
        %v1709 = vpack.c.b16 %v1657, %v1653
        %v1710 = vpack.c.b16 %v1658, %v1654
        %v1711 = vpack.c.b16 %v1659, %v1655
        %v1712 = vpack.c.b16 %v1664, %v1660
        %v1713 = vpack.c.b16 %v1665, %v1661
        %v1714 = vpack.c.b16 %v1666, %v1662
        %v1715 = vpack.c.b16 %v1667, %v1663
        %v1716 = vpack.c.b16 %v1672, %v1668
        %v1717 = vpack.c.b16 %v1673, %v1669
        %v1718 = vpack.c.b16 %v1674, %v1670
        %v1719 = vpack.c.b16 %v1675, %v1671
        %v1720 = vpack.c.b16 %v1680, %v1676
        %v1721 = vpack.c.b16 %v1681, %v1677
        %v1722 = vpack.c.b16 %v1682, %v1678
        %v1723 = vpack.c.b16 %v1683, %v1679
        %v1724 = vpack.c.b16 %v1688, %v1684
        %v1725 = vpack.c.b16 %v1689, %v1685
        %v1726 = vpack.c.b16 %v1690, %v1686
        %v1727 = vpack.c.b16 %v1691, %v1687
        %v1728 = vpack.c.b16 %v1696, %v1692
        %v1729 = vpack.c.b16 %v1697, %v1693
        %v1730 = vpack.c.b16 %v1698, %v1694
        %v1731 = vpack.c.b16 %v1699, %v1695
        %1764 = vmatprep.subr.bf16.mxu0 %v1729
        %1765 = vmatpush1.bf16.msra.mxu0 %v1728
        %1766 = vmatprep.subr.bf16.mxu0 %v1725
        %1767 = vmatpush1.bf16.msra.mxu0 %v1724
        %1768 = vmatprep.subr.bf16.mxu0 %v1721
        %1769 = vmatpush1.bf16.msra.mxu0 %v1720
        %1770 = vmatprep.subr.bf16.mxu0 %v1717
        %1771 = vmatpush1.bf16.msra.mxu0 %v1716
        %1772 = vmatprep.subr.bf16.mxu0 %v1713
        %1773 = vmatpush1.bf16.msra.mxu0 %v1712
        %1774 = vmatprep.subr.bf16.mxu0 %v1709
        %1775 = vmatpush1.bf16.msra.mxu0 %v1708
        %1776 = vmatprep.subr.bf16.mxu0 %v1705
        %1777 = vmatpush1.bf16.msra.mxu0 %v1704
        %1778 = vmatprep.subr.bf16.mxu0 %v1701
        %1779 = vmatpush1.bf16.msra.mxu0 %v1700
        %1780 = vmatprep.subr.bf16.mxu0 0
        %1781 = vmatpush2.bf16.msra.mxu0 0
        %1782 = vmatprep.subr.bf16.mxu0 0
        %1783 = vmatpush2.bf16.msra.mxu0 0
        %1784 = vmatprep.subr.bf16.mxu0 0
        %1785 = vmatpush2.bf16.msra.mxu0 0
        %1786 = vmatprep.subr.bf16.mxu0 0
        %1787 = vmatpush2.bf16.msra.mxu0 0
        %1788 = vmatprep.subr.bf16.mxu0 0
        %1789 = vmatpush2.bf16.msra.mxu0 0
        %1790 = vmatprep.subr.bf16.mxu0 0
        %1791 = vmatpush2.bf16.msra.mxu0 0
        %1792 = vmatprep.subr.bf16.mxu0 0
        %1793 = vmatpush2.bf16.msra.mxu0 0
        %1794 = vmatprep.subr.bf16.mxu0 0
        %1795 = vmatpush2.bf16.msra.mxu0 0
        %1796 = vmatprep.mubr.bf16.mxu0 0
        %1797 = vmatmul.mubr.bf16.gmra.mxu0 %v1550
        %v1798 = vpop.f32.mrf.mxu0
        %v1799 = vadd.f32 %v1587, %v1798
        %v1800 = vpop.f32.mrf.mxu0
        %v1801 = vadd.f32 %v1591, %v1800
        %v1802 = vpop.f32.mrf.mxu0
        %v1803 = vadd.f32 %v1587, %v1802
        %v1804 = vpop.f32.mrf.mxu0
        %v1805 = vadd.f32 %v1591, %v1804
        %1806 = vdwg.mxu0
        %1807 = vmatprep.subr.bf16.mxu0 %v1731
        %1808 = vmatpush1.bf16.msra.mxu0 %v1730
        %1809 = vmatprep.subr.bf16.mxu0 %v1727
        %1810 = vmatpush1.bf16.msra.mxu0 %v1726
        %1811 = vmatprep.subr.bf16.mxu0 %v1723
        %1812 = vmatpush1.bf16.msra.mxu0 %v1722
        %1813 = vmatprep.subr.bf16.mxu0 %v1719
        %1814 = vmatpush1.bf16.msra.mxu0 %v1718
        %1815 = vmatprep.subr.bf16.mxu0 %v1715
        %1816 = vmatpush1.bf16.msra.mxu0 %v1714
        %1817 = vmatprep.subr.bf16.mxu0 %v1711
        %1818 = vmatpush1.bf16.msra.mxu0 %v1710
        %1819 = vmatprep.subr.bf16.mxu0 %v1707
        %1820 = vmatpush1.bf16.msra.mxu0 %v1706
        %1821 = vmatprep.subr.bf16.mxu0 %v1703
        %1822 = vmatpush1.bf16.msra.mxu0 %v1702
        %1823 = vmatprep.subr.bf16.mxu0 0
        %1824 = vmatpush2.bf16.msra.mxu0 0
        %1825 = vmatprep.subr.bf16.mxu0 0
        %1826 = vmatpush2.bf16.msra.mxu0 0
        %1827 = vmatprep.subr.bf16.mxu0 0
        %1828 = vmatpush2.bf16.msra.mxu0 0
        %1829 = vmatprep.subr.bf16.mxu0 0
        %1830 = vmatpush2.bf16.msra.mxu0 0
        %1831 = vmatprep.subr.bf16.mxu0 0
        %1832 = vmatpush2.bf16.msra.mxu0 0
        %1833 = vmatprep.subr.bf16.mxu0 0
        %1834 = vmatpush2.bf16.msra.mxu0 0
        %1835 = vmatprep.subr.bf16.mxu0 0
        %1836 = vmatpush2.bf16.msra.mxu0 0
        %1837 = vmatprep.subr.bf16.mxu0 0
        %1838 = vmatpush2.bf16.msra.mxu0 0
        %1839 = vmatprep.mubr.bf16.mxu0 0
        %1840 = vmatmul.mubr.bf16.gmra.mxu0 %v1550
        %v1841 = vpop.f32.mrf.mxu0
        %v1842 = vadd.f32 %v1595, %v1841
        %v1843 = vpop.f32.mrf.mxu0
        %v1844 = vadd.f32 %v1599, %v1843
        %v1845 = vpop.f32.mrf.mxu0
        %v1846 = vadd.f32 %v1595, %v1845
        %v1847 = vpop.f32.mrf.mxu0
        %v1848 = vadd.f32 %v1599, %v1847
        %1849 = vdwg.mxu0
        %v1850 = vmul.f32 %v1799, 0.5
        %v1851 = vmul.f32 %v1801, 0.5
        %v1852 = vmul.f32 %v1842, 0.5
        %v1853 = vmul.f32 %v1844, 0.5
        %v1854 = vmul.f32 %v1803, 0.5
        %v1855 = vmul.f32 %v1805, 0.5
        %v1856 = vmul.f32 %v1846, 0.5
        %v1857 = vmul.f32 %v1848, 0.5
        %v1858 = vmul.f32 %v1799, 0.70710677
        %v1859 = vmul.f32 %v1801, 0.70710677
        %v1860 = vmul.f32 %v1842, 0.70710677
        %v1861 = vmul.f32 %v1844, 0.70710677
        %v1862 = vmul.f32 %v1803, 0.70710677
        %v1863 = vmul.f32 %v1805, 0.70710677
        %v1864 = vmul.f32 %v1846, 0.70710677
        %v1865 = vmul.f32 %v1848, 0.70710677
        %vm1866 = vcmp.ge.f32.partialorder %v1858, 0.0
        %vm1867 = vcmp.ge.f32.partialorder %v1859, 0.0
        %vm1868 = vcmp.ge.f32.partialorder %v1860, 0.0
        %vm1869 = vcmp.ge.f32.partialorder %v1861, 0.0
        %vm1870 = vcmp.ge.f32.partialorder %v1862, 0.0
        %vm1871 = vcmp.ge.f32.partialorder %v1863, 0.0
        %vm1872 = vcmp.ge.f32.partialorder %v1864, 0.0
        %vm1873 = vcmp.ge.f32.partialorder %v1865, 0.0
        %v1874 = vsel %vm1866, 1.0, -1.0
        %v1875 = vsel %vm1867, 1.0, -1.0
        %v1876 = vsel %vm1868, 1.0, -1.0
        %v1877 = vsel %vm1869, 1.0, -1.0
        %v1878 = vsel %vm1870, 1.0, -1.0
        %v1879 = vsel %vm1871, 1.0, -1.0
        %v1880 = vsel %vm1872, 1.0, -1.0
        %v1881 = vsel %vm1873, 1.0, -1.0
        %v1882 = vand.u32 2147483647, %v1858
        %v1883 = vand.u32 2147483647, %v1859
        %v1884 = vand.u32 2147483647, %v1860
        %v1885 = vand.u32 2147483647, %v1861
        %v1886 = vand.u32 2147483647, %v1862
        %v1887 = vand.u32 2147483647, %v1863
        %v1888 = vand.u32 2147483647, %v1864
        %v1889 = vand.u32 2147483647, %v1865
        %v1890 = vmul.f32 %v1882, 0.3275911
        %v1891 = vmul.f32 %v1883, 0.3275911
        %v1892 = vmul.f32 %v1884, 0.3275911
        %v1893 = vmul.f32 %v1885, 0.3275911
        %v1894 = vmul.f32 %v1886, 0.3275911
        %v1895 = vmul.f32 %v1887, 0.3275911
        %v1896 = vmul.f32 %v1888, 0.3275911
        %v1897 = vmul.f32 %v1889, 0.3275911
        %v1898 = vadd.f32 %v1890, 1.0
        %v1899 = vadd.f32 %v1891, 1.0
        %v1900 = vadd.f32 %v1892, 1.0
        %v1901 = vadd.f32 %v1893, 1.0
        %v1902 = vadd.f32 %v1894, 1.0
        %v1903 = vadd.f32 %v1895, 1.0
        %v1904 = vadd.f32 %v1896, 1.0
        %v1905 = vadd.f32 %v1897, 1.0
        %v1906 = vrcp.pop %v1898
        %v1907 = vmul.f32 1.0, %v1906
        %v1908 = vrcp.pop %v1899
        %v1909 = vmul.f32 1.0, %v1908
        %v1910 = vrcp.pop %v1900
        %v1911 = vmul.f32 1.0, %v1910
        %v1912 = vrcp.pop %v1901
        %v1913 = vmul.f32 1.0, %v1912
        %v1914 = vrcp.pop %v1902
        %v1915 = vmul.f32 1.0, %v1914
        %v1916 = vrcp.pop %v1903
        %v1917 = vmul.f32 1.0, %v1916
        %v1918 = vrcp.pop %v1904
        %v1919 = vmul.f32 1.0, %v1918
        %v1920 = vrcp.pop %v1905
        %v1921 = vmul.f32 1.0, %v1920
        %v1922 = vmul.f32 %v1907, 1.0614054
        %v1923 = vmul.f32 %v1909, 1.0614054
        %v1924 = vmul.f32 %v1911, 1.0614054
        %v1925 = vmul.f32 %v1913, 1.0614054
        %v1926 = vmul.f32 %v1915, 1.0614054
        %v1927 = vmul.f32 %v1917, 1.0614054
        %v1928 = vmul.f32 %v1919, 1.0614054
        %v1929 = vmul.f32 %v1921, 1.0614054
        %v1930 = vadd.f32 %v1922, -1.4531521
        %v1931 = vadd.f32 %v1923, -1.4531521
        %v1932 = vadd.f32 %v1924, -1.4531521
        %v1933 = vadd.f32 %v1925, -1.4531521
        %v1934 = vadd.f32 %v1926, -1.4531521
        %v1935 = vadd.f32 %v1927, -1.4531521
        %v1936 = vadd.f32 %v1928, -1.4531521
        %v1937 = vadd.f32 %v1929, -1.4531521
        %v1938 = vmul.f32 %v1930, %v1907
        %v1939 = vmul.f32 %v1931, %v1909
        %v1940 = vmul.f32 %v1932, %v1911
        %v1941 = vmul.f32 %v1933, %v1913
        %v1942 = vmul.f32 %v1934, %v1915
        %v1943 = vmul.f32 %v1935, %v1917
        %v1944 = vmul.f32 %v1936, %v1919
        %v1945 = vmul.f32 %v1937, %v1921
        %v1946 = vadd.f32 %v1938, 1.4214138
        %v1947 = vadd.f32 %v1939, 1.4214138
        %v1948 = vadd.f32 %v1940, 1.4214138
        %v1949 = vadd.f32 %v1941, 1.4214138
        %v1950 = vadd.f32 %v1942, 1.4214138
        %v1951 = vadd.f32 %v1943, 1.4214138
        %v1952 = vadd.f32 %v1944, 1.4214138
        %v1953 = vadd.f32 %v1945, 1.4214138
        %v1954 = vmul.f32 %v1946, %v1907
        %v1955 = vmul.f32 %v1947, %v1909
        %v1956 = vmul.f32 %v1948, %v1911
        %v1957 = vmul.f32 %v1949, %v1913
        %v1958 = vmul.f32 %v1950, %v1915
        %v1959 = vmul.f32 %v1951, %v1917
        %v1960 = vmul.f32 %v1952, %v1919
        %v1961 = vmul.f32 %v1953, %v1921
        %v1962 = vadd.f32 %v1954, -0.28449672
        %v1963 = vadd.f32 %v1955, -0.28449672
        %v1964 = vadd.f32 %v1956, -0.28449672
        %v1965 = vadd.f32 %v1957, -0.28449672
        %v1966 = vadd.f32 %v1958, -0.28449672
        %v1967 = vadd.f32 %v1959, -0.28449672
        %v1968 = vadd.f32 %v1960, -0.28449672
        %v1969 = vadd.f32 %v1961, -0.28449672
        %v1970 = vmul.f32 %v1962, %v1907
        %v1971 = vmul.f32 %v1963, %v1909
        %v1972 = vmul.f32 %v1964, %v1911
        %v1973 = vmul.f32 %v1965, %v1913
        %v1974 = vmul.f32 %v1966, %v1915
        %v1975 = vmul.f32 %v1967, %v1917
        %v1976 = vmul.f32 %v1968, %v1919
        %v1977 = vmul.f32 %v1969, %v1921
        %v1978 = vadd.f32 %v1970, 0.2548296
        %v1979 = vadd.f32 %v1971, 0.2548296
        %v1980 = vadd.f32 %v1972, 0.2548296
        %v1981 = vadd.f32 %v1973, 0.2548296
        %v1982 = vadd.f32 %v1974, 0.2548296
        %v1983 = vadd.f32 %v1975, 0.2548296
        %v1984 = vadd.f32 %v1976, 0.2548296
        %v1985 = vadd.f32 %v1977, 0.2548296
        %v1986 = vmul.f32 %v1978, %v1907
        %v1987 = vmul.f32 %v1979, %v1909
        %v1988 = vmul.f32 %v1980, %v1911
        %v1989 = vmul.f32 %v1981, %v1913
        %v1990 = vmul.f32 %v1982, %v1915
        %v1991 = vmul.f32 %v1983, %v1917
        %v1992 = vmul.f32 %v1984, %v1919
        %v1993 = vmul.f32 %v1985, %v1921
        %v1994 = vsub.f32 0.0, %v1882
        %v1995 = vsub.f32 0.0, %v1883
        %v1996 = vsub.f32 0.0, %v1884
        %v1997 = vsub.f32 0.0, %v1885
        %v1998 = vsub.f32 0.0, %v1886
        %v1999 = vsub.f32 0.0, %v1887
        %v2000 = vsub.f32 0.0, %v1888
        %v2001 = vsub.f32 0.0, %v1889
        %v2002 = vmul.f32 %v1994, %v1882
        %v2003 = vmul.f32 %v1995, %v1883
        %v2004 = vmul.f32 %v1996, %v1884
        %v2005 = vmul.f32 %v1997, %v1885
        %v2006 = vmul.f32 %v1998, %v1886
        %v2007 = vmul.f32 %v1999, %v1887
        %v2008 = vmul.f32 %v2000, %v1888
        %v2009 = vmul.f32 %v2001, %v1889
        %v2010 = vmul.f32 %v2002, 1.442695
        %v2011 = vpow.pop %v2010
        %v2012 = vmul.f32 %v2003, 1.442695
        %v2013 = vpow.pop %v2012
        %v2014 = vmul.f32 %v2004, 1.442695
        %v2015 = vpow.pop %v2014
        %v2016 = vmul.f32 %v2005, 1.442695
        %v2017 = vpow.pop %v2016
        %v2018 = vmul.f32 %v2006, 1.442695
        %v2019 = vpow.pop %v2018
        %v2020 = vmul.f32 %v2007, 1.442695
        %v2021 = vpow.pop %v2020
        %v2022 = vmul.f32 %v2008, 1.442695
        %v2023 = vpow.pop %v2022
        %v2024 = vmul.f32 %v2009, 1.442695
        %v2025 = vpow.pop %v2024
        %v2026 = vmul.f32 %v1986, %v2011
        %v2027 = vmul.f32 %v1987, %v2013
        %v2028 = vmul.f32 %v1988, %v2015
        %v2029 = vmul.f32 %v1989, %v2017
        %v2030 = vmul.f32 %v1990, %v2019
        %v2031 = vmul.f32 %v1991, %v2021
        %v2032 = vmul.f32 %v1992, %v2023
        %v2033 = vmul.f32 %v1993, %v2025
        %v2034 = vsub.f32 1.0, %v2026
        %v2035 = vsub.f32 1.0, %v2027
        %v2036 = vsub.f32 1.0, %v2028
        %v2037 = vsub.f32 1.0, %v2029
        %v2038 = vsub.f32 1.0, %v2030
        %v2039 = vsub.f32 1.0, %v2031
        %v2040 = vsub.f32 1.0, %v2032
        %v2041 = vsub.f32 1.0, %v2033
        %v2042 = vmul.f32 %v1874, %v2034
        %v2043 = vmul.f32 %v1875, %v2035
        %v2044 = vmul.f32 %v1876, %v2036
        %v2045 = vmul.f32 %v1877, %v2037
        %v2046 = vmul.f32 %v1878, %v2038
        %v2047 = vmul.f32 %v1879, %v2039
        %v2048 = vmul.f32 %v1880, %v2040
        %v2049 = vmul.f32 %v1881, %v2041
        %v2050 = vadd.f32 %v2042, 1.0
        %v2051 = vadd.f32 %v2043, 1.0
        %v2052 = vadd.f32 %v2044, 1.0
        %v2053 = vadd.f32 %v2045, 1.0
        %v2054 = vadd.f32 %v2046, 1.0
        %v2055 = vadd.f32 %v2047, 1.0
        %v2056 = vadd.f32 %v2048, 1.0
        %v2057 = vadd.f32 %v2049, 1.0
        %v2058 = vmul.f32 %v1850, %v2050
        %v2059 = vmul.f32 %v1851, %v2051
        %v2060 = vmul.f32 %v1852, %v2052
        %v2061 = vmul.f32 %v1853, %v2053
        %v2062 = vmul.f32 %v1854, %v2054
        %v2063 = vmul.f32 %v1855, %v2055
        %v2064 = vmul.f32 %v1856, %v2056
        %v2065 = vmul.f32 %v1857, %v2057
        %v2066 = vpack.c.bf16 %v2062, %v2058
        %v2067 = vpack.c.bf16 %v2063, %v2059
        %v2068 = vpack.c.bf16 %v2064, %v2060
        %v2069 = vpack.c.bf16 %v2065, %v2061
        %v2070 = vld [vmem:[#allocation5] sm:$0xf]
        %v2071 = vld [vmem:[#allocation5 + $0x4] sm:$0xf]
        %v2072 = vld [vmem:[#allocation5 + $0x8] sm:$0xf]
        %v2073 = vld [vmem:[#allocation5 + $0xc] sm:$0xf]
        %v2074 = vld [vmem:[#allocation5 + $0x10] sm:$0xf]
        %v2075 = vld [vmem:[#allocation5 + $0x14] sm:$0xf]
        %v2076 = vld [vmem:[#allocation5 + $0x18] sm:$0xf]
        %v2077 = vld [vmem:[#allocation5 + $0x1c] sm:$0xf]
        %v2078 = vld [vmem:[#allocation5 + $0x20] sm:$0xf]
        %v2079 = vld [vmem:[#allocation5 + $0x24] sm:$0xf]
        %v2080 = vld [vmem:[#allocation5 + $0x28] sm:$0xf]
        %v2081 = vld [vmem:[#allocation5 + $0x2c] sm:$0xf]
        %v2082 = vld [vmem:[#allocation5 + $0x30] sm:$0xf]
        %v2083 = vld [vmem:[#allocation5 + $0x34] sm:$0xf]
        %v2084 = vld [vmem:[#allocation5 + $0x38] sm:$0xf]
        %v2085 = vld [vmem:[#allocation5 + $0x3c] sm:$0xf]
        %v2086 = vld [vmem:[#allocation5 + $0x40] sm:$0xf]
        %v2087 = vld [vmem:[#allocation5 + $0x44] sm:$0xf]
        %v2088 = vld [vmem:[#allocation5 + $0x48] sm:$0xf]
        %v2089 = vld [vmem:[#allocation5 + $0x4c] sm:$0xf]
        %v2090 = vld [vmem:[#allocation5 + $0x50] sm:$0xf]
        %v2091 = vld [vmem:[#allocation5 + $0x54] sm:$0xf]
        %v2092 = vld [vmem:[#allocation5 + $0x58] sm:$0xf]
        %v2093 = vld [vmem:[#allocation5 + $0x5c] sm:$0xf]
        %v2094 = vld [vmem:[#allocation5 + $0x60] sm:$0xf]
        %v2095 = vld [vmem:[#allocation5 + $0x64] sm:$0xf]
        %v2096 = vld [vmem:[#allocation5 + $0x68] sm:$0xf]
        %v2097 = vld [vmem:[#allocation5 + $0x6c] sm:$0xf]
        %v2098 = vld [vmem:[#allocation5 + $0x70] sm:$0xf]
        %v2099 = vld [vmem:[#allocation5 + $0x74] sm:$0xf]
        %v2100 = vld [vmem:[#allocation5 + $0x78] sm:$0xf]
        %v2101 = vld [vmem:[#allocation5 + $0x7c] sm:$0xf]
        %v2102 = vld [vmem:[#allocation5 + $0x80] sm:$0xf]
        %v2103 = vld [vmem:[#allocation5 + $0x84] sm:$0xf]
        %v2104 = vld [vmem:[#allocation5 + $0x88] sm:$0xf]
        %v2105 = vld [vmem:[#allocation5 + $0x8c] sm:$0xf]
        %v2106 = vld [vmem:[#allocation5 + $0x90] sm:$0xf]
        %v2107 = vld [vmem:[#allocation5 + $0x94] sm:$0xf]
        %v2108 = vld [vmem:[#allocation5 + $0x98] sm:$0xf]
        %v2109 = vld [vmem:[#allocation5 + $0x9c] sm:$0xf]
        %v2110 = vld [vmem:[#allocation5 + $0xa0] sm:$0xf]
        %v2111 = vld [vmem:[#allocation5 + $0xa4] sm:$0xf]
        %v2112 = vld [vmem:[#allocation5 + $0xa8] sm:$0xf]
        %v2113 = vld [vmem:[#allocation5 + $0xac] sm:$0xf]
        %v2114 = vld [vmem:[#allocation5 + $0xb0] sm:$0xf]
        %v2115 = vld [vmem:[#allocation5 + $0xb4] sm:$0xf]
        %v2116 = vld [vmem:[#allocation5 + $0xb8] sm:$0xf]
        %v2117 = vld [vmem:[#allocation5 + $0xbc] sm:$0xf]
        %v2118 = vld [vmem:[#allocation5 + $0xc0] sm:$0xf]
        %v2119 = vld [vmem:[#allocation5 + $0xc4] sm:$0xf]
        %v2120 = vld [vmem:[#allocation5 + $0xc8] sm:$0xf]
        %v2121 = vld [vmem:[#allocation5 + $0xcc] sm:$0xf]
        %v2122 = vld [vmem:[#allocation5 + $0xd0] sm:$0xf]
        %v2123 = vld [vmem:[#allocation5 + $0xd4] sm:$0xf]
        %v2124 = vld [vmem:[#allocation5 + $0xd8] sm:$0xf]
        %v2125 = vld [vmem:[#allocation5 + $0xdc] sm:$0xf]
        %v2126 = vld [vmem:[#allocation5 + $0xe0] sm:$0xf]
        %v2127 = vld [vmem:[#allocation5 + $0xe4] sm:$0xf]
        %v2128 = vld [vmem:[#allocation5 + $0xe8] sm:$0xf]
        %v2129 = vld [vmem:[#allocation5 + $0xec] sm:$0xf]
        %v2130 = vld [vmem:[#allocation5 + $0xf0] sm:$0xf]
        %v2131 = vld [vmem:[#allocation5 + $0xf4] sm:$0xf]
        %v2132 = vld [vmem:[#allocation5 + $0xf8] sm:$0xf]
        %v2133 = vld [vmem:[#allocation5 + $0xfc] sm:$0xf]
        %v2135 = vlaneseq
        %v2136 = vshrl.u32 %v2135, 7
        %v2137 = vsub.s32 0, %v2136
        %v2138 = vrot.slane %v1511, %v2137
        %v2204 = vunpack.c.l.b16 %v2070
        %v2205 = vunpack.c.l.b16 %v2071
        %v2206 = vunpack.c.l.b16 %v2072
        %v2207 = vunpack.c.l.b16 %v2073
        %v2208 = vunpack.c.l.b16 %v2074
        %v2209 = vunpack.c.l.b16 %v2075
        %v2210 = vunpack.c.l.b16 %v2076
        %v2211 = vunpack.c.l.b16 %v2077
        %v2212 = vunpack.c.l.b16 %v2078
        %v2213 = vunpack.c.l.b16 %v2079
        %v2214 = vunpack.c.l.b16 %v2080
        %v2215 = vunpack.c.l.b16 %v2081
        %v2216 = vunpack.c.l.b16 %v2082
        %v2217 = vunpack.c.l.b16 %v2083
        %v2218 = vunpack.c.l.b16 %v2084
        %v2219 = vunpack.c.l.b16 %v2085
        %v2220 = vunpack.c.l.b16 %v2086
        %v2221 = vunpack.c.l.b16 %v2087
        %v2222 = vunpack.c.l.b16 %v2088
        %v2223 = vunpack.c.l.b16 %v2089
        %v2224 = vunpack.c.l.b16 %v2090
        %v2225 = vunpack.c.l.b16 %v2091
        %v2226 = vunpack.c.l.b16 %v2092
        %v2227 = vunpack.c.l.b16 %v2093
        %v2228 = vunpack.c.l.b16 %v2094
        %v2229 = vunpack.c.l.b16 %v2095
        %v2230 = vunpack.c.l.b16 %v2096
        %v2231 = vunpack.c.l.b16 %v2097
        %v2232 = vunpack.c.l.b16 %v2098
        %v2233 = vunpack.c.l.b16 %v2099
        %v2234 = vunpack.c.l.b16 %v2100
        %v2235 = vunpack.c.l.b16 %v2101
        %v2236 = vunpack.c.l.b16 %v2102
        %v2237 = vunpack.c.l.b16 %v2103
        %v2238 = vunpack.c.l.b16 %v2104
        %v2239 = vunpack.c.l.b16 %v2105
        %v2240 = vunpack.c.l.b16 %v2106
        %v2241 = vunpack.c.l.b16 %v2107
        %v2242 = vunpack.c.l.b16 %v2108
        %v2243 = vunpack.c.l.b16 %v2109
        %v2244 = vunpack.c.l.b16 %v2110
        %v2245 = vunpack.c.l.b16 %v2111
        %v2246 = vunpack.c.l.b16 %v2112
        %v2247 = vunpack.c.l.b16 %v2113
        %v2248 = vunpack.c.l.b16 %v2114
        %v2249 = vunpack.c.l.b16 %v2115
        %v2250 = vunpack.c.l.b16 %v2116
        %v2251 = vunpack.c.l.b16 %v2117
        %v2252 = vunpack.c.l.b16 %v2118
        %v2253 = vunpack.c.l.b16 %v2119
        %v2254 = vunpack.c.l.b16 %v2120
        %v2255 = vunpack.c.l.b16 %v2121
        %v2256 = vunpack.c.l.b16 %v2122
        %v2257 = vunpack.c.l.b16 %v2123
        %v2258 = vunpack.c.l.b16 %v2124
        %v2259 = vunpack.c.l.b16 %v2125
        %v2260 = vunpack.c.l.b16 %v2126
        %v2261 = vunpack.c.l.b16 %v2127
        %v2262 = vunpack.c.l.b16 %v2128
        %v2263 = vunpack.c.l.b16 %v2129
        %v2264 = vunpack.c.l.b16 %v2130
        %v2265 = vunpack.c.l.b16 %v2131
        %v2266 = vunpack.c.l.b16 %v2132
        %v2267 = vunpack.c.l.b16 %v2133
        %v2268 = vpack.c.b16 %v2205, %v2204
        %v2269 = vpack.c.b16 %v2207, %v2206
        %v2270 = vpack.c.b16 %v2209, %v2208
        %v2271 = vpack.c.b16 %v2211, %v2210
        %v2272 = vpack.c.b16 %v2213, %v2212
        %v2273 = vpack.c.b16 %v2215, %v2214
        %v2274 = vpack.c.b16 %v2217, %v2216
        %v2275 = vpack.c.b16 %v2219, %v2218
        %v2276 = vpack.c.b16 %v2221, %v2220
        %v2277 = vpack.c.b16 %v2223, %v2222
        %v2278 = vpack.c.b16 %v2225, %v2224
        %v2279 = vpack.c.b16 %v2227, %v2226
        %v2280 = vpack.c.b16 %v2229, %v2228
        %v2281 = vpack.c.b16 %v2231, %v2230
        %v2282 = vpack.c.b16 %v2233, %v2232
        %v2283 = vpack.c.b16 %v2235, %v2234
        %v2284 = vpack.c.b16 %v2237, %v2236
        %v2285 = vpack.c.b16 %v2239, %v2238
        %v2286 = vpack.c.b16 %v2241, %v2240
        %v2287 = vpack.c.b16 %v2243, %v2242
        %v2288 = vpack.c.b16 %v2245, %v2244
        %v2289 = vpack.c.b16 %v2247, %v2246
        %v2290 = vpack.c.b16 %v2249, %v2248
        %v2291 = vpack.c.b16 %v2251, %v2250
        %v2292 = vpack.c.b16 %v2253, %v2252
        %v2293 = vpack.c.b16 %v2255, %v2254
        %v2294 = vpack.c.b16 %v2257, %v2256
        %v2295 = vpack.c.b16 %v2259, %v2258
        %v2296 = vpack.c.b16 %v2261, %v2260
        %v2297 = vpack.c.b16 %v2263, %v2262
        %v2298 = vpack.c.b16 %v2265, %v2264
        %v2299 = vpack.c.b16 %v2267, %v2266
        %2332 = vmatprep.subr.bf16.mxu0 0
        %2333 = vmatpush1.bf16.msra.mxu0 %v2275
        %2334 = vmatprep.subr.bf16.mxu0 0
        %2335 = vmatpush1.bf16.msra.mxu0 %v2274
        %2336 = vmatprep.subr.bf16.mxu0 0
        %2337 = vmatpush1.bf16.msra.mxu0 %v2273
        %2338 = vmatprep.subr.bf16.mxu0 0
        %2339 = vmatpush1.bf16.msra.mxu0 %v2272
        %2340 = vmatprep.subr.bf16.mxu0 0
        %2341 = vmatpush1.bf16.msra.mxu0 %v2271
        %2342 = vmatprep.subr.bf16.mxu0 0
        %2343 = vmatpush1.bf16.msra.mxu0 %v2270
        %2344 = vmatprep.subr.bf16.mxu0 0
        %2345 = vmatpush1.bf16.msra.mxu0 %v2269
        %2346 = vmatprep.subr.bf16.mxu0 0
        %2347 = vmatpush1.bf16.msra.mxu0 %v2268
        %2348 = vmatprep.subr.bf16.mxu0 0
        %2349 = vmatpush2.bf16.msra.mxu0 %v2283
        %2350 = vmatprep.subr.bf16.mxu0 0
        %2351 = vmatpush2.bf16.msra.mxu0 %v2282
        %2352 = vmatprep.subr.bf16.mxu0 0
        %2353 = vmatpush2.bf16.msra.mxu0 %v2281
        %2354 = vmatprep.subr.bf16.mxu0 0
        %2355 = vmatpush2.bf16.msra.mxu0 %v2280
        %2356 = vmatprep.subr.bf16.mxu0 0
        %2357 = vmatpush2.bf16.msra.mxu0 %v2279
        %2358 = vmatprep.subr.bf16.mxu0 0
        %2359 = vmatpush2.bf16.msra.mxu0 %v2278
        %2360 = vmatprep.subr.bf16.mxu0 0
        %2361 = vmatpush2.bf16.msra.mxu0 %v2277
        %2362 = vmatprep.subr.bf16.mxu0 0
        %2363 = vmatpush2.bf16.msra.mxu0 %v2276
        %2364 = vmatprep.mubr.bf16.mxu0 %v2067
        %2365 = vmatmul.mubr.bf16.gmra.mxu0 %v2066
        %v2366 = vpop.f32.mrf.mxu0
        %v2367 = vadd.f32 %v2138, %v2366
        %v2368 = vpop.f32.mrf.mxu0
        %v2369 = vpop.f32.mrf.mxu0
        %v2370 = vadd.f32 %v2138, %v2369
        %v2371 = vpop.f32.mrf.mxu0
        %2372 = vdwg.mxu0
        %2373 = vmatprep.subr.bf16.mxu0 0
        %2374 = vmatpush1.bf16.msra.mxu0 %v2291
        %2375 = vmatprep.subr.bf16.mxu0 0
        %2376 = vmatpush1.bf16.msra.mxu0 %v2290
        %2377 = vmatprep.subr.bf16.mxu0 0
        %2378 = vmatpush1.bf16.msra.mxu0 %v2289
        %2379 = vmatprep.subr.bf16.mxu0 0
        %2380 = vmatpush1.bf16.msra.mxu0 %v2288
        %2381 = vmatprep.subr.bf16.mxu0 0
        %2382 = vmatpush1.bf16.msra.mxu0 %v2287
        %2383 = vmatprep.subr.bf16.mxu0 0
        %2384 = vmatpush1.bf16.msra.mxu0 %v2286
        %2385 = vmatprep.subr.bf16.mxu0 0
        %2386 = vmatpush1.bf16.msra.mxu0 %v2285
        %2387 = vmatprep.subr.bf16.mxu0 0
        %2388 = vmatpush1.bf16.msra.mxu0 %v2284
        %2389 = vmatprep.subr.bf16.mxu0 0
        %2390 = vmatpush2.bf16.msra.mxu0 %v2299
        %2391 = vmatprep.subr.bf16.mxu0 0
        %2392 = vmatpush2.bf16.msra.mxu0 %v2298
        %2393 = vmatprep.subr.bf16.mxu0 0
        %2394 = vmatpush2.bf16.msra.mxu0 %v2297
        %2395 = vmatprep.subr.bf16.mxu0 0
        %2396 = vmatpush2.bf16.msra.mxu0 %v2296
        %2397 = vmatprep.subr.bf16.mxu0 0
        %2398 = vmatpush2.bf16.msra.mxu0 %v2295
        %2399 = vmatprep.subr.bf16.mxu0 0
        %2400 = vmatpush2.bf16.msra.mxu0 %v2294
        %2401 = vmatprep.subr.bf16.mxu0 0
        %2402 = vmatpush2.bf16.msra.mxu0 %v2293
        %2403 = vmatprep.subr.bf16.mxu0 0
        %2404 = vmatpush2.bf16.msra.mxu0 %v2292
        %2405 = vmatprep.mubr.bf16.mxu0 %v2069
        %2406 = vmatmul.mubr.bf16.gmra.mxu0 %v2068
        %v2407 = vpop.f32.mrf.mxu0
        %v2408 = vadd.f32 %v2367, %v2407
        %v2409 = vpop.f32.mrf.mxu0
        %v2410 = vpop.f32.mrf.mxu0
        %v2411 = vadd.f32 %v2370, %v2410
        %v2412 = vpop.f32.mrf.mxu0
        %2413 = vdwg.mxu0
        %v2414 = vadd.f32 %v1506, %v2408
        %v2415 = vadd.f32 %v1507, %v2411
        %2416 = vst [vmem:[%s436] sm:$0xff] %v2414
        %2417 = vst [vmem:[%s436 + $0x8] sm:$0xff] %v2415
        %s2418 = sand.u32 %s293, 1
        %s2419 = scalar_lea.sflag [#allocation4], %s2418
        %s2420 = sand.u32 %s293, 1
        %s2421 = smul.addr %s2420, 16
        %s2422 = scalar_lea.vmem [#allocation7], %s2421
        // Predicated region
        $region77: #{tiered_transformer_encoder_layer.3} parent=67 // pred_check
          %p2423 = pneg %p303
        $region78: #{tiered_transformer_encoder_layer.3} parent=67 // pred_check_branch
          %2425 = sbr.rel (%p2423) target = $region80
        $region79: #{tiered_transformer_encoder_layer.3} parent=67 // pred_region
          %s2427 = ssub.s32 256, 256
          %2428 = vsyncadd %s2419, %s2427
          %s2429 = smul.addr %s28, 2
          %s2430 = smul.addr %s2429, 128
          %s2431 = scalar_lea.hbm %s12, %s2430
          %s2432 = sshll.u32 %s2422, 4
          %s2433 = int_to_ptr.vmem [resolvable:$true] %s2432
          %2438 = dma.vmem_to_hbm [thread:$0]  %s2433, 256, %s2431, %s2419, 128, 128, 8
        $region80: #{tiered_transformer_encoder_layer.3} parent=67 // pred_fallthru
          _
      $region68: #{tiered_transformer_encoder_layer.3} parent=5 // pred_fallthru
        _
      %p2439 = scmp.le.s32.totalorder 2, %s23
      // Predicated region
      $region81: #{tiered_transformer_encoder_layer.3} parent=5 // pred_check
        %p2440 = pneg %p2439
      $region82: #{tiered_transformer_encoder_layer.3} parent=5 // pred_check_branch
        %2442 = sbr.rel (%p2440) target = $region84
      $region83: #{tiered_transformer_encoder_layer.3} parent=5 // pred_region
        %s2443 = ssub.s32 %s23, 2
        // Predicated region
        $region85: #{tiered_transformer_encoder_layer.3} parent=83 // pred_check
          %p2444 = pneg %p309
        $region86: #{tiered_transformer_encoder_layer.3} parent=83 // pred_check_branch
          %2446 = sbr.rel (%p2444) target = $region88
        $region87: #{tiered_transformer_encoder_layer.3} parent=83 // pred_region
          %s2447 = sand.u32 %s294, 1
          %s2448 = scalar_lea.sflag [#allocation4], %s2447
          %s2449 = sand.u32 %s294, 1
          %s2450 = smul.addr %s2449, 16
          %s2451 = scalar_lea.vmem [#allocation7], %s2450
          %2452 = dma.done %s2448, 256
        $region88: #{tiered_transformer_encoder_layer.3} parent=83 // pred_fallthru
          _
      $region84: #{tiered_transformer_encoder_layer.3} parent=5 // pred_fallthru
        _
    $region6: #{tiered_transformer_encoder_layer.3} parent=1 // loop_footer
      %s27 = sadd.s32 1, %s23
    $region7: #{tiered_transformer_encoder_layer.3} parent=1 // loop_footer_branch
      %22 = sbr.rel target = $region3
    $region8: #{tiered_transformer_encoder_layer.3} parent=1 // loop_exit
      _
    %2453 = vsyncpa [#allocation3], 1
    %s2454 = scalar_lea.sflag [#allocation3], 1
    %2455 = vsyncpa %s2454, 1
    %2456 = vsyncpa [#allocation6], 1
    %2457 = vsyncpa [#allocation4], 1
    %s2458 = scalar_lea.sflag [#allocation4], 1
    %2459 = vsyncpa %s2458, 1

</llo_original>
